<compile_context>
chip_gen: v7x
topology: tpu7x:2x2x1
jax: 0.10.0
libtpu: 0.0.40
codegen_flags: <defaults>
</compile_context>

<pallas_src>
import jax
import jax.numpy as jnp
from jax.experimental import pallas as pl
from jax.experimental.pallas import tpu as pltpu


def _round_up(v, m):
    return (v + m - 1) // m * m


# --------------------------------------------------------------------------
# Kernel
# --------------------------------------------------------------------------
def _bottleneck_kernel(x_ref, x_hbm, w1_ref, b1_ref, w2_ref, b2_ref,
                       w3_ref, b3_ref, o_ref, x_halo, halo_sem, pad_ref):
    _, TH, W, Cp = x_ref.shape
    Pp = w1_ref.shape[1]
    mm = w1_ref.dtype                 # bf16 matmul inputs
    pdt = pad_ref.dtype               # bf16 out1 tap slab
    f32 = jnp.float32

    n = pl.program_id(0)
    h = pl.program_id(1)
    nH = pl.num_programs(1)
    row_top = h * TH - 1
    row_bot = h * TH + TH

    # ---- start halo-row DMAs; waits are deferred past the conv1 matmul -----
    @pl.when(h > 0)
    def _():
        pltpu.make_async_copy(x_hbm.at[n, row_top], x_halo.at[0],
                              halo_sem.at[0]).start()

    @pl.when(h < nH - 1)
    def _():
        pltpu.make_async_copy(x_hbm.at[n, row_bot], x_halo.at[1],
                              halo_sem.at[1]).start()

    # ---- conv1 (1x1, BN1 folded) + bias + relu on the interior block -------
    xin = x_ref[...].reshape(TH * W, Cp)                     # bf16
    o1 = jnp.dot(xin.astype(mm), w1_ref[...], preferred_element_type=f32)
    o1 = jnp.maximum(o1 + b1_ref[...], 0.0)                  # (TH*W, Pp) f32

    # kx = -1 / +1 taps via aligned sublane rolls (XLU) + edge masks.
    col = jax.lax.broadcasted_iota(jnp.int32, (TH, W, Pp), 1).reshape(TH * W, Pp)
    left = jnp.where(col == 0, 0.0, pltpu.roll(o1, shift=1, axis=0))
    right = jnp.where(col == W - 1, 0.0,
                      pltpu.roll(o1, shift=TH * W - 1, axis=0))

    # Lane-aligned stores into the [left | center | right] tap slab.
    pad_ref[1:TH + 1, :, 0 * Pp:1 * Pp] = left.reshape(TH, W, Pp).astype(pdt)
    pad_ref[1:TH + 1, :, 1 * Pp:2 * Pp] = o1.reshape(TH, W, Pp).astype(pdt)
    pad_ref[1:TH + 1, :, 2 * Pp:3 * Pp] = right.reshape(TH, W, Pp).astype(pdt)

    # ---- border rows: zeros only at the image edge --------------------------
    @pl.when(h == 0)
    def _():
        pad_ref[0:1, :, :] = jnp.zeros((1, W, 3 * Pp), pdt)

    @pl.when(h == nH - 1)
    def _():
        pad_ref[TH + 1:TH + 2, :, :] = jnp.zeros((1, W, 3 * Pp), pdt)

    # ---- halo rows: wait DMA, conv1 + taps, store (only where fetched) ------
    colh = jax.lax.broadcasted_iota(jnp.int32, (W, Pp), 0)

    def halo_row(slot, dst_row, src_row):
        pltpu.make_async_copy(x_hbm.at[n, src_row], x_halo.at[slot],
                              halo_sem.at[slot]).wait()
        oh = jnp.dot(x_halo[slot].astype(mm), w1_ref[...],
                     preferred_element_type=f32)
        oh = jnp.maximum(oh + b1_ref[...], 0.0)               # (W, Pp) f32
        lh = jnp.where(colh == 0, 0.0, pltpu.roll(oh, shift=1, axis=0))
        rh = jnp.where(colh == W - 1, 0.0, pltpu.roll(oh, shift=W - 1, axis=0))
        pad_ref[dst_row:dst_row + 1, :, 0 * Pp:1 * Pp] = lh.reshape(1, W, Pp).astype(pdt)
        pad_ref[dst_row:dst_row + 1, :, 1 * Pp:2 * Pp] = oh.reshape(1, W, Pp).astype(pdt)
        pad_ref[dst_row:dst_row + 1, :, 2 * Pp:3 * Pp] = rh.reshape(1, W, Pp).astype(pdt)

    @pl.when(h > 0)
    def _():
        halo_row(0, 0, row_top)

    @pl.when(h < nH - 1)
    def _():
        halo_row(1, TH + 1, row_bot)

    # ---- conv2 (3x3, BN2 folded): 3 aligned matmuls with K = 3*Pp -----------
    acc = jnp.zeros((TH * W, Pp), f32)
    for ky in range(3):
        cols = pad_ref[ky:ky + TH, :, :].reshape(TH * W, 3 * Pp)
        acc = acc + jnp.dot(cols, w2_ref[ky], preferred_element_type=f32)
    o2 = jnp.maximum(acc + b2_ref[...], 0.0)                  # (TH*W, Pp) f32

    # ---- conv3 (1x1, BN3 folded) + bias + residual + relu --------------------
    o3 = jnp.dot(o2.astype(mm), w3_ref[...], preferred_element_type=f32)
    o3 = o3 + b3_ref[...] + xin.astype(f32)
    o_ref[...] = jnp.maximum(o3, 0.0).reshape(1, TH, W, Cp).astype(o_ref.dtype)


# --------------------------------------------------------------------------
# Generation-aware tiling / VMEM budgeting
# --------------------------------------------------------------------------
def _vmem_budget_bytes():
    cap = 64 << 20
    try:
        info = pltpu.get_tpu_info()
        cap = int(getattr(info, "vmem_capacity_bytes", cap))
    except Exception:
        pass
    if cap >= (96 << 20):
        return 64 << 20            # v5e / v6e: 128 MiB physical VMEM
    return 36 << 20                # v7x: 64 MiB physical VMEM


def _estimate_vmem(TH, W, Cp, Pp, weight_bytes):
    blk = TH * W
    est = 2 * blk * Cp * 2             # x block (bf16), double-buffered
    est += 2 * blk * Cp * 2            # out block (bf16), double-buffered
    est += 2 * weight_bytes            # weights/biases, double-buffered
    est += 2 * W * Cp * 2              # halo-row landing buffer
    est += (TH + 2) * W * 3 * Pp * 2   # out1 tap slab (bf16)
    est += blk * Pp * 4 * 4            # f32 temps: o1, left, right, acc
    est += blk * 3 * Pp * 2            # conv2 operand view
    est += blk * (Pp + Cp) * 4         # o2 / o3 f32 temps
    return est


def _pick_tile_h(H, W, Cp, Pp, weight_bytes, budget):
    limit = int(0.7 * budget)
    for th in range(H, 0, -1):
        if H % th == 0 and _estimate_vmem(th, W, Cp, Pp, weight_bytes) <= limit:
            return th
    return 1


# --------------------------------------------------------------------------
# Wrapper
# --------------------------------------------------------------------------
def bottleneck_pallas(x_nchw, params, *, tile_h=None):
    """x_nchw: (N, C, H, W); params: folded/padded params from prepare_params.

    Returns NCHW output in bf16 (HBM traffic kept at bf16 per perf review).
    """
    w1, b1, w2, b2, w3, b3 = (params[k] for k in ("w1", "b1", "w2", "b2", "w3", "b3"))
    Cp, Pp = w1.shape
    N, C, H, W = x_nchw.shape
    io_dtype = jnp.bfloat16

    # NCHW -> NHWC, cast to bf16, pad channels to the lane-aligned Cp.
    x = jnp.transpose(x_nchw, (0, 2, 3, 1)).astype(io_dtype)
    if Cp != C:
        x = jnp.pad(x, ((0, 0), (0, 0), (0, 0), (0, Cp - C)))

    weight_bytes = int((w1.size + w2.size + w3.size) * w1.dtype.itemsize
                       + (b1.size + b2.size + b3.size) * 4)
    budget = _vmem_budget_bytes()

    if tile_h is None:
        TH = _pick_tile_h(H, W, Cp, Pp, weight_bytes, budget)
    else:
        TH = max(1, min(int(tile_h), H))
        while H % TH:
            TH -= 1
    nH = H // TH

    est = _estimate_vmem(TH, W, Cp, Pp, weight_bytes)
    vmem_limit = int(min(budget, max(24 << 20, int(1.5 * est))))

    x_spec = pl.BlockSpec((1, TH, W, Cp), lambda n_, h_: (n_, h_, 0, 0))
    o_spec = pl.BlockSpec((1, TH, W, Cp), lambda n_, h_: (n_, h_, 0, 0))

    def full(shape):
        return pl.BlockSpec(shape, lambda n_, h_, _r=len(shape): (0,) * _r)

    out = pl.pallas_call(
        _bottleneck_kernel,
        out_shape=jax.ShapeDtypeStruct((N, H, W, Cp), io_dtype),
        grid=(N, nH),
        in_specs=[x_spec,
                  pl.BlockSpec(memory_space=pl.ANY),   # raw HBM view for halo DMA
                  full(w1.shape), full(b1.shape),
                  full(w2.shape), full(b2.shape),
                  full(w3.shape), full(b3.shape)],
        out_specs=o_spec,
        scratch_shapes=[
            pltpu.VMEM((2, W, Cp), io_dtype),            # halo-row landing buffer
            pltpu.SemaphoreType.DMA((2,)),
            pltpu.VMEM((TH + 2, W, 3 * Pp), jnp.bfloat16),  # out1 tap slab
        ],
        compiler_params=pltpu.CompilerParams(
            dimension_semantics=("parallel", "parallel"),
            vmem_limit_bytes=vmem_limit),
    )(x, x, w1, b1, w2, b2, w3, b3)

    out = out[..., :C]                                   # drop channel padding
    return jnp.transpose(out, (0, 3, 1, 2))              # NHWC -> NCHW (bf16)


# --------------------------------------------------------------------------
# Parameter construction (synthetic, PyTorch layouts) and BN folding
# --------------------------------------------------------------------------
def make_raw_params(key, inplanes, planes, expansion=4):
    ks = jax.random.split(key, 6)

    def bn_stats(k, c):
        k1, k2, k3, k4 = jax.random.split(k, 4)
        gamma = 1.0 + 0.1 * jax.random.normal(k1, (c,), jnp.float32)
        beta = 0.1 * jax.random.normal(k2, (c,), jnp.float32)
        mean = 0.1 * jax.random.normal(k3, (c,), jnp.float32)
        var = jnp.abs(jax.random.normal(k4, (c,), jnp.float32)) + 0.5
        return gamma, beta, mean, var

    return dict(
        w1=0.1 * jax.random.normal(ks[0], (planes, inplanes, 1, 1), jnp.float32),
        w2=0.1 * jax.random.normal(ks[1], (planes, planes, 3, 3), jnp.float32),
        w3=0.1 * jax.random.normal(ks[2], (planes * expansion, planes, 1, 1), jnp.float32),
        bn1=bn_stats(ks[3], planes),
        bn2=bn_stats(ks[4], planes),
        bn3=bn_stats(ks[5], planes * expansion),
    )


def prepare_params(raw, eps=1e-5, lane=128, mm_dtype=jnp.bfloat16):
    """Fold BN scale into conv weights, pad channels to lane multiples, cast to bf16."""
    w1_t, w2_t, w3_t = raw["w1"], raw["w2"], raw["w3"]
    P, Cin = w1_t.shape[0], w1_t.shape[1]
    Cout = w3_t.shape[0]
    Pp = _round_up(P, lane)
    Cp = _round_up(max(Cin, Cout), lane)

    def fold(stats):
        g, b, m, v = stats
        s = g / jnp.sqrt(v + eps)
        return s, b - m * s

    s1, b1 = fold(raw["bn1"])
    s2, b2 = fold(raw["bn2"])
    s3, b3 = fold(raw["bn3"])

    def pad2(w, r, c):
        return jnp.pad(w, ((0, r - w.shape[0]), (0, c - w.shape[1])))

    w1 = pad2(w1_t[:, :, 0, 0].T * s1[None, :], Cp, Pp).astype(mm_dtype)
    w3 = pad2(w3_t[:, :, 0, 0].T * s3[None, :], Pp, Cp).astype(mm_dtype)

    rows = []
    for ky in range(3):
        taps = [pad2(w2_t[:, :, ky, kx].T * s2[None, :], Pp, Pp) for kx in range(3)]
        rows.append(jnp.concatenate(taps, axis=0))        # (3*Pp, Pp), K = [kx0|kx1|kx2]
    w2 = jnp.stack(rows, axis=0).astype(mm_dtype)          # (3, 3*Pp, Pp)

    def padb(b, c):
        return jnp.pad(b, (0, c - b.shape[0])).reshape(1, c).astype(jnp.float32)

    return dict(w1=w1, b1=padb(b1, Pp), w2=w2, b2=padb(b2, Pp),
                w3=w3, b3=padb(b3, Cp))


# --------------------------------------------------------------------------
# References for verification
# --------------------------------------------------------------------------
def bottleneck_reference_f32(x_nchw, raw, eps=1e-5):
    """Independent pure-f32 NHWC reference built from the raw conv/BN params."""
    x = jnp.transpose(x_nchw, (0, 2, 3, 1))
    dn = ("NHWC", "HWIO", "NHWC")

    def conv(y, w_oihw, pad):
        return jax.lax.conv_general_dilated(
            y, jnp.transpose(w_oihw, (2, 3, 1, 0)), (1, 1), pad,
            dimension_numbers=dn)

    def bn(y, stats):
        g, b, m, v = stats
        return (y - m) * (g / jnp.sqrt(v + eps)) + b

    o = jax.nn.relu(bn(conv(x, raw["w1"], "VALID"), raw["bn1"]))
    o = jax.nn.relu(bn(conv(o, raw["w2"], "SAME"), raw["bn2"]))
    o = bn(conv(o, raw["w3"], "VALID"), raw["bn3"])
    o = jax.nn.relu(o + x)
    return jnp.transpose(o, (0, 3, 1, 2))


def bottleneck_reference_matched(x_nchw, p):
    """Pure-JAX reference mirroring the kernel's folded/padded bf16 math exactly."""
    mm = p["w1"].dtype
    Cp, Pp = p["w1"].shape
    N, C, H, W = x_nchw.shape
    x = jnp.transpose(x_nchw, (0, 2, 3, 1)).astype(jnp.bfloat16)
    x = jnp.pad(x, ((0, 0), (0, 0), (0, 0), (0, Cp - C)))
    xf = x.reshape(N * H * W, Cp)

    o1 = jnp.maximum(jnp.dot(xf.astype(mm), p["w1"],
                             preferred_element_type=jnp.float32) + p["b1"], 0.0)
    o1 = o1.astype(mm).reshape(N, H, W, Pp)
    o1p = jnp.pad(o1, ((0, 0), (1, 1), (1, 1), (0, 0)))

    acc = jnp.zeros((N * H * W, Pp), jnp.float32)
    for ky in range(3):
        win = o1p[:, ky:ky + H, :, :]
        cols = jnp.concatenate([win[:, :, kx:kx + W, :] for kx in range(3)], axis=-1)
        acc = acc + jnp.dot(cols.reshape(N * H * W, 3 * Pp), p["w2"][ky],
                            preferred_element_type=jnp.float32)
    o2 = jnp.maximum(acc + p["b2"], 0.0)

    o3 = jnp.dot(o2.astype(mm), p["w3"], preferred_element_type=jnp.float32)
    o3 = jnp.maximum(o3 + p["b3"] + xf.astype(jnp.float32), 0.0)
    o3 = o3.astype(jnp.bfloat16).reshape(N, H, W, Cp)[..., :C]
    return jnp.transpose(o3, (0, 3, 1, 2))


# --------------------------------------------------------------------------
if __name__ == "__main__":
    # inplanes must equal planes*4 when downsample is None (residual add).
    N, planes, H, W = 2, 4, 16, 16
    inplanes = planes * 4                       # 16

    key = jax.random.PRNGKey(0)
    kx_, kp_ = jax.random.split(key)
    x = jax.random.normal(kx_, (N, inplanes, H, W), jnp.float32)   # NCHW input

    raw = make_raw_params(kp_, inplanes, planes)
    params = prepare_params(raw)

    # tile_h=8 -> grid (2, 2); exercises the halo-row DMA / conditional paths.
    out = bottleneck_pallas(x, params, tile_h=8)
    out = jax.block_until_ready(out)
    assert out.shape == (N, inplanes, H, W)
    out_f = out.astype(jnp.float32)

    ref_m = bottleneck_reference_matched(x, params).astype(jnp.float32)
    err_m = jnp.max(jnp.abs(out_f - ref_m))
    assert jnp.allclose(out_f, ref_m, atol=3e-2, rtol=3e-2), \
        f"matched-ref max err {err_m}"

    ref_f = bottleneck_reference_f32(x, raw)
    err_f = jnp.max(jnp.abs(out_f - ref_f))
    assert jnp.allclose(out_f, ref_f, atol=2.5e-1, rtol=2e-1), \
        f"f32-ref max err {err_f}"

    # Auto tile size (single H tile at this size): boundary-only code path.
    out2 = bottleneck_pallas(x, params)
    out2 = jax.block_until_ready(out2).astype(jnp.float32)
    err_2 = jnp.max(jnp.abs(out2 - ref_m))
    assert jnp.allclose(out2, ref_m, atol=3e-2, rtol=3e-2), \
        f"auto-tile max err {err_2}"

    print("KERNEL_OK")
</pallas_src>

<mosaic_0001>
module attributes {stable_mosaic.version = 11 : i64} {
  func.func @_bottleneck_kernel(%arg0: i32, %arg1: i32, %arg2: memref<1x8x16x128xbf16, #tpu.memory_space<vmem>>, %arg3: memref<2x16x16x128xbf16, #tpu.memory_space<any>>, %arg4: memref<128x128xbf16, #tpu.memory_space<vmem>>, %arg5: memref<1x128xf32, #tpu.memory_space<vmem>>, %arg6: memref<3x384x128xbf16, #tpu.memory_space<vmem>>, %arg7: memref<1x128xf32, #tpu.memory_space<vmem>>, %arg8: memref<128x128xbf16, #tpu.memory_space<vmem>>, %arg9: memref<1x128xf32, #tpu.memory_space<vmem>>, %arg10: memref<1x8x16x128xbf16, #tpu.memory_space<vmem>>, %arg11: memref<2x16x128xbf16, #tpu.memory_space<vmem>>, %arg12: memref<2x!tpu.dma_semaphore, #tpu.memory_space<semaphore_mem>>, %arg13: memref<10x16x384xbf16, #tpu.memory_space<vmem>>) attributes {dimension_semantics = [#tpu.dimension_semantics<parallel>, #tpu.dimension_semantics<parallel>], iteration_bounds = array<i64: 2, 2>, scalar_prefetch = 0 : i64, scratch_operands = 3 : i64, tpu.core_type = #tpu.core_type<tc>, window_params = [{transform_indices = @transform_0, window_bounds = array<i64: 1, 8, 16, 128>}, {}, {pipeline_mode = #tpu.pipeline_mode<synchronous>, transform_indices = @transform_2, window_bounds = array<i64: 128, 128>}, {pipeline_mode = #tpu.pipeline_mode<synchronous>, transform_indices = @transform_3, window_bounds = array<i64: 1, 128>}, {pipeline_mode = #tpu.pipeline_mode<synchronous>, transform_indices = @transform_4, window_bounds = array<i64: 3, 384, 128>}, {pipeline_mode = #tpu.pipeline_mode<synchronous>, transform_indices = @transform_5, window_bounds = array<i64: 1, 128>}, {pipeline_mode = #tpu.pipeline_mode<synchronous>, transform_indices = @transform_6, window_bounds = array<i64: 128, 128>}, {pipeline_mode = #tpu.pipeline_mode<synchronous>, transform_indices = @transform_7, window_bounds = array<i64: 1, 128>}, {transform_indices = @transform_8, window_bounds = array<i64: 1, 8, 16, 128>}]} {
    %c8_i32 = arith.constant 8 : i32
    %0 = arith.muli %arg1, %c8_i32 : i32
    %c1_i32 = arith.constant 1 : i32
    %1 = arith.subi %0, %c1_i32 : i32
    %c8_i32_0 = arith.constant 8 : i32
    %2 = arith.muli %arg1, %c8_i32_0 : i32
    %c8_i32_1 = arith.constant 8 : i32
    %3 = arith.addi %2, %c8_i32_1 : i32
    %c0_i32 = arith.constant 0 : i32
    %4 = arith.cmpi sgt, %arg1, %c0_i32 : i32
    %5 = arith.extui %4 : i1 to i32
    %c0_i32_2 = arith.constant 0 : i32
    %6 = arith.cmpi ne, %5, %c0_i32_2 : i32
    scf.if %6 {
      %c0_i32_65 = arith.constant 0 : i32
      %c0_i32_66 = arith.constant 0 : i32
      %c0_i32_67 = arith.constant 0 : i32
      %c0_i32_68 = arith.constant 0 : i32
      %90 = tpu.memref_slice %arg3[%arg0, %1, %c0_i32_67, %c0_i32_68] : memref<2x16x16x128xbf16, #tpu.memory_space<any>> -> memref<1x1x16x128xbf16, #tpu.memory_space<any>>
      %91 = tpu.memref_squeeze %90 : memref<1x1x16x128xbf16, #tpu.memory_space<any>> -> memref<16x128xbf16, #tpu.memory_space<any>>
      %c0_i32_69 = arith.constant 0 : i32
      %c0_i32_70 = arith.constant 0 : i32
      %92 = tpu.memref_slice %arg11[%c0_i32_65, %c0_i32_69, %c0_i32_70] : memref<2x16x128xbf16, #tpu.memory_space<vmem>> -> memref<1x16x128xbf16, #tpu.memory_space<vmem>>
      %93 = tpu.memref_squeeze %92 : memref<1x16x128xbf16, #tpu.memory_space<vmem>> -> memref<16x128xbf16, #tpu.memory_space<vmem>>
      %94 = tpu.memref_slice %arg12[%c0_i32_66] : memref<2x!tpu.dma_semaphore, #tpu.memory_space<semaphore_mem>> -> memref<1x!tpu.dma_semaphore, #tpu.memory_space<semaphore_mem>>
      %95 = tpu.memref_squeeze %94 : memref<1x!tpu.dma_semaphore, #tpu.memory_space<semaphore_mem>> -> memref<!tpu.dma_semaphore, #tpu.memory_space<semaphore_mem>>
      tpu.enqueue_dma source(%91 : memref<16x128xbf16, #tpu.memory_space<any>>) target(%93 : memref<16x128xbf16, #tpu.memory_space<vmem>>) target_semaphore(%95 : memref<!tpu.dma_semaphore, #tpu.memory_space<semaphore_mem>>)
    } else {
    }
    %c1_i32_3 = arith.constant 1 : i32
    %7 = arith.cmpi slt, %arg1, %c1_i32_3 : i32
    %8 = arith.extui %7 : i1 to i32
    %c0_i32_4 = arith.constant 0 : i32
    %9 = arith.cmpi ne, %8, %c0_i32_4 : i32
    scf.if %9 {
      %c1_i32_65 = arith.constant 1 : i32
      %c1_i32_66 = arith.constant 1 : i32
      %c0_i32_67 = arith.constant 0 : i32
      %c0_i32_68 = arith.constant 0 : i32
      %90 = tpu.memref_slice %arg3[%arg0, %3, %c0_i32_67, %c0_i32_68] : memref<2x16x16x128xbf16, #tpu.memory_space<any>> -> memref<1x1x16x128xbf16, #tpu.memory_space<any>>
      %91 = tpu.memref_squeeze %90 : memref<1x1x16x128xbf16, #tpu.memory_space<any>> -> memref<16x128xbf16, #tpu.memory_space<any>>
      %c0_i32_69 = arith.constant 0 : i32
      %c0_i32_70 = arith.constant 0 : i32
      %92 = tpu.memref_slice %arg11[%c1_i32_65, %c0_i32_69, %c0_i32_70] : memref<2x16x128xbf16, #tpu.memory_space<vmem>> -> memref<1x16x128xbf16, #tpu.memory_space<vmem>>
      %93 = tpu.memref_squeeze %92 : memref<1x16x128xbf16, #tpu.memory_space<vmem>> -> memref<16x128xbf16, #tpu.memory_space<vmem>>
      %94 = tpu.memref_slice %arg12[%c1_i32_66] : memref<2x!tpu.dma_semaphore, #tpu.memory_space<semaphore_mem>> -> memref<1x!tpu.dma_semaphore, #tpu.memory_space<semaphore_mem>>
      %95 = tpu.memref_squeeze %94 : memref<1x!tpu.dma_semaphore, #tpu.memory_space<semaphore_mem>> -> memref<!tpu.dma_semaphore, #tpu.memory_space<semaphore_mem>>
      tpu.enqueue_dma source(%91 : memref<16x128xbf16, #tpu.memory_space<any>>) target(%93 : memref<16x128xbf16, #tpu.memory_space<vmem>>) target_semaphore(%95 : memref<!tpu.dma_semaphore, #tpu.memory_space<semaphore_mem>>)
    } else {
    }
    %c0 = arith.constant 0 : index
    %c0_5 = arith.constant 0 : index
    %c0_6 = arith.constant 0 : index
    %c0_7 = arith.constant 0 : index
    %10 = vector.load %arg2[%c0, %c0_5, %c0_6, %c0_7] : memref<1x8x16x128xbf16, #tpu.memory_space<vmem>>, vector<1x8x16x128xbf16>
    %11 = vector.shape_cast %10 : vector<1x8x16x128xbf16> to vector<128x128xbf16>
    %c0_8 = arith.constant 0 : index
    %c0_9 = arith.constant 0 : index
    %12 = vector.load %arg4[%c0_8, %c0_9] : memref<128x128xbf16, #tpu.memory_space<vmem>>, vector<128x128xbf16>
    %cst = arith.constant dense<0.000000e+00> : vector<128x128xf32>
    %13 = tpu.matmul %11, %12, %cst {dimension_numbers = #tpu.dot_dimension_numbers<[1], [0], [0], [1], [0, 0, 1, 1], [], []>} : vector<128x128xbf16>, vector<128x128xbf16>, vector<128x128xf32> -> vector<128x128xf32>
    %c0_10 = arith.constant 0 : index
    %c0_11 = arith.constant 0 : index
    %14 = vector.load %arg5[%c0_10, %c0_11] : memref<1x128xf32, #tpu.memory_space<vmem>>, vector<1x128xf32>
    %15 = vector.broadcast %14 : vector<1x128xf32> to vector<128x128xf32>
    %16 = arith.addf %13, %15 : vector<128x128xf32>
    %cst_12 = arith.constant 0.000000e+00 : f32
    %17 = vector.broadcast %cst_12 : f32 to vector<128x128xf32>
    %18 = arith.maximumf %16, %17 : vector<128x128xf32>
    %19 = tpu.iota {dimensions = array<i32: 1>} : vector<8x16x128xi32>
    %20 = vector.shape_cast %19 : vector<8x16x128xi32> to vector<128x128xi32>
    %c0_i32_13 = arith.constant 0 : i32
    %21 = vector.broadcast %c0_i32_13 : i32 to vector<128x128xi32>
    %22 = arith.cmpi eq, %20, %21 : vector<128x128xi32>
    %c1_i32_14 = arith.constant 1 : i32
    %23 = tpu.dynamic_rotate %18 by %c1_i32_14 dim 0 : vector<128x128xf32>, i32 -> vector<128x128xf32>
    %cst_15 = arith.constant 0.000000e+00 : f32
    %24 = vector.broadcast %cst_15 : f32 to vector<128x128xf32>
    %25 = arith.select %22, %24, %23 : vector<128x128xi1>, vector<128x128xf32>
    %c15_i32 = arith.constant 15 : i32
    %26 = vector.broadcast %c15_i32 : i32 to vector<128x128xi32>
    %27 = arith.cmpi eq, %20, %26 : vector<128x128xi32>
    %c127_i32 = arith.constant 127 : i32
    %28 = tpu.dynamic_rotate %18 by %c127_i32 dim 0 : vector<128x128xf32>, i32 -> vector<128x128xf32>
    %cst_16 = arith.constant 0.000000e+00 : f32
    %29 = vector.broadcast %cst_16 : f32 to vector<128x128xf32>
    %30 = arith.select %27, %29, %28 : vector<128x128xi1>, vector<128x128xf32>
    %31 = vector.shape_cast %25 : vector<128x128xf32> to vector<8x16x128xf32>
    %32 = arith.truncf %31 : vector<8x16x128xf32> to vector<8x16x128xbf16>
    %c1 = arith.constant 1 : index
    %c0_17 = arith.constant 0 : index
    %c0_18 = arith.constant 0 : index
    %33 = vector.load %arg13[%c1, %c0_17, %c0_18] : memref<10x16x384xbf16, #tpu.memory_space<vmem>>, vector<8x16x128xbf16>
    tpu.vector_store %arg13[%c1, %c0_17, %c0_18], %32 {strides = array<i32>} : memref<10x16x384xbf16, #tpu.memory_space<vmem>>, vector<8x16x128xbf16>,
    %34 = vector.shape_cast %18 : vector<128x128xf32> to vector<8x16x128xf32>
    %35 = arith.truncf %34 : vector<8x16x128xf32> to vector<8x16x128xbf16>
    %c1_19 = arith.constant 1 : index
    %c0_20 = arith.constant 0 : index
    %c128 = arith.constant 128 : index
    %36 = vector.load %arg13[%c1_19, %c0_20, %c128] : memref<10x16x384xbf16, #tpu.memory_space<vmem>>, vector<8x16x128xbf16>
    tpu.vector_store %arg13[%c1_19, %c0_20, %c128], %35 {strides = array<i32>} : memref<10x16x384xbf16, #tpu.memory_space<vmem>>, vector<8x16x128xbf16>,
    %37 = vector.shape_cast %30 : vector<128x128xf32> to vector<8x16x128xf32>
    %38 = arith.truncf %37 : vector<8x16x128xf32> to vector<8x16x128xbf16>
    %c1_21 = arith.constant 1 : index
    %c0_22 = arith.constant 0 : index
    %c256 = arith.constant 256 : index
    %39 = vector.load %arg13[%c1_21, %c0_22, %c256] : memref<10x16x384xbf16, #tpu.memory_space<vmem>>, vector<8x16x128xbf16>
    tpu.vector_store %arg13[%c1_21, %c0_22, %c256], %38 {strides = array<i32>} : memref<10x16x384xbf16, #tpu.memory_space<vmem>>, vector<8x16x128xbf16>,
    %c0_i32_23 = arith.constant 0 : i32
    %40 = arith.cmpi eq, %arg1, %c0_i32_23 : i32
    %41 = arith.extui %40 : i1 to i32
    %c0_i32_24 = arith.constant 0 : i32
    %42 = arith.cmpi ne, %41, %c0_i32_24 : i32
    scf.if %42 {
      %cst_65 = arith.constant 0.000000e+00 : bf16
      %90 = vector.broadcast %cst_65 : bf16 to vector<1x16x384xbf16>
      %c0_66 = arith.constant 0 : index
      %c0_67 = arith.constant 0 : index
      %c0_68 = arith.constant 0 : index
      %91 = vector.load %arg13[%c0_66, %c0_67, %c0_68] : memref<10x16x384xbf16, #tpu.memory_space<vmem>>, vector<1x16x384xbf16>
      tpu.vector_store %arg13[%c0_66, %c0_67, %c0_68], %90 {strides = array<i32>} : memref<10x16x384xbf16, #tpu.memory_space<vmem>>, vector<1x16x384xbf16>,
    } else {
    }
    %c1_i32_25 = arith.constant 1 : i32
    %43 = arith.cmpi eq, %arg1, %c1_i32_25 : i32
    %44 = arith.extui %43 : i1 to i32
    %c0_i32_26 = arith.constant 0 : i32
    %45 = arith.cmpi ne, %44, %c0_i32_26 : i32
    scf.if %45 {
      %cst_65 = arith.constant 0.000000e+00 : bf16
      %90 = vector.broadcast %cst_65 : bf16 to vector<1x16x384xbf16>
      %c9 = arith.constant 9 : index
      %c0_66 = arith.constant 0 : index
      %c0_67 = arith.constant 0 : index
      %91 = vector.load %arg13[%c9, %c0_66, %c0_67] : memref<10x16x384xbf16, #tpu.memory_space<vmem>>, vector<1x16x384xbf16>
      tpu.vector_store %arg13[%c9, %c0_66, %c0_67], %90 {strides = array<i32>} : memref<10x16x384xbf16, #tpu.memory_space<vmem>>, vector<1x16x384xbf16>,
    } else {
    }
    %46 = tpu.iota {dimensions = array<i32: 0>} : vector<16x128xi32>
    %c0_i32_27 = arith.constant 0 : i32
    %47 = arith.cmpi sgt, %arg1, %c0_i32_27 : i32
    %48 = arith.extui %47 : i1 to i32
    %c0_i32_28 = arith.constant 0 : i32
    %49 = arith.cmpi ne, %48, %c0_i32_28 : i32
    scf.if %49 {
      %c0_i32_65 = arith.constant 0 : i32
      %c0_i32_66 = arith.constant 0 : i32
      %c0_i32_67 = arith.constant 0 : i32
      %c0_i32_68 = arith.constant 0 : i32
      %90 = tpu.memref_slice %arg3[%arg0, %1, %c0_i32_67, %c0_i32_68] : memref<2x16x16x128xbf16, #tpu.memory_space<any>> -> memref<1x1x16x128xbf16, #tpu.memory_space<any>>
      %91 = tpu.memref_squeeze %90 : memref<1x1x16x128xbf16, #tpu.memory_space<any>> -> memref<16x128xbf16, #tpu.memory_space<any>>
      %c0_i32_69 = arith.constant 0 : i32
      %c0_i32_70 = arith.constant 0 : i32
      %92 = tpu.memref_slice %arg11[%c0_i32_65, %c0_i32_69, %c0_i32_70] : memref<2x16x128xbf16, #tpu.memory_space<vmem>> -> memref<1x16x128xbf16, #tpu.memory_space<vmem>>
      %93 = tpu.memref_squeeze %92 : memref<1x16x128xbf16, #tpu.memory_space<vmem>> -> memref<16x128xbf16, #tpu.memory_space<vmem>>
      %94 = tpu.memref_slice %arg12[%c0_i32_66] : memref<2x!tpu.dma_semaphore, #tpu.memory_space<semaphore_mem>> -> memref<1x!tpu.dma_semaphore, #tpu.memory_space<semaphore_mem>>
      %95 = tpu.memref_squeeze %94 : memref<1x!tpu.dma_semaphore, #tpu.memory_space<semaphore_mem>> -> memref<!tpu.dma_semaphore, #tpu.memory_space<semaphore_mem>>
      tpu.wait_dma2 semaphore(%95 : memref<!tpu.dma_semaphore, #tpu.memory_space<semaphore_mem>>) src(%91 : memref<16x128xbf16, #tpu.memory_space<any>>) dst(%93 : memref<16x128xbf16, #tpu.memory_space<vmem>>)
      %c0_71 = arith.constant 0 : index
      %c0_72 = arith.constant 0 : index
      %c0_73 = arith.constant 0 : index
      %96 = vector.load %arg11[%c0_71, %c0_72, %c0_73] : memref<2x16x128xbf16, #tpu.memory_space<vmem>>, vector<1x16x128xbf16>
      %97 = vector.shape_cast %96 : vector<1x16x128xbf16> to vector<16x128xbf16>
      %c0_74 = arith.constant 0 : index
      %c0_75 = arith.constant 0 : index
      %98 = vector.load %arg4[%c0_74, %c0_75] : memref<128x128xbf16, #tpu.memory_space<vmem>>, vector<128x128xbf16>
      %cst_76 = arith.constant dense<0.000000e+00> : vector<16x128xf32>
      %99 = tpu.matmul %97, %98, %cst_76 {dimension_numbers = #tpu.dot_dimension_numbers<[1], [0], [0], [1], [0, 0, 1, 1], [], []>} : vector<16x128xbf16>, vector<128x128xbf16>, vector<16x128xf32> -> vector<16x128xf32>
      %c0_77 = arith.constant 0 : index
      %c0_78 = arith.constant 0 : index
      %100 = vector.load %arg5[%c0_77, %c0_78] : memref<1x128xf32, #tpu.memory_space<vmem>>, vector<1x128xf32>
      %101 = vector.broadcast %100 : vector<1x128xf32> to vector<16x128xf32>
      %102 = arith.addf %99, %101 : vector<16x128xf32>
      %cst_79 = arith.constant 0.000000e+00 : f32
      %103 = vector.broadcast %cst_79 : f32 to vector<16x128xf32>
      %104 = arith.maximumf %102, %103 : vector<16x128xf32>
      %c0_i32_80 = arith.constant 0 : i32
      %105 = vector.broadcast %c0_i32_80 : i32 to vector<16x128xi32>
      %106 = arith.cmpi eq, %46, %105 : vector<16x128xi32>
      %c1_i32_81 = arith.constant 1 : i32
      %107 = tpu.dynamic_rotate %104 by %c1_i32_81 dim 0 : vector<16x128xf32>, i32 -> vector<16x128xf32>
      %cst_82 = arith.constant 0.000000e+00 : f32
      %108 = vector.broadcast %cst_82 : f32 to vector<16x128xf32>
      %109 = arith.select %106, %108, %107 : vector<16x128xi1>, vector<16x128xf32>
      %c15_i32_83 = arith.constant 15 : i32
      %110 = vector.broadcast %c15_i32_83 : i32 to vector<16x128xi32>
      %111 = arith.cmpi eq, %46, %110 : vector<16x128xi32>
      %c15_i32_84 = arith.constant 15 : i32
      %112 = tpu.dynamic_rotate %104 by %c15_i32_84 dim 0 : vector<16x128xf32>, i32 -> vector<16x128xf32>
      %cst_85 = arith.constant 0.000000e+00 : f32
      %113 = vector.broadcast %cst_85 : f32 to vector<16x128xf32>
      %114 = arith.select %111, %113, %112 : vector<16x128xi1>, vector<16x128xf32>
      %115 = vector.shape_cast %109 : vector<16x128xf32> to vector<1x16x128xf32>
      %116 = arith.truncf %115 : vector<1x16x128xf32> to vector<1x16x128xbf16>
      %c0_86 = arith.constant 0 : index
      %c0_87 = arith.constant 0 : index
      %c0_88 = arith.constant 0 : index
      %117 = vector.load %arg13[%c0_86, %c0_87, %c0_88] : memref<10x16x384xbf16, #tpu.memory_space<vmem>>, vector<1x16x128xbf16>
      tpu.vector_store %arg13[%c0_86, %c0_87, %c0_88], %116 {strides = array<i32>} : memref<10x16x384xbf16, #tpu.memory_space<vmem>>, vector<1x16x128xbf16>,
      %118 = vector.shape_cast %104 : vector<16x128xf32> to vector<1x16x128xf32>
      %119 = arith.truncf %118 : vector<1x16x128xf32> to vector<1x16x128xbf16>
      %c0_89 = arith.constant 0 : index
      %c0_90 = arith.constant 0 : index
      %c128_91 = arith.constant 128 : index
      %120 = vector.load %arg13[%c0_89, %c0_90, %c128_91] : memref<10x16x384xbf16, #tpu.memory_space<vmem>>, vector<1x16x128xbf16>
      tpu.vector_store %arg13[%c0_89, %c0_90, %c128_91], %119 {strides = array<i32>} : memref<10x16x384xbf16, #tpu.memory_space<vmem>>, vector<1x16x128xbf16>,
      %121 = vector.shape_cast %114 : vector<16x128xf32> to vector<1x16x128xf32>
      %122 = arith.truncf %121 : vector<1x16x128xf32> to vector<1x16x128xbf16>
      %c0_92 = arith.constant 0 : index
      %c0_93 = arith.constant 0 : index
      %c256_94 = arith.constant 256 : index
      %123 = vector.load %arg13[%c0_92, %c0_93, %c256_94] : memref<10x16x384xbf16, #tpu.memory_space<vmem>>, vector<1x16x128xbf16>
      tpu.vector_store %arg13[%c0_92, %c0_93, %c256_94], %122 {strides = array<i32>} : memref<10x16x384xbf16, #tpu.memory_space<vmem>>, vector<1x16x128xbf16>,
    } else {
    }
    %c1_i32_29 = arith.constant 1 : i32
    %50 = arith.cmpi slt, %arg1, %c1_i32_29 : i32
    %51 = arith.extui %50 : i1 to i32
    %c0_i32_30 = arith.constant 0 : i32
    %52 = arith.cmpi ne, %51, %c0_i32_30 : i32
    scf.if %52 {
      %c1_i32_65 = arith.constant 1 : i32
      %c1_i32_66 = arith.constant 1 : i32
      %c0_i32_67 = arith.constant 0 : i32
      %c0_i32_68 = arith.constant 0 : i32
      %90 = tpu.memref_slice %arg3[%arg0, %3, %c0_i32_67, %c0_i32_68] : memref<2x16x16x128xbf16, #tpu.memory_space<any>> -> memref<1x1x16x128xbf16, #tpu.memory_space<any>>
      %91 = tpu.memref_squeeze %90 : memref<1x1x16x128xbf16, #tpu.memory_space<any>> -> memref<16x128xbf16, #tpu.memory_space<any>>
      %c0_i32_69 = arith.constant 0 : i32
      %c0_i32_70 = arith.constant 0 : i32
      %92 = tpu.memref_slice %arg11[%c1_i32_65, %c0_i32_69, %c0_i32_70] : memref<2x16x128xbf16, #tpu.memory_space<vmem>> -> memref<1x16x128xbf16, #tpu.memory_space<vmem>>
      %93 = tpu.memref_squeeze %92 : memref<1x16x128xbf16, #tpu.memory_space<vmem>> -> memref<16x128xbf16, #tpu.memory_space<vmem>>
      %94 = tpu.memref_slice %arg12[%c1_i32_66] : memref<2x!tpu.dma_semaphore, #tpu.memory_space<semaphore_mem>> -> memref<1x!tpu.dma_semaphore, #tpu.memory_space<semaphore_mem>>
      %95 = tpu.memref_squeeze %94 : memref<1x!tpu.dma_semaphore, #tpu.memory_space<semaphore_mem>> -> memref<!tpu.dma_semaphore, #tpu.memory_space<semaphore_mem>>
      tpu.wait_dma2 semaphore(%95 : memref<!tpu.dma_semaphore, #tpu.memory_space<semaphore_mem>>) src(%91 : memref<16x128xbf16, #tpu.memory_space<any>>) dst(%93 : memref<16x128xbf16, #tpu.memory_space<vmem>>)
      %c1_71 = arith.constant 1 : index
      %c0_72 = arith.constant 0 : index
      %c0_73 = arith.constant 0 : index
      %96 = vector.load %arg11[%c1_71, %c0_72, %c0_73] : memref<2x16x128xbf16, #tpu.memory_space<vmem>>, vector<1x16x128xbf16>
      %97 = vector.shape_cast %96 : vector<1x16x128xbf16> to vector<16x128xbf16>
      %c0_74 = arith.constant 0 : index
      %c0_75 = arith.constant 0 : index
      %98 = vector.load %arg4[%c0_74, %c0_75] : memref<128x128xbf16, #tpu.memory_space<vmem>>, vector<128x128xbf16>
      %cst_76 = arith.constant dense<0.000000e+00> : vector<16x128xf32>
      %99 = tpu.matmul %97, %98, %cst_76 {dimension_numbers = #tpu.dot_dimension_numbers<[1], [0], [0], [1], [0, 0, 1, 1], [], []>} : vector<16x128xbf16>, vector<128x128xbf16>, vector<16x128xf32> -> vector<16x128xf32>
      %c0_77 = arith.constant 0 : index
      %c0_78 = arith.constant 0 : index
      %100 = vector.load %arg5[%c0_77, %c0_78] : memref<1x128xf32, #tpu.memory_space<vmem>>, vector<1x128xf32>
      %101 = vector.broadcast %100 : vector<1x128xf32> to vector<16x128xf32>
      %102 = arith.addf %99, %101 : vector<16x128xf32>
      %cst_79 = arith.constant 0.000000e+00 : f32
      %103 = vector.broadcast %cst_79 : f32 to vector<16x128xf32>
      %104 = arith.maximumf %102, %103 : vector<16x128xf32>
      %c0_i32_80 = arith.constant 0 : i32
      %105 = vector.broadcast %c0_i32_80 : i32 to vector<16x128xi32>
      %106 = arith.cmpi eq, %46, %105 : vector<16x128xi32>
      %c1_i32_81 = arith.constant 1 : i32
      %107 = tpu.dynamic_rotate %104 by %c1_i32_81 dim 0 : vector<16x128xf32>, i32 -> vector<16x128xf32>
      %cst_82 = arith.constant 0.000000e+00 : f32
      %108 = vector.broadcast %cst_82 : f32 to vector<16x128xf32>
      %109 = arith.select %106, %108, %107 : vector<16x128xi1>, vector<16x128xf32>
      %c15_i32_83 = arith.constant 15 : i32
      %110 = vector.broadcast %c15_i32_83 : i32 to vector<16x128xi32>
      %111 = arith.cmpi eq, %46, %110 : vector<16x128xi32>
      %c15_i32_84 = arith.constant 15 : i32
      %112 = tpu.dynamic_rotate %104 by %c15_i32_84 dim 0 : vector<16x128xf32>, i32 -> vector<16x128xf32>
      %cst_85 = arith.constant 0.000000e+00 : f32
      %113 = vector.broadcast %cst_85 : f32 to vector<16x128xf32>
      %114 = arith.select %111, %113, %112 : vector<16x128xi1>, vector<16x128xf32>
      %115 = vector.shape_cast %109 : vector<16x128xf32> to vector<1x16x128xf32>
      %116 = arith.truncf %115 : vector<1x16x128xf32> to vector<1x16x128xbf16>
      %c9 = arith.constant 9 : index
      %c0_86 = arith.constant 0 : index
      %c0_87 = arith.constant 0 : index
      %117 = vector.load %arg13[%c9, %c0_86, %c0_87] : memref<10x16x384xbf16, #tpu.memory_space<vmem>>, vector<1x16x128xbf16>
      tpu.vector_store %arg13[%c9, %c0_86, %c0_87], %116 {strides = array<i32>} : memref<10x16x384xbf16, #tpu.memory_space<vmem>>, vector<1x16x128xbf16>,
      %118 = vector.shape_cast %104 : vector<16x128xf32> to vector<1x16x128xf32>
      %119 = arith.truncf %118 : vector<1x16x128xf32> to vector<1x16x128xbf16>
      %c9_88 = arith.constant 9 : index
      %c0_89 = arith.constant 0 : index
      %c128_90 = arith.constant 128 : index
      %120 = vector.load %arg13[%c9_88, %c0_89, %c128_90] : memref<10x16x384xbf16, #tpu.memory_space<vmem>>, vector<1x16x128xbf16>
      tpu.vector_store %arg13[%c9_88, %c0_89, %c128_90], %119 {strides = array<i32>} : memref<10x16x384xbf16, #tpu.memory_space<vmem>>, vector<1x16x128xbf16>,
      %121 = vector.shape_cast %114 : vector<16x128xf32> to vector<1x16x128xf32>
      %122 = arith.truncf %121 : vector<1x16x128xf32> to vector<1x16x128xbf16>
      %c9_91 = arith.constant 9 : index
      %c0_92 = arith.constant 0 : index
      %c256_93 = arith.constant 256 : index
      %123 = vector.load %arg13[%c9_91, %c0_92, %c256_93] : memref<10x16x384xbf16, #tpu.memory_space<vmem>>, vector<1x16x128xbf16>
      tpu.vector_store %arg13[%c9_91, %c0_92, %c256_93], %122 {strides = array<i32>} : memref<10x16x384xbf16, #tpu.memory_space<vmem>>, vector<1x16x128xbf16>,
    } else {
    }
    %cst_31 = arith.constant 0.000000e+00 : f32
    %53 = vector.broadcast %cst_31 : f32 to vector<128x128xf32>
    %c0_32 = arith.constant 0 : index
    %c0_33 = arith.constant 0 : index
    %c0_34 = arith.constant 0 : index
    %54 = vector.load %arg13[%c0_32, %c0_33, %c0_34] : memref<10x16x384xbf16, #tpu.memory_space<vmem>>, vector<8x16x384xbf16>
    %55 = vector.shape_cast %54 : vector<8x16x384xbf16> to vector<128x384xbf16>
    %c0_35 = arith.constant 0 : index
    %c0_36 = arith.constant 0 : index
    %c0_37 = arith.constant 0 : index
    %56 = vector.load %arg6[%c0_35, %c0_36, %c0_37] : memref<3x384x128xbf16, #tpu.memory_space<vmem>>, vector<1x384x128xbf16>
    %57 = vector.shape_cast %56 : vector<1x384x128xbf16> to vector<384x128xbf16>
    %cst_38 = arith.constant dense<0.000000e+00> : vector<128x128xf32>
    %58 = tpu.matmul %55, %57, %cst_38 {dimension_numbers = #tpu.dot_dimension_numbers<[1], [0], [0], [1], [0, 0, 1, 1], [], []>} : vector<128x384xbf16>, vector<384x128xbf16>, vector<128x128xf32> -> vector<128x128xf32>
    %59 = arith.addf %53, %58 : vector<128x128xf32>
    %c1_39 = arith.constant 1 : index
    %c0_40 = arith.constant 0 : index
    %c0_41 = arith.constant 0 : index
    %60 = vector.load %arg13[%c1_39, %c0_40, %c0_41] : memref<10x16x384xbf16, #tpu.memory_space<vmem>>, vector<8x16x384xbf16>
    %61 = vector.shape_cast %60 : vector<8x16x384xbf16> to vector<128x384xbf16>
    %c1_42 = arith.constant 1 : index
    %c0_43 = arith.constant 0 : index
    %c0_44 = arith.constant 0 : index
    %62 = vector.load %arg6[%c1_42, %c0_43, %c0_44] : memref<3x384x128xbf16, #tpu.memory_space<vmem>>, vector<1x384x128xbf16>
    %63 = vector.shape_cast %62 : vector<1x384x128xbf16> to vector<384x128xbf16>
    %cst_45 = arith.constant dense<0.000000e+00> : vector<128x128xf32>
    %64 = tpu.matmul %61, %63, %cst_45 {dimension_numbers = #tpu.dot_dimension_numbers<[1], [0], [0], [1], [0, 0, 1, 1], [], []>} : vector<128x384xbf16>, vector<384x128xbf16>, vector<128x128xf32> -> vector<128x128xf32>
    %65 = arith.addf %59, %64 : vector<128x128xf32>
    %c2 = arith.constant 2 : index
    %c0_46 = arith.constant 0 : index
    %c0_47 = arith.constant 0 : index
    %66 = vector.load %arg13[%c2, %c0_46, %c0_47] : memref<10x16x384xbf16, #tpu.memory_space<vmem>>, vector<8x16x384xbf16>
    %67 = vector.shape_cast %66 : vector<8x16x384xbf16> to vector<128x384xbf16>
    %c2_48 = arith.constant 2 : index
    %c0_49 = arith.constant 0 : index
    %c0_50 = arith.constant 0 : index
    %68 = vector.load %arg6[%c2_48, %c0_49, %c0_50] : memref<3x384x128xbf16, #tpu.memory_space<vmem>>, vector<1x384x128xbf16>
    %69 = vector.shape_cast %68 : vector<1x384x128xbf16> to vector<384x128xbf16>
    %cst_51 = arith.constant dense<0.000000e+00> : vector<128x128xf32>
    %70 = tpu.matmul %67, %69, %cst_51 {dimension_numbers = #tpu.dot_dimension_numbers<[1], [0], [0], [1], [0, 0, 1, 1], [], []>} : vector<128x384xbf16>, vector<384x128xbf16>, vector<128x128xf32> -> vector<128x128xf32>
    %71 = arith.addf %65, %70 : vector<128x128xf32>
    %c0_52 = arith.constant 0 : index
    %c0_53 = arith.constant 0 : index
    %72 = vector.load %arg7[%c0_52, %c0_53] : memref<1x128xf32, #tpu.memory_space<vmem>>, vector<1x128xf32>
    %73 = vector.broadcast %72 : vector<1x128xf32> to vector<128x128xf32>
    %74 = arith.addf %71, %73 : vector<128x128xf32>
    %cst_54 = arith.constant 0.000000e+00 : f32
    %75 = vector.broadcast %cst_54 : f32 to vector<128x128xf32>
    %76 = arith.maximumf %74, %75 : vector<128x128xf32>
    %77 = arith.truncf %76 : vector<128x128xf32> to vector<128x128xbf16>
    %c0_55 = arith.constant 0 : index
    %c0_56 = arith.constant 0 : index
    %78 = vector.load %arg8[%c0_55, %c0_56] : memref<128x128xbf16, #tpu.memory_space<vmem>>, vector<128x128xbf16>
    %cst_57 = arith.constant dense<0.000000e+00> : vector<128x128xf32>
    %79 = tpu.matmul %77, %78, %cst_57 {dimension_numbers = #tpu.dot_dimension_numbers<[1], [0], [0], [1], [0, 0, 1, 1], [], []>} : vector<128x128xbf16>, vector<128x128xbf16>, vector<128x128xf32> -> vector<128x128xf32>
    %c0_58 = arith.constant 0 : index
    %c0_59 = arith.constant 0 : index
    %80 = vector.load %arg9[%c0_58, %c0_59] : memref<1x128xf32, #tpu.memory_space<vmem>>, vector<1x128xf32>
    %81 = vector.broadcast %80 : vector<1x128xf32> to vector<128x128xf32>
    %82 = arith.addf %79, %81 : vector<128x128xf32>
    %83 = arith.extf %11 : vector<128x128xbf16> to vector<128x128xf32>
    %84 = arith.addf %82, %83 : vector<128x128xf32>
    %cst_60 = arith.constant 0.000000e+00 : f32
    %85 = vector.broadcast %cst_60 : f32 to vector<128x128xf32>
    %86 = arith.maximumf %84, %85 : vector<128x128xf32>
    %87 = vector.shape_cast %86 : vector<128x128xf32> to vector<1x8x16x128xf32>
    %88 = arith.truncf %87 : vector<1x8x16x128xf32> to vector<1x8x16x128xbf16>
    %c0_61 = arith.constant 0 : index
    %c0_62 = arith.constant 0 : index
    %c0_63 = arith.constant 0 : index
    %c0_64 = arith.constant 0 : index
    %89 = vector.load %arg10[%c0_61, %c0_62, %c0_63, %c0_64] : memref<1x8x16x128xbf16, #tpu.memory_space<vmem>>, vector<1x8x16x128xbf16>
    tpu.vector_store %arg10[%c0_61, %c0_62, %c0_63, %c0_64], %88 {strides = array<i32>} : memref<1x8x16x128xbf16, #tpu.memory_space<vmem>>, vector<1x8x16x128xbf16>,
    return
  }
  func.func @transform_0(%arg0: i32, %arg1: i32) -> (i32, i32, i32, i32) {
    %c0_i32 = arith.constant 0 : i32
    %c0_i32_0 = arith.constant 0 : i32
    %c0_i32_1 = arith.constant 0 : i32
    return %arg0, %arg1, %c0_i32, %c0_i32_0 : i32, i32, i32, i32
  }
  func.func @transform_2(%arg0: i32, %arg1: i32) -> (i32, i32) {
    %c0_i32 = arith.constant 0 : i32
    %c0_i32_0 = arith.constant 0 : i32
    %c0_i32_1 = arith.constant 0 : i32
    return %c0_i32, %c0_i32_0 : i32, i32
  }
  func.func @transform_3(%arg0: i32, %arg1: i32) -> (i32, i32) {
    %c0_i32 = arith.constant 0 : i32
    %c0_i32_0 = arith.constant 0 : i32
    %c0_i32_1 = arith.constant 0 : i32
    return %c0_i32, %c0_i32_0 : i32, i32
  }
  func.func @transform_4(%arg0: i32, %arg1: i32) -> (i32, i32, i32) {
    %c0_i32 = arith.constant 0 : i32
    %c0_i32_0 = arith.constant 0 : i32
    %c0_i32_1 = arith.constant 0 : i32
    %c0_i32_2 = arith.constant 0 : i32
    return %c0_i32, %c0_i32_0, %c0_i32_1 : i32, i32, i32
  }
  func.func @transform_5(%arg0: i32, %arg1: i32) -> (i32, i32) {
    %c0_i32 = arith.constant 0 : i32
    %c0_i32_0 = arith.constant 0 : i32
    %c0_i32_1 = arith.constant 0 : i32
    return %c0_i32, %c0_i32_0 : i32, i32
  }
  func.func @transform_6(%arg0: i32, %arg1: i32) -> (i32, i32) {
    %c0_i32 = arith.constant 0 : i32
    %c0_i32_0 = arith.constant 0 : i32
    %c0_i32_1 = arith.constant 0 : i32
    return %c0_i32, %c0_i32_0 : i32, i32
  }
  func.func @transform_7(%arg0: i32, %arg1: i32) -> (i32, i32) {
    %c0_i32 = arith.constant 0 : i32
    %c0_i32_0 = arith.constant 0 : i32
    %c0_i32_1 = arith.constant 0 : i32
    return %c0_i32, %c0_i32_0 : i32, i32
  }
  func.func @transform_8(%arg0: i32, %arg1: i32) -> (i32, i32, i32, i32) {
    %c0_i32 = arith.constant 0 : i32
    %c0_i32_0 = arith.constant 0 : i32
    %c0_i32_1 = arith.constant 0 : i32
    return %arg0, %arg1, %c0_i32, %c0_i32_0 : i32, i32, i32, i32
  }
}

</mosaic_0001>

<llo_original>
// kernel: tpu_custom_call.1
$region0: #{tpu_custom_call.1}
  #allocation0 [shape = 'u32[]', space=smem, size = 0x4, offset = 0x4, fixed_abs, tag = 'smem constant byte address 0x4 - core index']
  #allocation1 [shape = 'u32[144,128]{1,0:T(1,128)}', space=vmem, size = 0x12000, scoped, tag = 'internal scratch']
  #allocation2 [shape = 'bf16[2,16,128]{2,1,0:T(16,128)(2,1)}', space=vmem, size = 0x2000, scoped, tag = 'scratch operand']
  #allocation3 [shape = 's32[2]{0}', space=sflag, size = 0x8, scoped, tag = 'scratch operand']
  #allocation4 [shape = 'bf16[10,16,384]{2,1,0:T(16,128)(2,1)}', space=vmem, size = 0x1e000, scoped, tag = 'scratch operand']
  #allocation14 [shape = 's32[]', space=sflag, size = 0x4, offset = 0, fixed_abs, tag = 'sflag constant byte address 0x0 - dummy sync flag']
  #allocation15 [shape = 's32[]', space=sflag, size = 0x4, offset = 0, fixed_abs, tag = 'sflag constant byte address 0x0 - dummy sync flag']
  #allocation16 [shape = 'u32[]', space=smem, size = 0x4, offset = 0x44, fixed_abs, tag = 'smem constant byte address 0x44 - assertion arg 0']
  #allocation17 [shape = 'u32[]', space=smem, size = 0x4, offset = 0x48, fixed_abs, tag = 'smem constant byte address 0x48 - assertion arg 1']
  #allocation18 [shape = 's32[]', space=sflag, size = 0x4, offset = 0, fixed_abs, tag = 'sflag constant byte address 0x0 - dummy sync flag']
  #allocation19 [shape = 's32[]', space=sflag, size = 0x4, offset = 0, fixed_abs, tag = 'sflag constant byte address 0x0 - dummy sync flag']
  %s0 = inlined_call_operand.hbm [shape: bf16[2,16,16,128], index: 0, kind: input, shape index: {}]
  %s1 = inlined_call_operand.hbm [shape: bf16[2,16,16,128], index: 1, kind: input, shape index: {}]
  %s2 = inlined_call_operand.hbm [shape: bf16[128,128], index: 2, kind: input, shape index: {}]
  %s3 = inlined_call_operand.vmem [shape: f32[1,128], index: 3, kind: input, shape index: {}]
  %s4 = inlined_call_operand.hbm [shape: bf16[3,384,128], index: 4, kind: input, shape index: {}]
  %s5 = inlined_call_operand.vmem [shape: f32[1,128], index: 5, kind: input, shape index: {}]
  %s6 = inlined_call_operand.hbm [shape: bf16[128,128], index: 6, kind: input, shape index: {}]
  %s7 = inlined_call_operand.vmem [shape: f32[1,128], index: 7, kind: input, shape index: {}]
  %s8 = inlined_call_operand.hbm [shape: bf16[2,16,16,128], index: 8, kind: output, shape index: {}]
  %s9 = sld [smem:[#allocation0]]
  $region109: #{tpu_custom_call.1} parent=0
    _
  %s11 = ssub.s32 1, %s9
  %s12 = scalar_select 0, %s11, %s9
  $region1: #{tpu_custom_call.1} parent=0
    #allocation5 [shape = 'u8[65536]{0}', space=vmem, size = 0x10000, scoped, tag = 'input window, operand 0']
    #allocation6 [shape = 's32[2]{0}', space=sflag, size = 0x8, scoped, tag = 'scoped memory for tpu_custom_call.1']
    #allocation7 [shape = 's32[2]{0}', space=sflag, size = 0x8, scoped, tag = 'scoped memory for tpu_custom_call.1']
    #allocation8 [shape = 'u8[32768]{0}', space=vmem, size = 0x8000, scoped, tag = 'input window, operand 2, single buffered']
    #allocation9 [shape = 's32[1]{0}', space=sflag, size = 0x4, scoped, tag = 'scoped memory for tpu_custom_call.1']
    #allocation10 [shape = 'u8[294912]{0}', space=vmem, size = 0x48000, scoped, tag = 'input window, operand 4, single buffered']
    #allocation11 [shape = 'u8[32768]{0}', space=vmem, size = 0x8000, scoped, tag = 'input window, operand 6, single buffered']
    #allocation12 [shape = 's32[1]{0}', space=sflag, size = 0x4, scoped, tag = 'scoped memory for tpu_custom_call.1']
    #allocation13 [shape = 'u8[65536]{0}', space=vmem, size = 0x10000, scoped, tag = 'output window, operand 0']
    %13 = vsyncpa [#allocation6], 0
    %s14 = scalar_lea.sflag [#allocation6], 1
    %15 = vsyncpa %s14, 0
    %16 = vsyncpa [#allocation9], 0
    %17 = vsyncpa [#allocation12], 0
    %18 = vsyncpa [#allocation7], 0
    %s19 = scalar_lea.sflag [#allocation7], 1
    %20 = vsyncpa %s19, 0
    loop: start=0, step=1, limit=6
    $region2: #{tpu_custom_call.1} parent=1 // loop_pre_header
      _
    $region3: #{tpu_custom_call.1} parent=1 // loop_header
      %s22 = sphi 0, %s26
      %p23 = scmp.ge.s32.totalorder %s22, 6
      %s29 = sphi 0, %s41
      %s30 = sphi 0, %s37
      %s31 = sphi 0, %s29
      %s32 = sphi 0, %s30
      %s33 = sphi 0, %s31
      %s34 = sphi 0, %s32
      %s46 = sphi 0, %s48
      %s49 = sphi 0, %s46
      %s50 = sphi 0, %s49
      %s66 = sphi 0, %s50
      %s70 = sphi 0, %s70
      %s72 = sphi 0, %s70
      %s73 = sphi 0, %s72
      %s87 = sphi 0, %s73
      %s91 = sphi 0, %s91
      %s93 = sphi 0, %s91
      %s94 = sphi 0, %s93
      %s108 = sphi 0, %s94
      %s112 = sphi 0, %s112
      %s114 = sphi 0, %s112
      %s115 = sphi 0, %s114
      %s129 = sphi 0, %s115
      %s133 = sphi 0, %s133
      %s135 = sphi 0, %s133
      %s136 = sphi 0, %s135
      %s150 = sphi 0, %s136
      %s154 = sphi 0, %s154
      %s156 = sphi 0, %s154
      %s157 = sphi 0, %s156
      %s171 = sphi 0, %s157
      %s175 = sphi 0, %s175
      %s177 = sphi 0, %s175
      %s178 = sphi 0, %s177
      %s192 = sphi 0, %s178
      %s200 = sphi 0, %s202
      %s203 = sphi 0, %s200
      %s204 = sphi 0, %s203
      %s220 = sphi 0, %s204
    $region4: #{tpu_custom_call.1} parent=1 // loop_header_branch
      %25 = sbr.rel (%p23) target = $region8
    $region5: #{tpu_custom_call.1} parent=1 // loop_body
      %s27 = ssub.s32 %s22, 1
      %s28 = ssub.s32 %s22, 2
      %s35 = sadd.s32 1, %s30
      %p36 = scmp.ge.s32.totalorder %s35, 2
      %s37 = scalar_select %p36, 0, %s35
      %s38 = sadd.s32 1, %s29
      %s39 = scalar_select %p36, %s38, %s29
      %p40 = scmp.ge.s32.totalorder %s39, 2
      %s41 = scalar_select %p40, 0, %s39
      %s42 = ssub.s32 %s29, %s41
      %s43 = ssub.s32 %s30, %s37
      %s44 = sor.u32 %s42, %s43
      %p45 = scmp.eq.s32.totalorder %s44, 0
      %s47 = sadd.s32 %s46, 1
      %s48 = scalar_select %p45, %s46, %s47
      %p51 = pneg %p45
      %p52 = scmp.eq.s32.totalorder %s22, 3
      %p53 = por %p51, %p52
      %p54 = scmp.ne.s32.totalorder %s46, %s49
      %p55 = scmp.eq.s32.totalorder %s22, 0
      %p56 = por %p54, %p55
      %p57 = scmp.ne.s32.totalorder %s46, %s49
      %p58 = scmp.eq.s32.totalorder %s27, 3
      %p59 = por %p57, %p58
      %p60 = scmp.ne.s32.totalorder %s49, %s50
      %p61 = scmp.eq.s32.totalorder %s27, 0
      %p62 = por %p60, %p61
      %p63 = scmp.ne.s32.totalorder %s49, %s50
      %p64 = scmp.eq.s32.totalorder %s28, 3
      %p65 = por %p63, %p64
      %p67 = scmp.ne.s32.totalorder %s50, %s66
      %p68 = scmp.eq.s32.totalorder %s28, 0
      %p69 = por %p67, %p68
      %s71 = sadd.s32 %s70, 1
      %p74 = scmp.eq.s32.totalorder %s22, 3
      %p75 = scmp.ne.s32.totalorder %s70, %s72
      %p76 = scmp.eq.s32.totalorder %s22, 0
      %p77 = por %p75, %p76
      %p78 = scmp.ne.s32.totalorder %s70, %s72
      %p79 = scmp.eq.s32.totalorder %s27, 3
      %p80 = por %p78, %p79
      %p81 = scmp.ne.s32.totalorder %s72, %s73
      %p82 = scmp.eq.s32.totalorder %s27, 0
      %p83 = por %p81, %p82
      %p84 = scmp.ne.s32.totalorder %s72, %s73
      %p85 = scmp.eq.s32.totalorder %s28, 3
      %p86 = por %p84, %p85
      %p88 = scmp.ne.s32.totalorder %s73, %s87
      %p89 = scmp.eq.s32.totalorder %s28, 0
      %p90 = por %p88, %p89
      %s92 = sadd.s32 %s91, 1
      %p95 = scmp.eq.s32.totalorder %s22, 3
      %p96 = scmp.ne.s32.totalorder %s91, %s93
      %p97 = scmp.eq.s32.totalorder %s22, 0
      %p98 = por %p96, %p97
      %p99 = scmp.ne.s32.totalorder %s91, %s93
      %p100 = scmp.eq.s32.totalorder %s27, 3
      %p101 = por %p99, %p100
      %p102 = scmp.ne.s32.totalorder %s93, %s94
      %p103 = scmp.eq.s32.totalorder %s27, 0
      %p104 = por %p102, %p103
      %p105 = scmp.ne.s32.totalorder %s93, %s94
      %p106 = scmp.eq.s32.totalorder %s28, 3
      %p107 = por %p105, %p106
      %p109 = scmp.ne.s32.totalorder %s94, %s108
      %p110 = scmp.eq.s32.totalorder %s28, 0
      %p111 = por %p109, %p110
      %s113 = sadd.s32 %s112, 1
      %p116 = scmp.eq.s32.totalorder %s22, 3
      %p117 = scmp.ne.s32.totalorder %s112, %s114
      %p118 = scmp.eq.s32.totalorder %s22, 0
      %p119 = por %p117, %p118
      %p120 = scmp.ne.s32.totalorder %s112, %s114
      %p121 = scmp.eq.s32.totalorder %s27, 3
      %p122 = por %p120, %p121
      %p123 = scmp.ne.s32.totalorder %s114, %s115
      %p124 = scmp.eq.s32.totalorder %s27, 0
      %p125 = por %p123, %p124
      %p126 = scmp.ne.s32.totalorder %s114, %s115
      %p127 = scmp.eq.s32.totalorder %s28, 3
      %p128 = por %p126, %p127
      %p130 = scmp.ne.s32.totalorder %s115, %s129
      %p131 = scmp.eq.s32.totalorder %s28, 0
      %p132 = por %p130, %p131
      %s134 = sadd.s32 %s133, 1
      %p137 = scmp.eq.s32.totalorder %s22, 3
      %p138 = scmp.ne.s32.totalorder %s133, %s135
      %p139 = scmp.eq.s32.totalorder %s22, 0
      %p140 = por %p138, %p139
      %p141 = scmp.ne.s32.totalorder %s133, %s135
      %p142 = scmp.eq.s32.totalorder %s27, 3
      %p143 = por %p141, %p142
      %p144 = scmp.ne.s32.totalorder %s135, %s136
      %p145 = scmp.eq.s32.totalorder %s27, 0
      %p146 = por %p144, %p145
      %p147 = scmp.ne.s32.totalorder %s135, %s136
      %p148 = scmp.eq.s32.totalorder %s28, 3
      %p149 = por %p147, %p148
      %p151 = scmp.ne.s32.totalorder %s136, %s150
      %p152 = scmp.eq.s32.totalorder %s28, 0
      %p153 = por %p151, %p152
      %s155 = sadd.s32 %s154, 1
      %p158 = scmp.eq.s32.totalorder %s22, 3
      %p159 = scmp.ne.s32.totalorder %s154, %s156
      %p160 = scmp.eq.s32.totalorder %s22, 0
      %p161 = por %p159, %p160
      %p162 = scmp.ne.s32.totalorder %s154, %s156
      %p163 = scmp.eq.s32.totalorder %s27, 3
      %p164 = por %p162, %p163
      %p165 = scmp.ne.s32.totalorder %s156, %s157
      %p166 = scmp.eq.s32.totalorder %s27, 0
      %p167 = por %p165, %p166
      %p168 = scmp.ne.s32.totalorder %s156, %s157
      %p169 = scmp.eq.s32.totalorder %s28, 3
      %p170 = por %p168, %p169
      %p172 = scmp.ne.s32.totalorder %s157, %s171
      %p173 = scmp.eq.s32.totalorder %s28, 0
      %p174 = por %p172, %p173
      %s176 = sadd.s32 %s175, 1
      %p179 = scmp.eq.s32.totalorder %s22, 3
      %p180 = scmp.ne.s32.totalorder %s175, %s177
      %p181 = scmp.eq.s32.totalorder %s22, 0
      %p182 = por %p180, %p181
      %p183 = scmp.ne.s32.totalorder %s175, %s177
      %p184 = scmp.eq.s32.totalorder %s27, 3
      %p185 = por %p183, %p184
      %p186 = scmp.ne.s32.totalorder %s177, %s178
      %p187 = scmp.eq.s32.totalorder %s27, 0
      %p188 = por %p186, %p187
      %p189 = scmp.ne.s32.totalorder %s177, %s178
      %p190 = scmp.eq.s32.totalorder %s28, 3
      %p191 = por %p189, %p190
      %p193 = scmp.ne.s32.totalorder %s178, %s192
      %p194 = scmp.eq.s32.totalorder %s28, 0
      %p195 = por %p193, %p194
      %s196 = ssub.s32 %s29, %s41
      %s197 = ssub.s32 %s30, %s37
      %s198 = sor.u32 %s196, %s197
      %p199 = scmp.eq.s32.totalorder %s198, 0
      %s201 = sadd.s32 %s200, 1
      %s202 = scalar_select %p199, %s200, %s201
      %p205 = pneg %p199
      %p206 = scmp.eq.s32.totalorder %s22, 3
      %p207 = por %p205, %p206
      %p208 = scmp.ne.s32.totalorder %s200, %s203
      %p209 = scmp.eq.s32.totalorder %s22, 0
      %p210 = por %p208, %p209
      %p211 = scmp.ne.s32.totalorder %s200, %s203
      %p212 = scmp.eq.s32.totalorder %s27, 3
      %p213 = por %p211, %p212
      %p214 = scmp.ne.s32.totalorder %s203, %s204
      %p215 = scmp.eq.s32.totalorder %s27, 0
      %p216 = por %p214, %p215
      %p217 = scmp.ne.s32.totalorder %s203, %s204
      %p218 = scmp.eq.s32.totalorder %s28, 3
      %p219 = por %p217, %p218
      %p221 = scmp.ne.s32.totalorder %s204, %s220
      %p222 = scmp.eq.s32.totalorder %s28, 0
      %p223 = por %p221, %p222
      %p224 = scmp.le.s32.totalorder 1, %s22
      %p225 = scmp.lt.s32.totalorder %s22, 5
      %p226 = pnand %p224, %p225
      %p227 = pneg %p226
      // Predicated region
      $region9: #{tpu_custom_call.1} parent=5 // pred_check
        _
      $region10: #{tpu_custom_call.1} parent=5 // pred_check_branch
        %229 = sbr.rel (%p226) target = $region12
      $region11: #{tpu_custom_call.1} parent=5 // pred_region
        %s230 = ssub.s32 %s22, 1
        // Predicated region
        $region13: #{tpu_custom_call.1} parent=11 // pred_check
          %p231 = pneg %p83
        $region14: #{tpu_custom_call.1} parent=11 // pred_check_branch
          %233 = sbr.rel (%p231) target = $region16
        $region15: #{tpu_custom_call.1} parent=11 // pred_region
          %s235 = ssub.s32 1024, 1024
          %236 = vsyncadd [#allocation9], %s235
          %s237 = sshll.u32 [#allocation8], 4
          %s238 = int_to_ptr.vmem [resolvable:$true] %s237
          %243 = dma.hbm_to_vmem [thread:$0]  %s2, 1024, %s238, [#allocation9], 64, 64, 4
        $region16: #{tpu_custom_call.1} parent=11 // pred_fallthru
          _
        // Predicated region
        $region17: #{tpu_custom_call.1} parent=11 // pred_check
          %p244 = pneg %p104
        $region18: #{tpu_custom_call.1} parent=11 // pred_check_branch
          %246 = sbr.rel (%p244) target = $region20
        $region19: #{tpu_custom_call.1} parent=11 // pred_region
          _
        $region20: #{tpu_custom_call.1} parent=11 // pred_fallthru
          _
        // Predicated region
        $region21: #{tpu_custom_call.1} parent=11 // pred_check
          %p247 = pneg %p125
        $region22: #{tpu_custom_call.1} parent=11 // pred_check_branch
          %249 = sbr.rel (%p247) target = $region24
        $region23: #{tpu_custom_call.1} parent=11 // pred_region
          %s251 = ssub.s32 9216, 9216
          %252 = vsyncadd [#allocation9], %s251
          %s253 = sshll.u32 [#allocation10], 4
          %s254 = int_to_ptr.vmem [resolvable:$true] %s253
          %259 = dma.hbm_to_vmem [thread:$0]  %s4, 9216, %s254, [#allocation9], 64, 64, 4
        $region24: #{tpu_custom_call.1} parent=11 // pred_fallthru
          _
        // Predicated region
        $region25: #{tpu_custom_call.1} parent=11 // pred_check
          %p260 = pneg %p146
        $region26: #{tpu_custom_call.1} parent=11 // pred_check_branch
          %262 = sbr.rel (%p260) target = $region28
        $region27: #{tpu_custom_call.1} parent=11 // pred_region
          _
        $region28: #{tpu_custom_call.1} parent=11 // pred_fallthru
          _
        // Predicated region
        $region29: #{tpu_custom_call.1} parent=11 // pred_check
          %p263 = pneg %p167
        $region30: #{tpu_custom_call.1} parent=11 // pred_check_branch
          %265 = sbr.rel (%p263) target = $region32
        $region31: #{tpu_custom_call.1} parent=11 // pred_region
          %s267 = ssub.s32 1024, 1024
          %268 = vsyncadd [#allocation12], %s267
          %s269 = sshll.u32 [#allocation11], 4
          %s270 = int_to_ptr.vmem [resolvable:$true] %s269
          %275 = dma.hbm_to_vmem [thread:$0]  %s6, 1024, %s270, [#allocation12], 64, 64, 4
        $region32: #{tpu_custom_call.1} parent=11 // pred_fallthru
          _
        // Predicated region
        $region33: #{tpu_custom_call.1} parent=11 // pred_check
          %p276 = pneg %p188
        $region34: #{tpu_custom_call.1} parent=11 // pred_check_branch
          %278 = sbr.rel (%p276) target = $region36
        $region35: #{tpu_custom_call.1} parent=11 // pred_region
          _
        $region36: #{tpu_custom_call.1} parent=11 // pred_fallthru
          _
      $region12: #{tpu_custom_call.1} parent=5 // pred_fallthru
        _
      %p279 = scmp.lt.s32.totalorder %s22, 4
      // Predicated region
      $region37: #{tpu_custom_call.1} parent=5 // pred_check
        %p280 = pneg %p279
      $region38: #{tpu_custom_call.1} parent=5 // pred_check_branch
        %282 = sbr.rel (%p280) target = $region40
      $region39: #{tpu_custom_call.1} parent=5 // pred_region
        // Predicated region
        $region41: #{tpu_custom_call.1} parent=39 // pred_check
          %p283 = pneg %p56
        $region42: #{tpu_custom_call.1} parent=39 // pred_check_branch
          %285 = sbr.rel (%p283) target = $region44
        $region43: #{tpu_custom_call.1} parent=39 // pred_region
          %s286 = sand.u32 %s46, 1
          %s287 = scalar_lea.sflag [#allocation6], %s286
          %s288 = sand.u32 %s46, 1
          %s289 = smul.addr %s288, 64
          %s290 = scalar_lea.vmem [#allocation5], %s289
          %s291 = smul.u32 8, %s30
          %s293 = ssub.s32 1024, 1024
          %294 = vsyncadd %s287, %s293
          %s295 = smul.addr %s291, 2
          %s296 = smul.addr %s29, 32
          %s297 = sadd.s32 %s295, %s296
          %s298 = smul.addr %s297, 64
          %s299 = scalar_lea.hbm %s0, %s298
          %s300 = sshll.u32 %s290, 4
          %s301 = int_to_ptr.vmem [resolvable:$true] %s300
          %306 = dma.hbm_to_vmem [thread:$0]  %s299, 1024, %s301, %s287, 64, 64, 4
        $region44: #{tpu_custom_call.1} parent=39 // pred_fallthru
          _
      $region40: #{tpu_custom_call.1} parent=5 // pred_fallthru
        _
      %p307 = scmp.le.s32.totalorder 1, %s22
      %p308 = scmp.lt.s32.totalorder %s22, 5
      %p309 = pnand %p307, %p308
      %p310 = pneg %p309
      // Predicated region
      $region45: #{tpu_custom_call.1} parent=5 // pred_check
        _
      $region46: #{tpu_custom_call.1} parent=5 // pred_check_branch
        %312 = sbr.rel (%p309) target = $region48
      $region47: #{tpu_custom_call.1} parent=5 // pred_region
        %s313 = ssub.s32 %s22, 1
        %s314 = sand.u32 %s49, 1
        %s315 = scalar_lea.sflag [#allocation6], %s314
        %s316 = sand.u32 %s49, 1
        %s317 = smul.addr %s316, 64
        %s318 = scalar_lea.vmem [#allocation5], %s317
        // Predicated region
        $region49: #{tpu_custom_call.1} parent=47 // pred_check
          %p319 = pneg %p62
        $region50: #{tpu_custom_call.1} parent=47 // pred_check_branch
          %321 = sbr.rel (%p319) target = $region52
        $region51: #{tpu_custom_call.1} parent=47 // pred_region
          %322 = dma.done %s315, 1024
        $region52: #{tpu_custom_call.1} parent=47 // pred_fallthru
          _
        // Predicated region
        $region53: #{tpu_custom_call.1} parent=47 // pred_check
          %p323 = pneg %p83
        $region54: #{tpu_custom_call.1} parent=47 // pred_check_branch
          %325 = sbr.rel (%p323) target = $region56
        $region55: #{tpu_custom_call.1} parent=47 // pred_region
          %326 = dma.done [#allocation9], 1024
        $region56: #{tpu_custom_call.1} parent=47 // pred_fallthru
          _
        // Predicated region
        $region57: #{tpu_custom_call.1} parent=47 // pred_check
          %p327 = pneg %p125
        $region58: #{tpu_custom_call.1} parent=47 // pred_check_branch
          %329 = sbr.rel (%p327) target = $region60
        $region59: #{tpu_custom_call.1} parent=47 // pred_region
          %330 = dma.done [#allocation9], 9216
        $region60: #{tpu_custom_call.1} parent=47 // pred_fallthru
          _
        // Predicated region
        $region61: #{tpu_custom_call.1} parent=47 // pred_check
          %p331 = pneg %p167
        $region62: #{tpu_custom_call.1} parent=47 // pred_check_branch
          %333 = sbr.rel (%p331) target = $region64
        $region63: #{tpu_custom_call.1} parent=47 // pred_region
          %334 = dma.done [#allocation12], 1024
        $region64: #{tpu_custom_call.1} parent=47 // pred_fallthru
          _
        %s335 = sand.u32 %s49, 1
        %s336 = scalar_lea.sflag [#allocation6], %s335
        %s337 = sand.u32 %s49, 1
        %s338 = smul.addr %s337, 64
        %s339 = scalar_lea.vmem [#allocation5], %s338
        %p340 = pneg %p62
        %p341 = pneg %p59
        %p342 = pneg %p83
        %p343 = pneg %p80
        %p344 = pneg %p104
        %p345 = pneg %p101
        %p346 = pneg %p125
        %p347 = pneg %p122
        %p348 = pneg %p146
        %p349 = pneg %p143
        %p350 = pneg %p167
        %p351 = pneg %p164
        %p352 = pneg %p188
        %p353 = pneg %p185
        %p354 = pneg %p216
        %p355 = pneg %p213
        %s356 = sand.u32 %s203, 1
        %s357 = scalar_lea.sflag [#allocation7], %s356
        %s358 = sand.u32 %s203, 1
        %s359 = smul.addr %s358, 64
        %s360 = scalar_lea.vmem [#allocation13], %s359
        %s361 = smul.u32 8, %s32
        %s362 = smul.u32 8, %s32
        %s364 = smul.u32 %s32, 8
        %s365 = ssub.s32 %s364, 1
        %s366 = sadd.s32 %s364, 8
        %p367 = scmp.gt.s32.totalorder %s32, 0
        // Predicated region
        $region65: #{tpu_custom_call.1} parent=47 // pred_check
          %p368 = pneg %p367
        $region66: #{tpu_custom_call.1} parent=47 // pred_check_branch
          %370 = sbr.rel (%p368) target = $region68
        $region67: #{tpu_custom_call.1} parent=47 // pred_region
          %s371 = smul.u32 %s365, 2
          %s372 = smul.u32 %s31, 32
          %s373 = sadd.s32 %s371, %s372
          %s374 = smul.addr %s373, 64
          %s375 = scalar_lea.hbm %s1, %s374
          // Predicated region
          $region69: #{tpu_custom_call.1} parent=67 // pred_check
            _
          $region70: #{tpu_custom_call.1} parent=67 // pred_check_branch
            %377 = sbr.rel target = $region72
          $region71: #{tpu_custom_call.1} parent=67 // pred_region
            %378 = sst [smem:[#allocation16]] [#allocation15]
            %379 = sst [smem:[#allocation17]] [#allocation14]
          $region72: #{tpu_custom_call.1} parent=67 // pred_fallthru
            _
          %381 = shalt.err (0)
          %s383 = sshll.u32 [#allocation2], 4
          %s384 = int_to_ptr.vmem [resolvable:$true] %s383
          %386 = dma.hbm_to_vmem [thread:$0]  %s375, 128, %s384, [#allocation3]
        $region68: #{tpu_custom_call.1} parent=47 // pred_fallthru
          _
        %p387 = scmp.lt.s32.totalorder %s32, 1
        // Predicated region
        $region73: #{tpu_custom_call.1} parent=47 // pred_check
          %p388 = pneg %p387
        $region74: #{tpu_custom_call.1} parent=47 // pred_check_branch
          %390 = sbr.rel (%p388) target = $region76
        $region75: #{tpu_custom_call.1} parent=47 // pred_region
          %s391 = smul.u32 %s366, 2
          %s392 = smul.u32 %s31, 32
          %s393 = sadd.s32 %s391, %s392
          %s394 = smul.addr %s393, 64
          %s395 = scalar_lea.hbm %s1, %s394
          %s396 = scalar_lea.vmem [#allocation2], 8
          %s397 = scalar_lea.sflag [#allocation3], 1
          // Predicated region
          $region77: #{tpu_custom_call.1} parent=75 // pred_check
            _
          $region78: #{tpu_custom_call.1} parent=75 // pred_check_branch
            %399 = sbr.rel target = $region80
          $region79: #{tpu_custom_call.1} parent=75 // pred_region
            %400 = sst [smem:[#allocation16]] [#allocation19]
            %401 = sst [smem:[#allocation17]] [#allocation18]
          $region80: #{tpu_custom_call.1} parent=75 // pred_fallthru
            _
          %403 = shalt.err (0)
          %s405 = sshll.u32 %s396, 4
          %s406 = int_to_ptr.vmem [resolvable:$true] %s405
          %408 = dma.hbm_to_vmem [thread:$0]  %s395, 128, %s406, %s397
        $region76: #{tpu_custom_call.1} parent=47 // pred_fallthru
          _
        %v409 = vld [vmem:[%s318] sm:$0xf]
        %v410 = vld [vmem:[%s318 + $0x4] sm:$0xf]
        %v411 = vld [vmem:[%s318 + $0x8] sm:$0xf]
        %v412 = vld [vmem:[%s318 + $0xc] sm:$0xf]
        %v413 = vld [vmem:[%s318 + $0x10] sm:$0xf]
        %v414 = vld [vmem:[%s318 + $0x14] sm:$0xf]
        %v415 = vld [vmem:[%s318 + $0x18] sm:$0xf]
        %v416 = vld [vmem:[%s318 + $0x1c] sm:$0xf]
        %v417 = vld [vmem:[%s318 + $0x20] sm:$0xf]
        %v418 = vld [vmem:[%s318 + $0x24] sm:$0xf]
        %v419 = vld [vmem:[%s318 + $0x28] sm:$0xf]
        %v420 = vld [vmem:[%s318 + $0x2c] sm:$0xf]
        %v421 = vld [vmem:[%s318 + $0x30] sm:$0xf]
        %v422 = vld [vmem:[%s318 + $0x34] sm:$0xf]
        %v423 = vld [vmem:[%s318 + $0x38] sm:$0xf]
        %v424 = vld [vmem:[%s318 + $0x3c] sm:$0xf]
        %v425 = vld [vmem:[#allocation8] sm:$0xf]
        %v426 = vld [vmem:[#allocation8 + $0x4] sm:$0xf]
        %v427 = vld [vmem:[#allocation8 + $0x8] sm:$0xf]
        %v428 = vld [vmem:[#allocation8 + $0xc] sm:$0xf]
        %v429 = vld [vmem:[#allocation8 + $0x10] sm:$0xf]
        %v430 = vld [vmem:[#allocation8 + $0x14] sm:$0xf]
        %v431 = vld [vmem:[#allocation8 + $0x18] sm:$0xf]
        %v432 = vld [vmem:[#allocation8 + $0x1c] sm:$0xf]
        %v433 = vld [vmem:[#allocation8 + $0x20] sm:$0xf]
        %v434 = vld [vmem:[#allocation8 + $0x24] sm:$0xf]
        %v435 = vld [vmem:[#allocation8 + $0x28] sm:$0xf]
        %v436 = vld [vmem:[#allocation8 + $0x2c] sm:$0xf]
        %v437 = vld [vmem:[#allocation8 + $0x30] sm:$0xf]
        %v438 = vld [vmem:[#allocation8 + $0x34] sm:$0xf]
        %v439 = vld [vmem:[#allocation8 + $0x38] sm:$0xf]
        %v440 = vld [vmem:[#allocation8 + $0x3c] sm:$0xf]
        %v441 = vld [vmem:[%s3] sm:$0x1]
        %v443 = vlaneseq
        %v444 = vshrl.u32 %v443, 7
        %v445 = vsub.s32 0, %v444
        %v446 = vrot.slane %v441, %v445
        %v464 = vunpack.c.l.b16 %v409
        %v465 = vunpack.c.l.b16 %v410
        %v466 = vunpack.c.l.b16 %v411
        %v467 = vunpack.c.l.b16 %v412
        %v468 = vunpack.c.l.b16 %v413
        %v469 = vunpack.c.l.b16 %v414
        %v470 = vunpack.c.l.b16 %v415
        %v471 = vunpack.c.l.b16 %v416
        %v472 = vunpack.c.l.b16 %v417
        %v473 = vunpack.c.l.b16 %v418
        %v474 = vunpack.c.l.b16 %v419
        %v475 = vunpack.c.l.b16 %v420
        %v476 = vunpack.c.l.b16 %v421
        %v477 = vunpack.c.l.b16 %v422
        %v478 = vunpack.c.l.b16 %v423
        %v479 = vunpack.c.l.b16 %v424
        %v480 = vpack.c.b16 %v465, %v464
        %v481 = vpack.c.b16 %v467, %v466
        %v482 = vpack.c.b16 %v469, %v468
        %v483 = vpack.c.b16 %v471, %v470
        %v484 = vpack.c.b16 %v473, %v472
        %v485 = vpack.c.b16 %v475, %v474
        %v486 = vpack.c.b16 %v477, %v476
        %v487 = vpack.c.b16 %v479, %v478
        %v512 = vunpack.c.l.b16 %v425
        %v513 = vunpack.c.l.b16 %v426
        %v514 = vunpack.c.l.b16 %v427
        %v515 = vunpack.c.l.b16 %v428
        %v516 = vunpack.c.l.b16 %v429
        %v517 = vunpack.c.l.b16 %v430
        %v518 = vunpack.c.l.b16 %v431
        %v519 = vunpack.c.l.b16 %v432
        %v520 = vunpack.c.l.b16 %v433
        %v521 = vunpack.c.l.b16 %v434
        %v522 = vunpack.c.l.b16 %v435
        %v523 = vunpack.c.l.b16 %v436
        %v524 = vunpack.c.l.b16 %v437
        %v525 = vunpack.c.l.b16 %v438
        %v526 = vunpack.c.l.b16 %v439
        %v527 = vunpack.c.l.b16 %v440
        %v528 = vpack.c.b16 %v513, %v512
        %v529 = vpack.c.b16 %v515, %v514
        %v530 = vpack.c.b16 %v517, %v516
        %v531 = vpack.c.b16 %v519, %v518
        %v532 = vpack.c.b16 %v521, %v520
        %v533 = vpack.c.b16 %v523, %v522
        %v534 = vpack.c.b16 %v525, %v524
        %v535 = vpack.c.b16 %v527, %v526
        %544 = vmatprep.subr.bf16.mxu0 0
        %545 = vmatpush1.bf16.msra.mxu0 %v528
        %546 = vmatprep.subr.bf16.mxu0 0
        %547 = vmatpush1.bf16.msra.mxu0 %v529
        %548 = vmatprep.subr.bf16.mxu0 0
        %549 = vmatpush1.bf16.msra.mxu0 %v530
        %550 = vmatprep.subr.bf16.mxu0 0
        %551 = vmatpush1.bf16.msra.mxu0 %v531
        %552 = vmatprep.subr.bf16.mxu0 0
        %553 = vmatpush1.bf16.msra.mxu0 %v532
        %554 = vmatprep.subr.bf16.mxu0 0
        %555 = vmatpush1.bf16.msra.mxu0 %v533
        %556 = vmatprep.subr.bf16.mxu0 0
        %557 = vmatpush1.bf16.msra.mxu0 %v534
        %558 = vmatprep.subr.bf16.mxu0 0
        %559 = vmatpush1.bf16.msra.mxu0 %v535
        %560 = vmatprep.subr.bf16.mxu0 0
        %561 = vmatpush1.bf16.msra.mxu0 0
        %562 = vmatprep.subr.bf16.mxu0 0
        %563 = vmatpush1.bf16.msra.mxu0 0
        %564 = vmatprep.subr.bf16.mxu0 0
        %565 = vmatpush1.bf16.msra.mxu0 0
        %566 = vmatprep.subr.bf16.mxu0 0
        %567 = vmatpush1.bf16.msra.mxu0 0
        %568 = vmatprep.subr.bf16.mxu0 0
        %569 = vmatpush1.bf16.msra.mxu0 0
        %570 = vmatprep.subr.bf16.mxu0 0
        %571 = vmatpush1.bf16.msra.mxu0 0
        %572 = vmatprep.subr.bf16.mxu0 0
        %573 = vmatpush1.bf16.msra.mxu0 0
        %574 = vmatprep.subr.bf16.mxu0 0
        %575 = vmatpush1.bf16.msra.mxu0 0
        %576 = vmatprep.mubr.bf16.mxu0 0
        %577 = vmatmul.mubr.bf16.gmra.mrb[0].mxu0 %v480
        %v578 = vpop.f32.mrb[0].mxu0
        %v579 = vadd.f32 %v446, %v578
        %v580 = vpop.f32.mrb[0].mxu0
        %v581 = vpop.f32.mrb[0].mxu0
        %v582 = vadd.f32 %v446, %v581
        %v583 = vpop.f32.mrb[0].mxu0
        %584 = vmatprep.mubr.bf16.mxu0 0
        %585 = vmatmul.mubr.bf16.gmra.mrb[0].mxu0 %v481
        %v586 = vpop.f32.mrb[0].mxu0
        %v587 = vadd.f32 %v446, %v586
        %v588 = vpop.f32.mrb[0].mxu0
        %v589 = vpop.f32.mrb[0].mxu0
        %v590 = vadd.f32 %v446, %v589
        %v591 = vpop.f32.mrb[0].mxu0
        %592 = vmatprep.mubr.bf16.mxu0 0
        %593 = vmatmul.mubr.bf16.gmra.mrb[0].mxu0 %v482
        %v594 = vpop.f32.mrb[0].mxu0
        %v595 = vadd.f32 %v446, %v594
        %v596 = vpop.f32.mrb[0].mxu0
        %v597 = vpop.f32.mrb[0].mxu0
        %v598 = vadd.f32 %v446, %v597
        %v599 = vpop.f32.mrb[0].mxu0
        %600 = vmatprep.mubr.bf16.mxu0 0
        %601 = vmatmul.mubr.bf16.gmra.mrb[0].mxu0 %v483
        %v602 = vpop.f32.mrb[0].mxu0
        %v603 = vadd.f32 %v446, %v602
        %v604 = vpop.f32.mrb[0].mxu0
        %v605 = vpop.f32.mrb[0].mxu0
        %v606 = vadd.f32 %v446, %v605
        %v607 = vpop.f32.mrb[0].mxu0
        %608 = vmatprep.mubr.bf16.mxu0 0
        %609 = vmatmul.mubr.bf16.gmra.mrb[0].mxu0 %v484
        %v610 = vpop.f32.mrb[0].mxu0
        %v611 = vadd.f32 %v446, %v610
        %v612 = vpop.f32.mrb[0].mxu0
        %v613 = vpop.f32.mrb[0].mxu0
        %v614 = vadd.f32 %v446, %v613
        %v615 = vpop.f32.mrb[0].mxu0
        %616 = vmatprep.mubr.bf16.mxu0 0
        %617 = vmatmul.mubr.bf16.gmra.mrb[0].mxu0 %v485
        %v618 = vpop.f32.mrb[0].mxu0
        %v619 = vadd.f32 %v446, %v618
        %v620 = vpop.f32.mrb[0].mxu0
        %v621 = vpop.f32.mrb[0].mxu0
        %v622 = vadd.f32 %v446, %v621
        %v623 = vpop.f32.mrb[0].mxu0
        %624 = vmatprep.mubr.bf16.mxu0 0
        %625 = vmatmul.mubr.bf16.gmra.mrb[0].mxu0 %v486
        %v626 = vpop.f32.mrb[0].mxu0
        %v627 = vadd.f32 %v446, %v626
        %v628 = vpop.f32.mrb[0].mxu0
        %v629 = vpop.f32.mrb[0].mxu0
        %v630 = vadd.f32 %v446, %v629
        %v631 = vpop.f32.mrb[0].mxu0
        %632 = vmatprep.mubr.bf16.mxu0 0
        %633 = vmatmul.mubr.bf16.gmra.mrb[0].mxu0 %v487
        %v634 = vpop.f32.mrb[0].mxu0
        %v635 = vadd.f32 %v446, %v634
        %v636 = vpop.f32.mrb[0].mxu0
        %v637 = vpop.f32.mrb[0].mxu0
        %v638 = vadd.f32 %v446, %v637
        %v639 = vpop.f32.mrb[0].mxu0
        %640 = vdwg.mxu0
        %v641 = vmax.f32 %v579, 0.0
        %v642 = vmax.f32 %v582, 0.0
        %v643 = vmax.f32 %v587, 0.0
        %v644 = vmax.f32 %v590, 0.0
        %v645 = vmax.f32 %v595, 0.0
        %v646 = vmax.f32 %v598, 0.0
        %v647 = vmax.f32 %v603, 0.0
        %v648 = vmax.f32 %v606, 0.0
        %v649 = vmax.f32 %v611, 0.0
        %v650 = vmax.f32 %v614, 0.0
        %v651 = vmax.f32 %v619, 0.0
        %v652 = vmax.f32 %v622, 0.0
        %v653 = vmax.f32 %v627, 0.0
        %v654 = vmax.f32 %v630, 0.0
        %v655 = vmax.f32 %v635, 0.0
        %v656 = vmax.f32 %v638, 0.0
        %v657 = vlaneseq
        %v658 = vshrl.u32 %v657, 7
        %v659 = vadd.s32 %v658, 8
        %vm660 = vcmp.eq.s32.totalorder %v658, 0
        %vm661 = vcmp.eq.s32.totalorder %v659, 0
        %v662 = vrot.slane %v641, 7
        %v663 = vrot.slane %v642, 7
        %v664 = vrot.slane %v643, 7
        %v665 = vrot.slane %v644, 7
        %v666 = vrot.slane %v645, 7
        %v667 = vrot.slane %v646, 7
        %v668 = vrot.slane %v647, 7
        %v669 = vrot.slane %v648, 7
        %v670 = vrot.slane %v649, 7
        %v671 = vrot.slane %v650, 7
        %v672 = vrot.slane %v651, 7
        %v673 = vrot.slane %v652, 7
        %v674 = vrot.slane %v653, 7
        %v675 = vrot.slane %v654, 7
        %v676 = vrot.slane %v655, 7
        %v677 = vrot.slane %v656, 7
        %vm678 = vcmp.lt.s32.totalorder %v658, 1
        %v679 = vsel %vm678, %v676, %v677
        %v680 = vsel %vm678, %v675, %v676
        %v681 = vsel %vm678, %v674, %v675
        %v682 = vsel %vm678, %v673, %v674
        %v683 = vsel %vm678, %v672, %v673
        %v684 = vsel %vm678, %v671, %v672
        %v685 = vsel %vm678, %v670, %v671
        %v686 = vsel %vm678, %v669, %v670
        %v687 = vsel %vm678, %v668, %v669
        %v688 = vsel %vm678, %v667, %v668
        %v689 = vsel %vm678, %v666, %v667
        %v690 = vsel %vm678, %v665, %v666
        %v691 = vsel %vm678, %v664, %v665
        %v692 = vsel %vm678, %v663, %v664
        %v693 = vsel %vm678, %v662, %v663
        %v694 = vsel %vm678, %v677, %v662
        %v695 = vsel %vm660, 0.0, %v694
        %v696 = vsel %vm661, 0.0, %v693
        %v697 = vsel %vm660, 0.0, %v692
        %v698 = vsel %vm661, 0.0, %v691
        %v699 = vsel %vm660, 0.0, %v690
        %v700 = vsel %vm661, 0.0, %v689
        %v701 = vsel %vm660, 0.0, %v688
        %v702 = vsel %vm661, 0.0, %v687
        %v703 = vsel %vm660, 0.0, %v686
        %v704 = vsel %vm661, 0.0, %v685
        %v705 = vsel %vm660, 0.0, %v684
        %v706 = vsel %vm661, 0.0, %v683
        %v707 = vsel %vm660, 0.0, %v682
        %v708 = vsel %vm661, 0.0, %v681
        %v709 = vsel %vm660, 0.0, %v680
        %v710 = vsel %vm661, 0.0, %v679
        %vm711 = vcmp.eq.s32.totalorder %v658, 15
        %vm712 = vcmp.eq.s32.totalorder %v659, 15
        %v713 = vrot.slane %v641, 1
        %v714 = vrot.slane %v642, 1
        %v715 = vrot.slane %v643, 1
        %v716 = vrot.slane %v644, 1
        %v717 = vrot.slane %v645, 1
        %v718 = vrot.slane %v646, 1
        %v719 = vrot.slane %v647, 1
        %v720 = vrot.slane %v648, 1
        %v721 = vrot.slane %v649, 1
        %v722 = vrot.slane %v650, 1
        %v723 = vrot.slane %v651, 1
        %v724 = vrot.slane %v652, 1
        %v725 = vrot.slane %v653, 1
        %v726 = vrot.slane %v654, 1
        %v727 = vrot.slane %v655, 1
        %v728 = vrot.slane %v656, 1
        %vm729 = vcmp.lt.s32.totalorder %v658, 7
        %v730 = vsel %vm729, %v727, %v728
        %v731 = vsel %vm729, %v726, %v727
        %v732 = vsel %vm729, %v725, %v726
        %v733 = vsel %vm729, %v724, %v725
        %v734 = vsel %vm729, %v723, %v724
        %v735 = vsel %vm729, %v722, %v723
        %v736 = vsel %vm729, %v721, %v722
        %v737 = vsel %vm729, %v720, %v721
        %v738 = vsel %vm729, %v719, %v720
        %v739 = vsel %vm729, %v718, %v719
        %v740 = vsel %vm729, %v717, %v718
        %v741 = vsel %vm729, %v716, %v717
        %v742 = vsel %vm729, %v715, %v716
        %v743 = vsel %vm729, %v714, %v715
        %v744 = vsel %vm729, %v713, %v714
        %v745 = vsel %vm729, %v728, %v713
        %v746 = vsel %vm711, 0.0, %v744
        %v747 = vsel %vm712, 0.0, %v743
        %v748 = vsel %vm711, 0.0, %v742
        %v749 = vsel %vm712, 0.0, %v741
        %v750 = vsel %vm711, 0.0, %v740
        %v751 = vsel %vm712, 0.0, %v739
        %v752 = vsel %vm711, 0.0, %v738
        %v753 = vsel %vm712, 0.0, %v737
        %v754 = vsel %vm711, 0.0, %v736
        %v755 = vsel %vm712, 0.0, %v735
        %v756 = vsel %vm711, 0.0, %v734
        %v757 = vsel %vm712, 0.0, %v733
        %v758 = vsel %vm711, 0.0, %v732
        %v759 = vsel %vm712, 0.0, %v731
        %v760 = vsel %vm711, 0.0, %v730
        %v761 = vsel %vm712, 0.0, %v745
        %v762 = vpack.c.bf16 %v696, %v695
        %v763 = vpack.c.bf16 %v698, %v697
        %v764 = vpack.c.bf16 %v700, %v699
        %v765 = vpack.c.bf16 %v702, %v701
        %v766 = vpack.c.bf16 %v704, %v703
        %v767 = vpack.c.bf16 %v706, %v705
        %v768 = vpack.c.bf16 %v708, %v707
        %v769 = vpack.c.bf16 %v710, %v709
        %s770 = scalar_lea.vmem [#allocation4], 24
        %771 = vst [vmem:[%s770] sm:$0xff] %v762
        %772 = vst [vmem:[%s770 + $0x18] sm:$0xff] %v763
        %773 = vst [vmem:[%s770 + $0x30] sm:$0xff] %v764
        %774 = vst [vmem:[%s770 + $0x48] sm:$0xff] %v765
        %775 = vst [vmem:[%s770 + $0x60] sm:$0xff] %v766
        %776 = vst [vmem:[%s770 + $0x78] sm:$0xff] %v767
        %777 = vst [vmem:[%s770 + $0x90] sm:$0xff] %v768
        %778 = vst [vmem:[%s770 + $0xa8] sm:$0xff] %v769
        %v779 = vpack.c.bf16 %v642, %v641
        %v780 = vpack.c.bf16 %v644, %v643
        %v781 = vpack.c.bf16 %v646, %v645
        %v782 = vpack.c.bf16 %v648, %v647
        %v783 = vpack.c.bf16 %v650, %v649
        %v784 = vpack.c.bf16 %v652, %v651
        %v785 = vpack.c.bf16 %v654, %v653
        %v786 = vpack.c.bf16 %v656, %v655
        %787 = vst [vmem:[%s770 + $0x8] sm:$0xff] %v779
        %788 = vst [vmem:[%s770 + $0x20] sm:$0xff] %v780
        %789 = vst [vmem:[%s770 + $0x38] sm:$0xff] %v781
        %790 = vst [vmem:[%s770 + $0x50] sm:$0xff] %v782
        %791 = vst [vmem:[%s770 + $0x68] sm:$0xff] %v783
        %792 = vst [vmem:[%s770 + $0x80] sm:$0xff] %v784
        %793 = vst [vmem:[%s770 + $0x98] sm:$0xff] %v785
        %794 = vst [vmem:[%s770 + $0xb0] sm:$0xff] %v786
        %v795 = vpack.c.bf16 %v747, %v746
        %v796 = vpack.c.bf16 %v749, %v748
        %v797 = vpack.c.bf16 %v751, %v750
        %v798 = vpack.c.bf16 %v753, %v752
        %v799 = vpack.c.bf16 %v755, %v754
        %v800 = vpack.c.bf16 %v757, %v756
        %v801 = vpack.c.bf16 %v759, %v758
        %v802 = vpack.c.bf16 %v761, %v760
        %803 = vst [vmem:[%s770 + $0x10] sm:$0xff] %v795
        %804 = vst [vmem:[%s770 + $0x28] sm:$0xff] %v796
        %805 = vst [vmem:[%s770 + $0x40] sm:$0xff] %v797
        %806 = vst [vmem:[%s770 + $0x58] sm:$0xff] %v798
        %807 = vst [vmem:[%s770 + $0x70] sm:$0xff] %v799
        %808 = vst [vmem:[%s770 + $0x88] sm:$0xff] %v800
        %809 = vst [vmem:[%s770 + $0xa0] sm:$0xff] %v801
        %810 = vst [vmem:[%s770 + $0xb8] sm:$0xff] %v802
        %p811 = scmp.eq.s32.totalorder %s32, 0
        // Predicated region
        $region81: #{tpu_custom_call.1} parent=47 // pred_check
          %p812 = pneg %p811
        $region82: #{tpu_custom_call.1} parent=47 // pred_check_branch
          %814 = sbr.rel (%p812) target = $region84
        $region83: #{tpu_custom_call.1} parent=47 // pred_region
          %815 = vst [vmem:[#allocation4] sm:$0xff] 0
          %816 = vst [vmem:[#allocation4 + $0x8] sm:$0xff] 0
          %817 = vst [vmem:[#allocation4 + $0x10] sm:$0xff] 0
        $region84: #{tpu_custom_call.1} parent=47 // pred_fallthru
          _
        %p818 = scmp.eq.s32.totalorder %s32, 1
        // Predicated region
        $region85: #{tpu_custom_call.1} parent=47 // pred_check
          %p819 = pneg %p818
        $region86: #{tpu_custom_call.1} parent=47 // pred_check_branch
          %821 = sbr.rel (%p819) target = $region88
        $region87: #{tpu_custom_call.1} parent=47 // pred_region
          %s822 = scalar_lea.vmem [#allocation4], 216
          %823 = vst [vmem:[%s822] sm:$0xff] 0
          %824 = vst [vmem:[%s822 + $0x8] sm:$0xff] 0
          %825 = vst [vmem:[%s822 + $0x10] sm:$0xff] 0
        $region88: #{tpu_custom_call.1} parent=47 // pred_fallthru
          _
        // Predicated region
        $region89: #{tpu_custom_call.1} parent=47 // pred_check
          %p826 = pneg %p367
        $region90: #{tpu_custom_call.1} parent=47 // pred_check_branch
          %828 = sbr.rel (%p826) target = $region92
        $region91: #{tpu_custom_call.1} parent=47 // pred_region
          %s829 = smul.u32 4, 2
          %s830 = smul.u32 %s829, 1
          %s831 = sshll.u32 %s830, 4
          %832 = dma.done [#allocation3], %s831
          %v833 = vld [vmem:[#allocation2] sm:$0xff]
          %v834 = vld [vmem:[#allocation8] sm:$0xf]
          %v835 = vld [vmem:[#allocation8 + $0x4] sm:$0xf]
          %v836 = vld [vmem:[#allocation8 + $0x8] sm:$0xf]
          %v837 = vld [vmem:[#allocation8 + $0xc] sm:$0xf]
          %v838 = vld [vmem:[#allocation8 + $0x10] sm:$0xf]
          %v839 = vld [vmem:[#allocation8 + $0x14] sm:$0xf]
          %v840 = vld [vmem:[#allocation8 + $0x18] sm:$0xf]
          %v841 = vld [vmem:[#allocation8 + $0x1c] sm:$0xf]
          %v842 = vld [vmem:[#allocation8 + $0x20] sm:$0xf]
          %v843 = vld [vmem:[#allocation8 + $0x24] sm:$0xf]
          %v844 = vld [vmem:[#allocation8 + $0x28] sm:$0xf]
          %v845 = vld [vmem:[#allocation8 + $0x2c] sm:$0xf]
          %v846 = vld [vmem:[#allocation8 + $0x30] sm:$0xf]
          %v847 = vld [vmem:[#allocation8 + $0x34] sm:$0xf]
          %v848 = vld [vmem:[#allocation8 + $0x38] sm:$0xf]
          %v849 = vld [vmem:[#allocation8 + $0x3c] sm:$0xf]
          %v850 = vld [vmem:[%s3] sm:$0x1]
          %v852 = vlaneseq
          %v853 = vshrl.u32 %v852, 7
          %v854 = vsub.s32 0, %v853
          %v855 = vrot.slane %v850, %v854
          %v873 = vunpack.c.l.b16 %v834
          %v874 = vunpack.c.l.b16 %v835
          %v875 = vunpack.c.l.b16 %v836
          %v876 = vunpack.c.l.b16 %v837
          %v877 = vunpack.c.l.b16 %v838
          %v878 = vunpack.c.l.b16 %v839
          %v879 = vunpack.c.l.b16 %v840
          %v880 = vunpack.c.l.b16 %v841
          %v881 = vunpack.c.l.b16 %v842
          %v882 = vunpack.c.l.b16 %v843
          %v883 = vunpack.c.l.b16 %v844
          %v884 = vunpack.c.l.b16 %v845
          %v885 = vunpack.c.l.b16 %v846
          %v886 = vunpack.c.l.b16 %v847
          %v887 = vunpack.c.l.b16 %v848
          %v888 = vunpack.c.l.b16 %v849
          %v889 = vpack.c.b16 %v874, %v873
          %v890 = vpack.c.b16 %v876, %v875
          %v891 = vpack.c.b16 %v878, %v877
          %v892 = vpack.c.b16 %v880, %v879
          %v893 = vpack.c.b16 %v882, %v881
          %v894 = vpack.c.b16 %v884, %v883
          %v895 = vpack.c.b16 %v886, %v885
          %v896 = vpack.c.b16 %v888, %v887
          %905 = vmatprep.subr.bf16.mxu0 0
          %906 = vmatpush1.bf16.msra.mxu0 %v889
          %907 = vmatprep.subr.bf16.mxu0 0
          %908 = vmatpush1.bf16.msra.mxu0 %v890
          %909 = vmatprep.subr.bf16.mxu0 0
          %910 = vmatpush1.bf16.msra.mxu0 %v891
          %911 = vmatprep.subr.bf16.mxu0 0
          %912 = vmatpush1.bf16.msra.mxu0 %v892
          %913 = vmatprep.subr.bf16.mxu0 0
          %914 = vmatpush1.bf16.msra.mxu0 %v893
          %915 = vmatprep.subr.bf16.mxu0 0
          %916 = vmatpush1.bf16.msra.mxu0 %v894
          %917 = vmatprep.subr.bf16.mxu0 0
          %918 = vmatpush1.bf16.msra.mxu0 %v895
          %919 = vmatprep.subr.bf16.mxu0 0
          %920 = vmatpush1.bf16.msra.mxu0 %v896
          %921 = vmatprep.subr.bf16.mxu0 0
          %922 = vmatpush1.bf16.msra.mxu0 0
          %923 = vmatprep.subr.bf16.mxu0 0
          %924 = vmatpush1.bf16.msra.mxu0 0
          %925 = vmatprep.subr.bf16.mxu0 0
          %926 = vmatpush1.bf16.msra.mxu0 0
          %927 = vmatprep.subr.bf16.mxu0 0
          %928 = vmatpush1.bf16.msra.mxu0 0
          %929 = vmatprep.subr.bf16.mxu0 0
          %930 = vmatpush1.bf16.msra.mxu0 0
          %931 = vmatprep.subr.bf16.mxu0 0
          %932 = vmatpush1.bf16.msra.mxu0 0
          %933 = vmatprep.subr.bf16.mxu0 0
          %934 = vmatpush1.bf16.msra.mxu0 0
          %935 = vmatprep.subr.bf16.mxu0 0
          %936 = vmatpush1.bf16.msra.mxu0 0
          %937 = vmatprep.mubr.bf16.mxu0 0
          %938 = vmatmul.mubr.bf16.gmra.mrb[0].mxu0 %v833
          %v939 = vpop.f32.mrb[0].mxu0
          %v940 = vadd.f32 %v855, %v939
          %v941 = vpop.f32.mrb[0].mxu0
          %v942 = vpop.f32.mrb[0].mxu0
          %v943 = vadd.f32 %v855, %v942
          %v944 = vpop.f32.mrb[0].mxu0
          %945 = vdwg.mxu0
          %v946 = vmax.f32 %v940, 0.0
          %v947 = vmax.f32 %v943, 0.0
          %v948 = vrot.slane %v946, 7
          %v949 = vrot.slane %v947, 7
          %v950 = vsel %vm678, %v948, %v949
          %v951 = vsel %vm678, %v949, %v948
          %v952 = vsel %vm660, 0.0, %v951
          %v953 = vsel %vm661, 0.0, %v950
          %v954 = vrot.slane %v946, 1
          %v955 = vrot.slane %v947, 1
          %v956 = vsel %vm729, %v954, %v955
          %v957 = vsel %vm729, %v955, %v954
          %v958 = vsel %vm711, 0.0, %v956
          %v959 = vsel %vm712, 0.0, %v957
          %v960 = vpack.c.bf16 %v953, %v952
          %961 = vst [vmem:[#allocation4] sm:$0xff] %v960
          %v962 = vpack.c.bf16 %v947, %v946
          %963 = vst [vmem:[#allocation4 + $0x8] sm:$0xff] %v962
          %v964 = vpack.c.bf16 %v959, %v958
          %965 = vst [vmem:[#allocation4 + $0x10] sm:$0xff] %v964
        $region92: #{tpu_custom_call.1} parent=47 // pred_fallthru
          _
        // Predicated region
        $region93: #{tpu_custom_call.1} parent=47 // pred_check
          %p966 = pneg %p387
        $region94: #{tpu_custom_call.1} parent=47 // pred_check_branch
          %968 = sbr.rel (%p966) target = $region96
        $region95: #{tpu_custom_call.1} parent=47 // pred_region
          %s969 = scalar_lea.vmem [#allocation2], 8
          %s970 = scalar_lea.sflag [#allocation3], 1
          %s971 = smul.u32 4, 2
          %s972 = smul.u32 %s971, 1
          %s973 = sshll.u32 %s972, 4
          %974 = dma.done %s970, %s973
          %v975 = vld [vmem:[%s969] sm:$0xff]
          %v976 = vld [vmem:[#allocation8] sm:$0xf]
          %v977 = vld [vmem:[#allocation8 + $0x4] sm:$0xf]
          %v978 = vld [vmem:[#allocation8 + $0x8] sm:$0xf]
          %v979 = vld [vmem:[#allocation8 + $0xc] sm:$0xf]
          %v980 = vld [vmem:[#allocation8 + $0x10] sm:$0xf]
          %v981 = vld [vmem:[#allocation8 + $0x14] sm:$0xf]
          %v982 = vld [vmem:[#allocation8 + $0x18] sm:$0xf]
          %v983 = vld [vmem:[#allocation8 + $0x1c] sm:$0xf]
          %v984 = vld [vmem:[#allocation8 + $0x20] sm:$0xf]
          %v985 = vld [vmem:[#allocation8 + $0x24] sm:$0xf]
          %v986 = vld [vmem:[#allocation8 + $0x28] sm:$0xf]
          %v987 = vld [vmem:[#allocation8 + $0x2c] sm:$0xf]
          %v988 = vld [vmem:[#allocation8 + $0x30] sm:$0xf]
          %v989 = vld [vmem:[#allocation8 + $0x34] sm:$0xf]
          %v990 = vld [vmem:[#allocation8 + $0x38] sm:$0xf]
          %v991 = vld [vmem:[#allocation8 + $0x3c] sm:$0xf]
          %v992 = vld [vmem:[%s3] sm:$0x1]
          %v994 = vlaneseq
          %v995 = vshrl.u32 %v994, 7
          %v996 = vsub.s32 0, %v995
          %v997 = vrot.slane %v992, %v996
          %v1015 = vunpack.c.l.b16 %v976
          %v1016 = vunpack.c.l.b16 %v977
          %v1017 = vunpack.c.l.b16 %v978
          %v1018 = vunpack.c.l.b16 %v979
          %v1019 = vunpack.c.l.b16 %v980
          %v1020 = vunpack.c.l.b16 %v981
          %v1021 = vunpack.c.l.b16 %v982
          %v1022 = vunpack.c.l.b16 %v983
          %v1023 = vunpack.c.l.b16 %v984
          %v1024 = vunpack.c.l.b16 %v985
          %v1025 = vunpack.c.l.b16 %v986
          %v1026 = vunpack.c.l.b16 %v987
          %v1027 = vunpack.c.l.b16 %v988
          %v1028 = vunpack.c.l.b16 %v989
          %v1029 = vunpack.c.l.b16 %v990
          %v1030 = vunpack.c.l.b16 %v991
          %v1031 = vpack.c.b16 %v1016, %v1015
          %v1032 = vpack.c.b16 %v1018, %v1017
          %v1033 = vpack.c.b16 %v1020, %v1019
          %v1034 = vpack.c.b16 %v1022, %v1021
          %v1035 = vpack.c.b16 %v1024, %v1023
          %v1036 = vpack.c.b16 %v1026, %v1025
          %v1037 = vpack.c.b16 %v1028, %v1027
          %v1038 = vpack.c.b16 %v1030, %v1029
          %1047 = vmatprep.subr.bf16.mxu0 0
          %1048 = vmatpush1.bf16.msra.mxu0 %v1031
          %1049 = vmatprep.subr.bf16.mxu0 0
          %1050 = vmatpush1.bf16.msra.mxu0 %v1032
          %1051 = vmatprep.subr.bf16.mxu0 0
          %1052 = vmatpush1.bf16.msra.mxu0 %v1033
          %1053 = vmatprep.subr.bf16.mxu0 0
          %1054 = vmatpush1.bf16.msra.mxu0 %v1034
          %1055 = vmatprep.subr.bf16.mxu0 0
          %1056 = vmatpush1.bf16.msra.mxu0 %v1035
          %1057 = vmatprep.subr.bf16.mxu0 0
          %1058 = vmatpush1.bf16.msra.mxu0 %v1036
          %1059 = vmatprep.subr.bf16.mxu0 0
          %1060 = vmatpush1.bf16.msra.mxu0 %v1037
          %1061 = vmatprep.subr.bf16.mxu0 0
          %1062 = vmatpush1.bf16.msra.mxu0 %v1038
          %1063 = vmatprep.subr.bf16.mxu0 0
          %1064 = vmatpush1.bf16.msra.mxu0 0
          %1065 = vmatprep.subr.bf16.mxu0 0
          %1066 = vmatpush1.bf16.msra.mxu0 0
          %1067 = vmatprep.subr.bf16.mxu0 0
          %1068 = vmatpush1.bf16.msra.mxu0 0
          %1069 = vmatprep.subr.bf16.mxu0 0
          %1070 = vmatpush1.bf16.msra.mxu0 0
          %1071 = vmatprep.subr.bf16.mxu0 0
          %1072 = vmatpush1.bf16.msra.mxu0 0
          %1073 = vmatprep.subr.bf16.mxu0 0
          %1074 = vmatpush1.bf16.msra.mxu0 0
          %1075 = vmatprep.subr.bf16.mxu0 0
          %1076 = vmatpush1.bf16.msra.mxu0 0
          %1077 = vmatprep.subr.bf16.mxu0 0
          %1078 = vmatpush1.bf16.msra.mxu0 0
          %1079 = vmatprep.mubr.bf16.mxu0 0
          %1080 = vmatmul.mubr.bf16.gmra.mrb[0].mxu0 %v975
          %v1081 = vpop.f32.mrb[0].mxu0
          %v1082 = vadd.f32 %v997, %v1081
          %v1083 = vpop.f32.mrb[0].mxu0
          %v1084 = vpop.f32.mrb[0].mxu0
          %v1085 = vadd.f32 %v997, %v1084
          %v1086 = vpop.f32.mrb[0].mxu0
          %1087 = vdwg.mxu0
          %v1088 = vmax.f32 %v1082, 0.0
          %v1089 = vmax.f32 %v1085, 0.0
          %v1090 = vrot.slane %v1088, 7
          %v1091 = vrot.slane %v1089, 7
          %v1092 = vsel %vm678, %v1090, %v1091
          %v1093 = vsel %vm678, %v1091, %v1090
          %v1094 = vsel %vm660, 0.0, %v1093
          %v1095 = vsel %vm661, 0.0, %v1092
          %v1096 = vrot.slane %v1088, 1
          %v1097 = vrot.slane %v1089, 1
          %v1098 = vsel %vm729, %v1096, %v1097
          %v1099 = vsel %vm729, %v1097, %v1096
          %v1100 = vsel %vm711, 0.0, %v1098
          %v1101 = vsel %vm712, 0.0, %v1099
          %v1102 = vpack.c.bf16 %v1095, %v1094
          %s1103 = scalar_lea.vmem [#allocation4], 216
          %1104 = vst [vmem:[%s1103] sm:$0xff] %v1102
          %v1105 = vpack.c.bf16 %v1089, %v1088
          %1106 = vst [vmem:[%s1103 + $0x8] sm:$0xff] %v1105
          %v1107 = vpack.c.bf16 %v1101, %v1100
          %1108 = vst [vmem:[%s1103 + $0x10] sm:$0xff] %v1107
        $region96: #{tpu_custom_call.1} parent=47 // pred_fallthru
          _
        %v1109 = vld [vmem:[#allocation4] sm:$0xff]
        %v1110 = vld [vmem:[#allocation4 + $0x8] sm:$0xff]
        %v1111 = vld [vmem:[#allocation4 + $0x10] sm:$0xff]
        %v1112 = vld [vmem:[#allocation4 + $0x18] sm:$0xff]
        %v1113 = vld [vmem:[#allocation4 + $0x20] sm:$0xff]
        %v1114 = vld [vmem:[#allocation4 + $0x28] sm:$0xff]
        %v1115 = vld [vmem:[#allocation4 + $0x30] sm:$0xff]
        %v1116 = vld [vmem:[#allocation4 + $0x38] sm:$0xff]
        %v1117 = vld [vmem:[#allocation4 + $0x40] sm:$0xff]
        %v1118 = vld [vmem:[#allocation4 + $0x48] sm:$0xff]
        %v1119 = vld [vmem:[#allocation4 + $0x50] sm:$0xff]
        %v1120 = vld [vmem:[#allocation4 + $0x58] sm:$0xff]
        %v1121 = vld [vmem:[#allocation4 + $0x60] sm:$0xff]
        %v1122 = vld [vmem:[#allocation4 + $0x68] sm:$0xff]
        %v1123 = vld [vmem:[#allocation4 + $0x70] sm:$0xff]
        %v1124 = vld [vmem:[#allocation4 + $0x78] sm:$0xff]
        %v1125 = vld [vmem:[#allocation4 + $0x80] sm:$0xff]
        %v1126 = vld [vmem:[#allocation4 + $0x88] sm:$0xff]
        %v1127 = vld [vmem:[#allocation4 + $0x90] sm:$0xff]
        %v1128 = vld [vmem:[#allocation4 + $0x98] sm:$0xff]
        %v1129 = vld [vmem:[#allocation4 + $0xa0] sm:$0xff]
        %v1130 = vld [vmem:[#allocation4 + $0xa8] sm:$0xff]
        %v1131 = vld [vmem:[#allocation4 + $0xb0] sm:$0xff]
        %v1132 = vld [vmem:[#allocation4 + $0xb8] sm:$0xff]
        %v1133 = vld [vmem:[#allocation10] sm:$0xf]
        %v1134 = vld [vmem:[#allocation10 + $0x4] sm:$0xf]
        %v1135 = vld [vmem:[#allocation10 + $0x8] sm:$0xf]
        %v1136 = vld [vmem:[#allocation10 + $0xc] sm:$0xf]
        %v1137 = vld [vmem:[#allocation10 + $0x10] sm:$0xf]
        %v1138 = vld [vmem:[#allocation10 + $0x14] sm:$0xf]
        %v1139 = vld [vmem:[#allocation10 + $0x18] sm:$0xf]
        %v1140 = vld [vmem:[#allocation10 + $0x1c] sm:$0xf]
        %v1141 = vld [vmem:[#allocation10 + $0x20] sm:$0xf]
        %v1142 = vld [vmem:[#allocation10 + $0x24] sm:$0xf]
        %v1143 = vld [vmem:[#allocation10 + $0x28] sm:$0xf]
        %v1144 = vld [vmem:[#allocation10 + $0x2c] sm:$0xf]
        %v1145 = vld [vmem:[#allocation10 + $0x30] sm:$0xf]
        %v1146 = vld [vmem:[#allocation10 + $0x34] sm:$0xf]
        %v1147 = vld [vmem:[#allocation10 + $0x38] sm:$0xf]
        %v1148 = vld [vmem:[#allocation10 + $0x3c] sm:$0xf]
        %v1149 = vld [vmem:[#allocation10 + $0x40] sm:$0xf]
        %v1150 = vld [vmem:[#allocation10 + $0x44] sm:$0xf]
        %v1151 = vld [vmem:[#allocation10 + $0x48] sm:$0xf]
        %v1152 = vld [vmem:[#allocation10 + $0x4c] sm:$0xf]
        %v1153 = vld [vmem:[#allocation10 + $0x50] sm:$0xf]
        %v1154 = vld [vmem:[#allocation10 + $0x54] sm:$0xf]
        %v1155 = vld [vmem:[#allocation10 + $0x58] sm:$0xf]
        %v1156 = vld [vmem:[#allocation10 + $0x5c] sm:$0xf]
        %v1157 = vld [vmem:[#allocation10 + $0x60] sm:$0xf]
        %v1158 = vld [vmem:[#allocation10 + $0x64] sm:$0xf]
        %v1159 = vld [vmem:[#allocation10 + $0x68] sm:$0xf]
        %v1160 = vld [vmem:[#allocation10 + $0x6c] sm:$0xf]
        %v1161 = vld [vmem:[#allocation10 + $0x70] sm:$0xf]
        %v1162 = vld [vmem:[#allocation10 + $0x74] sm:$0xf]
        %v1163 = vld [vmem:[#allocation10 + $0x78] sm:$0xf]
        %v1164 = vld [vmem:[#allocation10 + $0x7c] sm:$0xf]
        %v1165 = vld [vmem:[#allocation10 + $0x80] sm:$0xf]
        %v1166 = vld [vmem:[#allocation10 + $0x84] sm:$0xf]
        %v1167 = vld [vmem:[#allocation10 + $0x88] sm:$0xf]
        %v1168 = vld [vmem:[#allocation10 + $0x8c] sm:$0xf]
        %v1169 = vld [vmem:[#allocation10 + $0x90] sm:$0xf]
        %v1170 = vld [vmem:[#allocation10 + $0x94] sm:$0xf]
        %v1171 = vld [vmem:[#allocation10 + $0x98] sm:$0xf]
        %v1172 = vld [vmem:[#allocation10 + $0x9c] sm:$0xf]
        %v1173 = vld [vmem:[#allocation10 + $0xa0] sm:$0xf]
        %v1174 = vld [vmem:[#allocation10 + $0xa4] sm:$0xf]
        %v1175 = vld [vmem:[#allocation10 + $0xa8] sm:$0xf]
        %v1176 = vld [vmem:[#allocation10 + $0xac] sm:$0xf]
        %v1177 = vld [vmem:[#allocation10 + $0xb0] sm:$0xf]
        %v1178 = vld [vmem:[#allocation10 + $0xb4] sm:$0xf]
        %v1179 = vld [vmem:[#allocation10 + $0xb8] sm:$0xf]
        %v1180 = vld [vmem:[#allocation10 + $0xbc] sm:$0xf]
        %v1181 = vld [vmem:[%s770] sm:$0xff]
        %v1182 = vld [vmem:[%s770 + $0x8] sm:$0xff]
        %v1183 = vld [vmem:[%s770 + $0x10] sm:$0xff]
        %v1184 = vld [vmem:[%s770 + $0x18] sm:$0xff]
        %v1185 = vld [vmem:[%s770 + $0x20] sm:$0xff]
        %v1186 = vld [vmem:[%s770 + $0x28] sm:$0xff]
        %v1187 = vld [vmem:[%s770 + $0x30] sm:$0xff]
        %v1188 = vld [vmem:[%s770 + $0x38] sm:$0xff]
        %v1189 = vld [vmem:[%s770 + $0x40] sm:$0xff]
        %v1190 = vld [vmem:[%s770 + $0x48] sm:$0xff]
        %v1191 = vld [vmem:[%s770 + $0x50] sm:$0xff]
        %v1192 = vld [vmem:[%s770 + $0x58] sm:$0xff]
        %v1193 = vld [vmem:[%s770 + $0x60] sm:$0xff]
        %v1194 = vld [vmem:[%s770 + $0x68] sm:$0xff]
        %v1195 = vld [vmem:[%s770 + $0x70] sm:$0xff]
        %v1196 = vld [vmem:[%s770 + $0x78] sm:$0xff]
        %v1197 = vld [vmem:[%s770 + $0x80] sm:$0xff]
        %v1198 = vld [vmem:[%s770 + $0x88] sm:$0xff]
        %v1199 = vld [vmem:[%s770 + $0x90] sm:$0xff]
        %v1200 = vld [vmem:[%s770 + $0x98] sm:$0xff]
        %v1201 = vld [vmem:[%s770 + $0xa0] sm:$0xff]
        %v1202 = vld [vmem:[%s770 + $0xa8] sm:$0xff]
        %v1203 = vld [vmem:[%s770 + $0xb0] sm:$0xff]
        %v1204 = vld [vmem:[%s770 + $0xb8] sm:$0xff]
        %s1205 = scalar_lea.vmem [#allocation10], 192
        %v1206 = vld [vmem:[%s1205] sm:$0xf]
        %v1207 = vld [vmem:[%s1205 + $0x4] sm:$0xf]
        %v1208 = vld [vmem:[%s1205 + $0x8] sm:$0xf]
        %v1209 = vld [vmem:[%s1205 + $0xc] sm:$0xf]
        %v1210 = vld [vmem:[%s1205 + $0x10] sm:$0xf]
        %v1211 = vld [vmem:[%s1205 + $0x14] sm:$0xf]
        %v1212 = vld [vmem:[%s1205 + $0x18] sm:$0xf]
        %v1213 = vld [vmem:[%s1205 + $0x1c] sm:$0xf]
        %v1214 = vld [vmem:[%s1205 + $0x20] sm:$0xf]
        %v1215 = vld [vmem:[%s1205 + $0x24] sm:$0xf]
        %v1216 = vld [vmem:[%s1205 + $0x28] sm:$0xf]
        %v1217 = vld [vmem:[%s1205 + $0x2c] sm:$0xf]
        %v1218 = vld [vmem:[%s1205 + $0x30] sm:$0xf]
        %v1219 = vld [vmem:[%s1205 + $0x34] sm:$0xf]
        %v1220 = vld [vmem:[%s1205 + $0x38] sm:$0xf]
        %v1221 = vld [vmem:[%s1205 + $0x3c] sm:$0xf]
        %v1222 = vld [vmem:[%s1205 + $0x40] sm:$0xf]
        %v1223 = vld [vmem:[%s1205 + $0x44] sm:$0xf]
        %v1224 = vld [vmem:[%s1205 + $0x48] sm:$0xf]
        %v1225 = vld [vmem:[%s1205 + $0x4c] sm:$0xf]
        %v1226 = vld [vmem:[%s1205 + $0x50] sm:$0xf]
        %v1227 = vld [vmem:[%s1205 + $0x54] sm:$0xf]
        %v1228 = vld [vmem:[%s1205 + $0x58] sm:$0xf]
        %v1229 = vld [vmem:[%s1205 + $0x5c] sm:$0xf]
        %v1230 = vld [vmem:[%s1205 + $0x60] sm:$0xf]
        %v1231 = vld [vmem:[%s1205 + $0x64] sm:$0xf]
        %v1232 = vld [vmem:[%s1205 + $0x68] sm:$0xf]
        %v1233 = vld [vmem:[%s1205 + $0x6c] sm:$0xf]
        %v1234 = vld [vmem:[%s1205 + $0x70] sm:$0xf]
        %v1235 = vld [vmem:[%s1205 + $0x74] sm:$0xf]
        %v1236 = vld [vmem:[%s1205 + $0x78] sm:$0xf]
        %v1237 = vld [vmem:[%s1205 + $0x7c] sm:$0xf]
        %v1238 = vld [vmem:[%s1205 + $0x80] sm:$0xf]
        %v1239 = vld [vmem:[%s1205 + $0x84] sm:$0xf]
        %v1240 = vld [vmem:[%s1205 + $0x88] sm:$0xf]
        %v1241 = vld [vmem:[%s1205 + $0x8c] sm:$0xf]
        %v1242 = vld [vmem:[%s1205 + $0x90] sm:$0xf]
        %v1243 = vld [vmem:[%s1205 + $0x94] sm:$0xf]
        %v1244 = vld [vmem:[%s1205 + $0x98] sm:$0xf]
        %v1245 = vld [vmem:[%s1205 + $0x9c] sm:$0xf]
        %v1246 = vld [vmem:[%s1205 + $0xa0] sm:$0xf]
        %v1247 = vld [vmem:[%s1205 + $0xa4] sm:$0xf]
        %v1248 = vld [vmem:[%s1205 + $0xa8] sm:$0xf]
        %v1249 = vld [vmem:[%s1205 + $0xac] sm:$0xf]
        %v1250 = vld [vmem:[%s1205 + $0xb0] sm:$0xf]
        %v1251 = vld [vmem:[%s1205 + $0xb4] sm:$0xf]
        %v1252 = vld [vmem:[%s1205 + $0xb8] sm:$0xf]
        %v1253 = vld [vmem:[%s1205 + $0xbc] sm:$0xf]
        %v1302 = vunpack.c.l.b16 %v1206
        %v1303 = vunpack.c.l.b16 %v1207
        %v1304 = vunpack.c.l.b16 %v1208
        %v1305 = vunpack.c.l.b16 %v1209
        %v1306 = vunpack.c.l.b16 %v1210
        %v1307 = vunpack.c.l.b16 %v1211
        %v1308 = vunpack.c.l.b16 %v1212
        %v1309 = vunpack.c.l.b16 %v1213
        %v1310 = vunpack.c.l.b16 %v1214
        %v1311 = vunpack.c.l.b16 %v1215
        %v1312 = vunpack.c.l.b16 %v1216
        %v1313 = vunpack.c.l.b16 %v1217
        %v1314 = vunpack.c.l.b16 %v1218
        %v1315 = vunpack.c.l.b16 %v1219
        %v1316 = vunpack.c.l.b16 %v1220
        %v1317 = vunpack.c.l.b16 %v1221
        %v1318 = vunpack.c.l.b16 %v1222
        %v1319 = vunpack.c.l.b16 %v1223
        %v1320 = vunpack.c.l.b16 %v1224
        %v1321 = vunpack.c.l.b16 %v1225
        %v1322 = vunpack.c.l.b16 %v1226
        %v1323 = vunpack.c.l.b16 %v1227
        %v1324 = vunpack.c.l.b16 %v1228
        %v1325 = vunpack.c.l.b16 %v1229
        %v1326 = vunpack.c.l.b16 %v1230
        %v1327 = vunpack.c.l.b16 %v1231
        %v1328 = vunpack.c.l.b16 %v1232
        %v1329 = vunpack.c.l.b16 %v1233
        %v1330 = vunpack.c.l.b16 %v1234
        %v1331 = vunpack.c.l.b16 %v1235
        %v1332 = vunpack.c.l.b16 %v1236
        %v1333 = vunpack.c.l.b16 %v1237
        %v1334 = vunpack.c.l.b16 %v1238
        %v1335 = vunpack.c.l.b16 %v1239
        %v1336 = vunpack.c.l.b16 %v1240
        %v1337 = vunpack.c.l.b16 %v1241
        %v1338 = vunpack.c.l.b16 %v1242
        %v1339 = vunpack.c.l.b16 %v1243
        %v1340 = vunpack.c.l.b16 %v1244
        %v1341 = vunpack.c.l.b16 %v1245
        %v1342 = vunpack.c.l.b16 %v1246
        %v1343 = vunpack.c.l.b16 %v1247
        %v1344 = vunpack.c.l.b16 %v1248
        %v1345 = vunpack.c.l.b16 %v1249
        %v1346 = vunpack.c.l.b16 %v1250
        %v1347 = vunpack.c.l.b16 %v1251
        %v1348 = vunpack.c.l.b16 %v1252
        %v1349 = vunpack.c.l.b16 %v1253
        %v1350 = vpack.c.b16 %v1303, %v1302
        %v1351 = vpack.c.b16 %v1305, %v1304
        %v1352 = vpack.c.b16 %v1307, %v1306
        %v1353 = vpack.c.b16 %v1309, %v1308
        %v1354 = vpack.c.b16 %v1311, %v1310
        %v1355 = vpack.c.b16 %v1313, %v1312
        %v1356 = vpack.c.b16 %v1315, %v1314
        %v1357 = vpack.c.b16 %v1317, %v1316
        %v1358 = vpack.c.b16 %v1319, %v1318
        %v1359 = vpack.c.b16 %v1321, %v1320
        %v1360 = vpack.c.b16 %v1323, %v1322
        %v1361 = vpack.c.b16 %v1325, %v1324
        %v1362 = vpack.c.b16 %v1327, %v1326
        %v1363 = vpack.c.b16 %v1329, %v1328
        %v1364 = vpack.c.b16 %v1331, %v1330
        %v1365 = vpack.c.b16 %v1333, %v1332
        %v1366 = vpack.c.b16 %v1335, %v1334
        %v1367 = vpack.c.b16 %v1337, %v1336
        %v1368 = vpack.c.b16 %v1339, %v1338
        %v1369 = vpack.c.b16 %v1341, %v1340
        %v1370 = vpack.c.b16 %v1343, %v1342
        %v1371 = vpack.c.b16 %v1345, %v1344
        %v1372 = vpack.c.b16 %v1347, %v1346
        %v1373 = vpack.c.b16 %v1349, %v1348
        %1398 = vmatprep.subr.bf16.mxu0 0
        %1399 = vmatpush1.bf16.msra.mxu0 %v1350
        %1400 = vmatprep.subr.bf16.mxu0 0
        %1401 = vmatpush1.bf16.msra.mxu0 %v1351
        %1402 = vmatprep.subr.bf16.mxu0 0
        %1403 = vmatpush1.bf16.msra.mxu0 %v1352
        %1404 = vmatprep.subr.bf16.mxu0 0
        %1405 = vmatpush1.bf16.msra.mxu0 %v1353
        %1406 = vmatprep.subr.bf16.mxu0 0
        %1407 = vmatpush1.bf16.msra.mxu0 %v1354
        %1408 = vmatprep.subr.bf16.mxu0 0
        %1409 = vmatpush1.bf16.msra.mxu0 %v1355
        %1410 = vmatprep.subr.bf16.mxu0 0
        %1411 = vmatpush1.bf16.msra.mxu0 %v1356
        %1412 = vmatprep.subr.bf16.mxu0 0
        %1413 = vmatpush1.bf16.msra.mxu0 %v1357
        %1414 = vmatprep.subr.bf16.mxu0 0
        %1415 = vmatpush1.bf16.msra.mxu0 %v1358
        %1416 = vmatprep.subr.bf16.mxu0 0
        %1417 = vmatpush1.bf16.msra.mxu0 %v1359
        %1418 = vmatprep.subr.bf16.mxu0 0
        %1419 = vmatpush1.bf16.msra.mxu0 %v1360
        %1420 = vmatprep.subr.bf16.mxu0 0
        %1421 = vmatpush1.bf16.msra.mxu0 %v1361
        %1422 = vmatprep.subr.bf16.mxu0 0
        %1423 = vmatpush1.bf16.msra.mxu0 %v1362
        %1424 = vmatprep.subr.bf16.mxu0 0
        %1425 = vmatpush1.bf16.msra.mxu0 %v1363
        %1426 = vmatprep.subr.bf16.mxu0 0
        %1427 = vmatpush1.bf16.msra.mxu0 %v1364
        %1428 = vmatprep.subr.bf16.mxu0 0
        %1429 = vmatpush1.bf16.msra.mxu0 %v1365
        %1430 = vmatprep.mubr.bf16.mxu0 %v1182
        %1431 = vmatmul.mubr.bf16.gmra.mrb[0].mxu0 %v1181
        %v1432 = vpop.f32.mrb[0].mxu0
        %v1433 = vadd.f32 0.0, %v1432
        %v1434 = vpop.f32.mrb[0].mxu0
        %v1435 = vpop.f32.mrb[0].mxu0
        %v1436 = vadd.f32 0.0, %v1435
        %v1437 = vpop.f32.mrb[0].mxu0
        %1438 = vmatprep.mubr.bf16.mxu0 %v1185
        %1439 = vmatmul.mubr.bf16.gmra.mrb[0].mxu0 %v1184
        %v1440 = vpop.f32.mrb[0].mxu0
        %v1441 = vadd.f32 0.0, %v1440
        %v1442 = vpop.f32.mrb[0].mxu0
        %v1443 = vpop.f32.mrb[0].mxu0
        %v1444 = vadd.f32 0.0, %v1443
        %v1445 = vpop.f32.mrb[0].mxu0
        %1446 = vmatprep.mubr.bf16.mxu0 %v1188
        %1447 = vmatmul.mubr.bf16.gmra.mrb[0].mxu0 %v1187
        %v1448 = vpop.f32.mrb[0].mxu0
        %v1449 = vadd.f32 0.0, %v1448
        %v1450 = vpop.f32.mrb[0].mxu0
        %v1451 = vpop.f32.mrb[0].mxu0
        %v1452 = vadd.f32 0.0, %v1451
        %v1453 = vpop.f32.mrb[0].mxu0
        %1454 = vmatprep.mubr.bf16.mxu0 %v1191
        %1455 = vmatmul.mubr.bf16.gmra.mrb[0].mxu0 %v1190
        %v1456 = vpop.f32.mrb[0].mxu0
        %v1457 = vadd.f32 0.0, %v1456
        %v1458 = vpop.f32.mrb[0].mxu0
        %v1459 = vpop.f32.mrb[0].mxu0
        %v1460 = vadd.f32 0.0, %v1459
        %v1461 = vpop.f32.mrb[0].mxu0
        %1462 = vmatprep.mubr.bf16.mxu0 %v1194
        %1463 = vmatmul.mubr.bf16.gmra.mrb[0].mxu0 %v1193
        %v1464 = vpop.f32.mrb[0].mxu0
        %v1465 = vadd.f32 0.0, %v1464
        %v1466 = vpop.f32.mrb[0].mxu0
        %v1467 = vpop.f32.mrb[0].mxu0
        %v1468 = vadd.f32 0.0, %v1467
        %v1469 = vpop.f32.mrb[0].mxu0
        %1470 = vmatprep.mubr.bf16.mxu0 %v1197
        %1471 = vmatmul.mubr.bf16.gmra.mrb[0].mxu0 %v1196
        %v1472 = vpop.f32.mrb[0].mxu0
        %v1473 = vadd.f32 0.0, %v1472
        %v1474 = vpop.f32.mrb[0].mxu0
        %v1475 = vpop.f32.mrb[0].mxu0
        %v1476 = vadd.f32 0.0, %v1475
        %v1477 = vpop.f32.mrb[0].mxu0
        %1478 = vmatprep.mubr.bf16.mxu0 %v1200
        %1479 = vmatmul.mubr.bf16.gmra.mrb[0].mxu0 %v1199
        %v1480 = vpop.f32.mrb[0].mxu0
        %v1481 = vadd.f32 0.0, %v1480
        %v1482 = vpop.f32.mrb[0].mxu0
        %v1483 = vpop.f32.mrb[0].mxu0
        %v1484 = vadd.f32 0.0, %v1483
        %v1485 = vpop.f32.mrb[0].mxu0
        %1486 = vmatprep.mubr.bf16.mxu0 %v1203
        %1487 = vmatmul.mubr.bf16.gmra.mrb[0].mxu0 %v1202
        %v1488 = vpop.f32.mrb[0].mxu0
        %v1489 = vadd.f32 0.0, %v1488
        %v1490 = vpop.f32.mrb[0].mxu0
        %v1491 = vpop.f32.mrb[0].mxu0
        %v1492 = vadd.f32 0.0, %v1491
        %v1493 = vpop.f32.mrb[0].mxu0
        %1494 = vdwg.mxu0
        %1495 = vmatprep.subr.bf16.mxu0 0
        %1496 = vmatpush1.bf16.msra.mxu0 %v1366
        %1497 = vmatprep.subr.bf16.mxu0 0
        %1498 = vmatpush1.bf16.msra.mxu0 %v1367
        %1499 = vmatprep.subr.bf16.mxu0 0
        %1500 = vmatpush1.bf16.msra.mxu0 %v1368
        %1501 = vmatprep.subr.bf16.mxu0 0
        %1502 = vmatpush1.bf16.msra.mxu0 %v1369
        %1503 = vmatprep.subr.bf16.mxu0 0
        %1504 = vmatpush1.bf16.msra.mxu0 %v1370
        %1505 = vmatprep.subr.bf16.mxu0 0
        %1506 = vmatpush1.bf16.msra.mxu0 %v1371
        %1507 = vmatprep.subr.bf16.mxu0 0
        %1508 = vmatpush1.bf16.msra.mxu0 %v1372
        %1509 = vmatprep.subr.bf16.mxu0 0
        %1510 = vmatpush1.bf16.msra.mxu0 %v1373
        %1511 = vmatprep.subr.bf16.mxu0 0
        %1512 = vmatpush1.bf16.msra.mxu0 0
        %1513 = vmatprep.subr.bf16.mxu0 0
        %1514 = vmatpush1.bf16.msra.mxu0 0
        %1515 = vmatprep.subr.bf16.mxu0 0
        %1516 = vmatpush1.bf16.msra.mxu0 0
        %1517 = vmatprep.subr.bf16.mxu0 0
        %1518 = vmatpush1.bf16.msra.mxu0 0
        %1519 = vmatprep.subr.bf16.mxu0 0
        %1520 = vmatpush1.bf16.msra.mxu0 0
        %1521 = vmatprep.subr.bf16.mxu0 0
        %1522 = vmatpush1.bf16.msra.mxu0 0
        %1523 = vmatprep.subr.bf16.mxu0 0
        %1524 = vmatpush1.bf16.msra.mxu0 0
        %1525 = vmatprep.subr.bf16.mxu0 0
        %1526 = vmatpush1.bf16.msra.mxu0 0
        %1527 = vmatprep.mubr.bf16.mxu0 0
        %1528 = vmatmul.mubr.bf16.gmra.mrb[0].mxu0 %v1183
        %v1529 = vpop.f32.mrb[0].mxu0
        %v1530 = vadd.f32 %v1433, %v1529
        %v1531 = vpop.f32.mrb[0].mxu0
        %v1532 = vpop.f32.mrb[0].mxu0
        %v1533 = vadd.f32 %v1436, %v1532
        %v1534 = vpop.f32.mrb[0].mxu0
        %1535 = vmatprep.mubr.bf16.mxu0 0
        %1536 = vmatmul.mubr.bf16.gmra.mrb[0].mxu0 %v1186
        %v1537 = vpop.f32.mrb[0].mxu0
        %v1538 = vadd.f32 %v1441, %v1537
        %v1539 = vpop.f32.mrb[0].mxu0
        %v1540 = vpop.f32.mrb[0].mxu0
        %v1541 = vadd.f32 %v1444, %v1540
        %v1542 = vpop.f32.mrb[0].mxu0
        %1543 = vmatprep.mubr.bf16.mxu0 0
        %1544 = vmatmul.mubr.bf16.gmra.mrb[0].mxu0 %v1189
        %v1545 = vpop.f32.mrb[0].mxu0
        %v1546 = vadd.f32 %v1449, %v1545
        %v1547 = vpop.f32.mrb[0].mxu0
        %v1548 = vpop.f32.mrb[0].mxu0
        %v1549 = vadd.f32 %v1452, %v1548
        %v1550 = vpop.f32.mrb[0].mxu0
        %1551 = vmatprep.mubr.bf16.mxu0 0
        %1552 = vmatmul.mubr.bf16.gmra.mrb[0].mxu0 %v1192
        %v1553 = vpop.f32.mrb[0].mxu0
        %v1554 = vadd.f32 %v1457, %v1553
        %v1555 = vpop.f32.mrb[0].mxu0
        %v1556 = vpop.f32.mrb[0].mxu0
        %v1557 = vadd.f32 %v1460, %v1556
        %v1558 = vpop.f32.mrb[0].mxu0
        %1559 = vmatprep.mubr.bf16.mxu0 0
        %1560 = vmatmul.mubr.bf16.gmra.mrb[0].mxu0 %v1195
        %v1561 = vpop.f32.mrb[0].mxu0
        %v1562 = vadd.f32 %v1465, %v1561
        %v1563 = vpop.f32.mrb[0].mxu0
        %v1564 = vpop.f32.mrb[0].mxu0
        %v1565 = vadd.f32 %v1468, %v1564
        %v1566 = vpop.f32.mrb[0].mxu0
        %1567 = vmatprep.mubr.bf16.mxu0 0
        %1568 = vmatmul.mubr.bf16.gmra.mrb[0].mxu0 %v1198
        %v1569 = vpop.f32.mrb[0].mxu0
        %v1570 = vadd.f32 %v1473, %v1569
        %v1571 = vpop.f32.mrb[0].mxu0
        %v1572 = vpop.f32.mrb[0].mxu0
        %v1573 = vadd.f32 %v1476, %v1572
        %v1574 = vpop.f32.mrb[0].mxu0
        %1575 = vmatprep.mubr.bf16.mxu0 0
        %1576 = vmatmul.mubr.bf16.gmra.mrb[0].mxu0 %v1201
        %v1577 = vpop.f32.mrb[0].mxu0
        %v1578 = vadd.f32 %v1481, %v1577
        %v1579 = vpop.f32.mrb[0].mxu0
        %v1580 = vpop.f32.mrb[0].mxu0
        %v1581 = vadd.f32 %v1484, %v1580
        %v1582 = vpop.f32.mrb[0].mxu0
        %1583 = vmatprep.mubr.bf16.mxu0 0
        %1584 = vmatmul.mubr.bf16.gmra.mrb[0].mxu0 %v1204
        %v1585 = vpop.f32.mrb[0].mxu0
        %v1586 = vadd.f32 %v1489, %v1585
        %v1587 = vpop.f32.mrb[0].mxu0
        %v1588 = vpop.f32.mrb[0].mxu0
        %v1589 = vadd.f32 %v1492, %v1588
        %v1590 = vpop.f32.mrb[0].mxu0
        %1591 = vdwg.mxu0
        %v1640 = vunpack.c.l.b16 %v1133
        %v1641 = vunpack.c.l.b16 %v1134
        %v1642 = vunpack.c.l.b16 %v1135
        %v1643 = vunpack.c.l.b16 %v1136
        %v1644 = vunpack.c.l.b16 %v1137
        %v1645 = vunpack.c.l.b16 %v1138
        %v1646 = vunpack.c.l.b16 %v1139
        %v1647 = vunpack.c.l.b16 %v1140
        %v1648 = vunpack.c.l.b16 %v1141
        %v1649 = vunpack.c.l.b16 %v1142
        %v1650 = vunpack.c.l.b16 %v1143
        %v1651 = vunpack.c.l.b16 %v1144
        %v1652 = vunpack.c.l.b16 %v1145
        %v1653 = vunpack.c.l.b16 %v1146
        %v1654 = vunpack.c.l.b16 %v1147
        %v1655 = vunpack.c.l.b16 %v1148
        %v1656 = vunpack.c.l.b16 %v1149
        %v1657 = vunpack.c.l.b16 %v1150
        %v1658 = vunpack.c.l.b16 %v1151
        %v1659 = vunpack.c.l.b16 %v1152
        %v1660 = vunpack.c.l.b16 %v1153
        %v1661 = vunpack.c.l.b16 %v1154
        %v1662 = vunpack.c.l.b16 %v1155
        %v1663 = vunpack.c.l.b16 %v1156
        %v1664 = vunpack.c.l.b16 %v1157
        %v1665 = vunpack.c.l.b16 %v1158
        %v1666 = vunpack.c.l.b16 %v1159
        %v1667 = vunpack.c.l.b16 %v1160
        %v1668 = vunpack.c.l.b16 %v1161
        %v1669 = vunpack.c.l.b16 %v1162
        %v1670 = vunpack.c.l.b16 %v1163
        %v1671 = vunpack.c.l.b16 %v1164
        %v1672 = vunpack.c.l.b16 %v1165
        %v1673 = vunpack.c.l.b16 %v1166
        %v1674 = vunpack.c.l.b16 %v1167
        %v1675 = vunpack.c.l.b16 %v1168
        %v1676 = vunpack.c.l.b16 %v1169
        %v1677 = vunpack.c.l.b16 %v1170
        %v1678 = vunpack.c.l.b16 %v1171
        %v1679 = vunpack.c.l.b16 %v1172
        %v1680 = vunpack.c.l.b16 %v1173
        %v1681 = vunpack.c.l.b16 %v1174
        %v1682 = vunpack.c.l.b16 %v1175
        %v1683 = vunpack.c.l.b16 %v1176
        %v1684 = vunpack.c.l.b16 %v1177
        %v1685 = vunpack.c.l.b16 %v1178
        %v1686 = vunpack.c.l.b16 %v1179
        %v1687 = vunpack.c.l.b16 %v1180
        %v1688 = vpack.c.b16 %v1641, %v1640
        %v1689 = vpack.c.b16 %v1643, %v1642
        %v1690 = vpack.c.b16 %v1645, %v1644
        %v1691 = vpack.c.b16 %v1647, %v1646
        %v1692 = vpack.c.b16 %v1649, %v1648
        %v1693 = vpack.c.b16 %v1651, %v1650
        %v1694 = vpack.c.b16 %v1653, %v1652
        %v1695 = vpack.c.b16 %v1655, %v1654
        %v1696 = vpack.c.b16 %v1657, %v1656
        %v1697 = vpack.c.b16 %v1659, %v1658
        %v1698 = vpack.c.b16 %v1661, %v1660
        %v1699 = vpack.c.b16 %v1663, %v1662
        %v1700 = vpack.c.b16 %v1665, %v1664
        %v1701 = vpack.c.b16 %v1667, %v1666
        %v1702 = vpack.c.b16 %v1669, %v1668
        %v1703 = vpack.c.b16 %v1671, %v1670
        %v1704 = vpack.c.b16 %v1673, %v1672
        %v1705 = vpack.c.b16 %v1675, %v1674
        %v1706 = vpack.c.b16 %v1677, %v1676
        %v1707 = vpack.c.b16 %v1679, %v1678
        %v1708 = vpack.c.b16 %v1681, %v1680
        %v1709 = vpack.c.b16 %v1683, %v1682
        %v1710 = vpack.c.b16 %v1685, %v1684
        %v1711 = vpack.c.b16 %v1687, %v1686
        %1736 = vmatprep.subr.bf16.mxu0 0
        %1737 = vmatpush1.bf16.msra.mxu0 %v1688
        %1738 = vmatprep.subr.bf16.mxu0 0
        %1739 = vmatpush1.bf16.msra.mxu0 %v1689
        %1740 = vmatprep.subr.bf16.mxu0 0
        %1741 = vmatpush1.bf16.msra.mxu0 %v1690
        %1742 = vmatprep.subr.bf16.mxu0 0
        %1743 = vmatpush1.bf16.msra.mxu0 %v1691
        %1744 = vmatprep.subr.bf16.mxu0 0
        %1745 = vmatpush1.bf16.msra.mxu0 %v1692
        %1746 = vmatprep.subr.bf16.mxu0 0
        %1747 = vmatpush1.bf16.msra.mxu0 %v1693
        %1748 = vmatprep.subr.bf16.mxu0 0
        %1749 = vmatpush1.bf16.msra.mxu0 %v1694
        %1750 = vmatprep.subr.bf16.mxu0 0
        %1751 = vmatpush1.bf16.msra.mxu0 %v1695
        %1752 = vmatprep.subr.bf16.mxu0 0
        %1753 = vmatpush1.bf16.msra.mxu0 %v1696
        %1754 = vmatprep.subr.bf16.mxu0 0
        %1755 = vmatpush1.bf16.msra.mxu0 %v1697
        %1756 = vmatprep.subr.bf16.mxu0 0
        %1757 = vmatpush1.bf16.msra.mxu0 %v1698
        %1758 = vmatprep.subr.bf16.mxu0 0
        %1759 = vmatpush1.bf16.msra.mxu0 %v1699
        %1760 = vmatprep.subr.bf16.mxu0 0
        %1761 = vmatpush1.bf16.msra.mxu0 %v1700
        %1762 = vmatprep.subr.bf16.mxu0 0
        %1763 = vmatpush1.bf16.msra.mxu0 %v1701
        %1764 = vmatprep.subr.bf16.mxu0 0
        %1765 = vmatpush1.bf16.msra.mxu0 %v1702
        %1766 = vmatprep.subr.bf16.mxu0 0
        %1767 = vmatpush1.bf16.msra.mxu0 %v1703
        %1768 = vmatprep.mubr.bf16.mxu0 %v1110
        %1769 = vmatmul.mubr.bf16.gmra.mrb[0].mxu0 %v1109
        %v1770 = vpop.f32.mrb[0].mxu0
        %v1771 = vadd.f32 %v1530, %v1770
        %v1772 = vpop.f32.mrb[0].mxu0
        %v1773 = vpop.f32.mrb[0].mxu0
        %v1774 = vadd.f32 %v1533, %v1773
        %v1775 = vpop.f32.mrb[0].mxu0
        %1776 = vmatprep.mubr.bf16.mxu0 %v1113
        %1777 = vmatmul.mubr.bf16.gmra.mrb[0].mxu0 %v1112
        %v1778 = vpop.f32.mrb[0].mxu0
        %v1779 = vadd.f32 %v1538, %v1778
        %v1780 = vpop.f32.mrb[0].mxu0
        %v1781 = vpop.f32.mrb[0].mxu0
        %v1782 = vadd.f32 %v1541, %v1781
        %v1783 = vpop.f32.mrb[0].mxu0
        %1784 = vmatprep.mubr.bf16.mxu0 %v1116
        %1785 = vmatmul.mubr.bf16.gmra.mrb[0].mxu0 %v1115
        %v1786 = vpop.f32.mrb[0].mxu0
        %v1787 = vadd.f32 %v1546, %v1786
        %v1788 = vpop.f32.mrb[0].mxu0
        %v1789 = vpop.f32.mrb[0].mxu0
        %v1790 = vadd.f32 %v1549, %v1789
        %v1791 = vpop.f32.mrb[0].mxu0
        %1792 = vmatprep.mubr.bf16.mxu0 %v1119
        %1793 = vmatmul.mubr.bf16.gmra.mrb[0].mxu0 %v1118
        %v1794 = vpop.f32.mrb[0].mxu0
        %v1795 = vadd.f32 %v1554, %v1794
        %v1796 = vpop.f32.mrb[0].mxu0
        %v1797 = vpop.f32.mrb[0].mxu0
        %v1798 = vadd.f32 %v1557, %v1797
        %v1799 = vpop.f32.mrb[0].mxu0
        %1800 = vmatprep.mubr.bf16.mxu0 %v1122
        %1801 = vmatmul.mubr.bf16.gmra.mrb[0].mxu0 %v1121
        %v1802 = vpop.f32.mrb[0].mxu0
        %v1803 = vadd.f32 %v1562, %v1802
        %v1804 = vpop.f32.mrb[0].mxu0
        %v1805 = vpop.f32.mrb[0].mxu0
        %v1806 = vadd.f32 %v1565, %v1805
        %v1807 = vpop.f32.mrb[0].mxu0
        %1808 = vmatprep.mubr.bf16.mxu0 %v1125
        %1809 = vmatmul.mubr.bf16.gmra.mrb[0].mxu0 %v1124
        %v1810 = vpop.f32.mrb[0].mxu0
        %v1811 = vadd.f32 %v1570, %v1810
        %v1812 = vpop.f32.mrb[0].mxu0
        %v1813 = vpop.f32.mrb[0].mxu0
        %v1814 = vadd.f32 %v1573, %v1813
        %v1815 = vpop.f32.mrb[0].mxu0
        %1816 = vmatprep.mubr.bf16.mxu0 %v1128
        %1817 = vmatmul.mubr.bf16.gmra.mrb[0].mxu0 %v1127
        %v1818 = vpop.f32.mrb[0].mxu0
        %v1819 = vadd.f32 %v1578, %v1818
        %v1820 = vpop.f32.mrb[0].mxu0
        %v1821 = vpop.f32.mrb[0].mxu0
        %v1822 = vadd.f32 %v1581, %v1821
        %v1823 = vpop.f32.mrb[0].mxu0
        %1824 = vmatprep.mubr.bf16.mxu0 %v1131
        %1825 = vmatmul.mubr.bf16.gmra.mrb[0].mxu0 %v1130
        %v1826 = vpop.f32.mrb[0].mxu0
        %v1827 = vadd.f32 %v1586, %v1826
        %v1828 = vpop.f32.mrb[0].mxu0
        %v1829 = vpop.f32.mrb[0].mxu0
        %v1830 = vadd.f32 %v1589, %v1829
        %v1831 = vpop.f32.mrb[0].mxu0
        %1832 = vdwg.mxu0
        %1833 = vmatprep.subr.bf16.mxu0 0
        %1834 = vmatpush1.bf16.msra.mxu0 %v1704
        %1835 = vmatprep.subr.bf16.mxu0 0
        %1836 = vmatpush1.bf16.msra.mxu0 %v1705
        %1837 = vmatprep.subr.bf16.mxu0 0
        %1838 = vmatpush1.bf16.msra.mxu0 %v1706
        %1839 = vmatprep.subr.bf16.mxu0 0
        %1840 = vmatpush1.bf16.msra.mxu0 %v1707
        %1841 = vmatprep.subr.bf16.mxu0 0
        %1842 = vmatpush1.bf16.msra.mxu0 %v1708
        %1843 = vmatprep.subr.bf16.mxu0 0
        %1844 = vmatpush1.bf16.msra.mxu0 %v1709
        %1845 = vmatprep.subr.bf16.mxu0 0
        %1846 = vmatpush1.bf16.msra.mxu0 %v1710
        %1847 = vmatprep.subr.bf16.mxu0 0
        %1848 = vmatpush1.bf16.msra.mxu0 %v1711
        %1849 = vmatprep.subr.bf16.mxu0 0
        %1850 = vmatpush1.bf16.msra.mxu0 0
        %1851 = vmatprep.subr.bf16.mxu0 0
        %1852 = vmatpush1.bf16.msra.mxu0 0
        %1853 = vmatprep.subr.bf16.mxu0 0
        %1854 = vmatpush1.bf16.msra.mxu0 0
        %1855 = vmatprep.subr.bf16.mxu0 0
        %1856 = vmatpush1.bf16.msra.mxu0 0
        %1857 = vmatprep.subr.bf16.mxu0 0
        %1858 = vmatpush1.bf16.msra.mxu0 0
        %1859 = vmatprep.subr.bf16.mxu0 0
        %1860 = vmatpush1.bf16.msra.mxu0 0
        %1861 = vmatprep.subr.bf16.mxu0 0
        %1862 = vmatpush1.bf16.msra.mxu0 0
        %1863 = vmatprep.subr.bf16.mxu0 0
        %1864 = vmatpush1.bf16.msra.mxu0 0
        %1865 = vmatprep.mubr.bf16.mxu0 0
        %1866 = vmatmul.mubr.bf16.gmra.mrb[0].mxu0 %v1111
        %v1867 = vpop.f32.mrb[0].mxu0
        %v1868 = vadd.f32 %v1771, %v1867
        %v1869 = vpop.f32.mrb[0].mxu0
        %v1870 = vpop.f32.mrb[0].mxu0
        %v1871 = vadd.f32 %v1774, %v1870
        %v1872 = vpop.f32.mrb[0].mxu0
        %1873 = vmatprep.mubr.bf16.mxu0 0
        %1874 = vmatmul.mubr.bf16.gmra.mrb[0].mxu0 %v1114
        %v1875 = vpop.f32.mrb[0].mxu0
        %v1876 = vadd.f32 %v1779, %v1875
        %v1877 = vpop.f32.mrb[0].mxu0
        %v1878 = vpop.f32.mrb[0].mxu0
        %v1879 = vadd.f32 %v1782, %v1878
        %v1880 = vpop.f32.mrb[0].mxu0
        %1881 = vmatprep.mubr.bf16.mxu0 0
        %1882 = vmatmul.mubr.bf16.gmra.mrb[0].mxu0 %v1117
        %v1883 = vpop.f32.mrb[0].mxu0
        %v1884 = vadd.f32 %v1787, %v1883
        %v1885 = vpop.f32.mrb[0].mxu0
        %v1886 = vpop.f32.mrb[0].mxu0
        %v1887 = vadd.f32 %v1790, %v1886
        %v1888 = vpop.f32.mrb[0].mxu0
        %1889 = vmatprep.mubr.bf16.mxu0 0
        %1890 = vmatmul.mubr.bf16.gmra.mrb[0].mxu0 %v1120
        %v1891 = vpop.f32.mrb[0].mxu0
        %v1892 = vadd.f32 %v1795, %v1891
        %v1893 = vpop.f32.mrb[0].mxu0
        %v1894 = vpop.f32.mrb[0].mxu0
        %v1895 = vadd.f32 %v1798, %v1894
        %v1896 = vpop.f32.mrb[0].mxu0
        %1897 = vmatprep.mubr.bf16.mxu0 0
        %1898 = vmatmul.mubr.bf16.gmra.mrb[0].mxu0 %v1123
        %v1899 = vpop.f32.mrb[0].mxu0
        %v1900 = vadd.f32 %v1803, %v1899
        %v1901 = vpop.f32.mrb[0].mxu0
        %v1902 = vpop.f32.mrb[0].mxu0
        %v1903 = vadd.f32 %v1806, %v1902
        %v1904 = vpop.f32.mrb[0].mxu0
        %1905 = vmatprep.mubr.bf16.mxu0 0
        %1906 = vmatmul.mubr.bf16.gmra.mrb[0].mxu0 %v1126
        %v1907 = vpop.f32.mrb[0].mxu0
        %v1908 = vadd.f32 %v1811, %v1907
        %v1909 = vpop.f32.mrb[0].mxu0
        %v1910 = vpop.f32.mrb[0].mxu0
        %v1911 = vadd.f32 %v1814, %v1910
        %v1912 = vpop.f32.mrb[0].mxu0
        %1913 = vmatprep.mubr.bf16.mxu0 0
        %1914 = vmatmul.mubr.bf16.gmra.mrb[0].mxu0 %v1129
        %v1915 = vpop.f32.mrb[0].mxu0
        %v1916 = vadd.f32 %v1819, %v1915
        %v1917 = vpop.f32.mrb[0].mxu0
        %v1918 = vpop.f32.mrb[0].mxu0
        %v1919 = vadd.f32 %v1822, %v1918
        %v1920 = vpop.f32.mrb[0].mxu0
        %1921 = vmatprep.mubr.bf16.mxu0 0
        %1922 = vmatmul.mubr.bf16.gmra.mrb[0].mxu0 %v1132
        %v1923 = vpop.f32.mrb[0].mxu0
        %v1924 = vadd.f32 %v1827, %v1923
        %v1925 = vpop.f32.mrb[0].mxu0
        %v1926 = vpop.f32.mrb[0].mxu0
        %v1927 = vadd.f32 %v1830, %v1926
        %v1928 = vpop.f32.mrb[0].mxu0
        %1929 = vdwg.mxu0
        %s1930 = scalar_lea.vmem [#allocation4], 48
        %v1931 = vld [vmem:[%s1930] sm:$0xff]
        %v1932 = vld [vmem:[%s1930 + $0x8] sm:$0xff]
        %v1933 = vld [vmem:[%s1930 + $0x10] sm:$0xff]
        %v1934 = vld [vmem:[%s1930 + $0x18] sm:$0xff]
        %v1935 = vld [vmem:[%s1930 + $0x20] sm:$0xff]
        %v1936 = vld [vmem:[%s1930 + $0x28] sm:$0xff]
        %v1937 = vld [vmem:[%s1930 + $0x30] sm:$0xff]
        %v1938 = vld [vmem:[%s1930 + $0x38] sm:$0xff]
        %v1939 = vld [vmem:[%s1930 + $0x40] sm:$0xff]
        %v1940 = vld [vmem:[%s1930 + $0x48] sm:$0xff]
        %v1941 = vld [vmem:[%s1930 + $0x50] sm:$0xff]
        %v1942 = vld [vmem:[%s1930 + $0x58] sm:$0xff]
        %v1943 = vld [vmem:[%s1930 + $0x60] sm:$0xff]
        %v1944 = vld [vmem:[%s1930 + $0x68] sm:$0xff]
        %v1945 = vld [vmem:[%s1930 + $0x70] sm:$0xff]
        %v1946 = vld [vmem:[%s1930 + $0x78] sm:$0xff]
        %v1947 = vld [vmem:[%s1930 + $0x80] sm:$0xff]
        %v1948 = vld [vmem:[%s1930 + $0x88] sm:$0xff]
        %v1949 = vld [vmem:[%s1930 + $0x90] sm:$0xff]
        %v1950 = vld [vmem:[%s1930 + $0x98] sm:$0xff]
        %v1951 = vld [vmem:[%s1930 + $0xa0] sm:$0xff]
        %v1952 = vld [vmem:[%s1930 + $0xa8] sm:$0xff]
        %v1953 = vld [vmem:[%s1930 + $0xb0] sm:$0xff]
        %v1954 = vld [vmem:[%s1930 + $0xb8] sm:$0xff]
        %s1955 = scalar_lea.vmem [#allocation10], 384
        %v1956 = vld [vmem:[%s1955] sm:$0xf]
        %v1957 = vld [vmem:[%s1955 + $0x4] sm:$0xf]
        %v1958 = vld [vmem:[%s1955 + $0x8] sm:$0xf]
        %v1959 = vld [vmem:[%s1955 + $0xc] sm:$0xf]
        %v1960 = vld [vmem:[%s1955 + $0x10] sm:$0xf]
        %v1961 = vld [vmem:[%s1955 + $0x14] sm:$0xf]
        %v1962 = vld [vmem:[%s1955 + $0x18] sm:$0xf]
        %v1963 = vld [vmem:[%s1955 + $0x1c] sm:$0xf]
        %v1964 = vld [vmem:[%s1955 + $0x20] sm:$0xf]
        %v1965 = vld [vmem:[%s1955 + $0x24] sm:$0xf]
        %v1966 = vld [vmem:[%s1955 + $0x28] sm:$0xf]
        %v1967 = vld [vmem:[%s1955 + $0x2c] sm:$0xf]
        %v1968 = vld [vmem:[%s1955 + $0x30] sm:$0xf]
        %v1969 = vld [vmem:[%s1955 + $0x34] sm:$0xf]
        %v1970 = vld [vmem:[%s1955 + $0x38] sm:$0xf]
        %v1971 = vld [vmem:[%s1955 + $0x3c] sm:$0xf]
        %v1972 = vld [vmem:[%s1955 + $0x40] sm:$0xf]
        %v1973 = vld [vmem:[%s1955 + $0x44] sm:$0xf]
        %v1974 = vld [vmem:[%s1955 + $0x48] sm:$0xf]
        %v1975 = vld [vmem:[%s1955 + $0x4c] sm:$0xf]
        %v1976 = vld [vmem:[%s1955 + $0x50] sm:$0xf]
        %v1977 = vld [vmem:[%s1955 + $0x54] sm:$0xf]
        %v1978 = vld [vmem:[%s1955 + $0x58] sm:$0xf]
        %v1979 = vld [vmem:[%s1955 + $0x5c] sm:$0xf]
        %v1980 = vld [vmem:[%s1955 + $0x60] sm:$0xf]
        %v1981 = vld [vmem:[%s1955 + $0x64] sm:$0xf]
        %v1982 = vld [vmem:[%s1955 + $0x68] sm:$0xf]
        %v1983 = vld [vmem:[%s1955 + $0x6c] sm:$0xf]
        %v1984 = vld [vmem:[%s1955 + $0x70] sm:$0xf]
        %v1985 = vld [vmem:[%s1955 + $0x74] sm:$0xf]
        %v1986 = vld [vmem:[%s1955 + $0x78] sm:$0xf]
        %v1987 = vld [vmem:[%s1955 + $0x7c] sm:$0xf]
        %v1988 = vld [vmem:[%s1955 + $0x80] sm:$0xf]
        %v1989 = vld [vmem:[%s1955 + $0x84] sm:$0xf]
        %v1990 = vld [vmem:[%s1955 + $0x88] sm:$0xf]
        %v1991 = vld [vmem:[%s1955 + $0x8c] sm:$0xf]
        %v1992 = vld [vmem:[%s1955 + $0x90] sm:$0xf]
        %v1993 = vld [vmem:[%s1955 + $0x94] sm:$0xf]
        %v1994 = vld [vmem:[%s1955 + $0x98] sm:$0xf]
        %v1995 = vld [vmem:[%s1955 + $0x9c] sm:$0xf]
        %v1996 = vld [vmem:[%s1955 + $0xa0] sm:$0xf]
        %v1997 = vld [vmem:[%s1955 + $0xa4] sm:$0xf]
        %v1998 = vld [vmem:[%s1955 + $0xa8] sm:$0xf]
        %v1999 = vld [vmem:[%s1955 + $0xac] sm:$0xf]
        %v2000 = vld [vmem:[%s1955 + $0xb0] sm:$0xf]
        %v2001 = vld [vmem:[%s1955 + $0xb4] sm:$0xf]
        %v2002 = vld [vmem:[%s1955 + $0xb8] sm:$0xf]
        %v2003 = vld [vmem:[%s1955 + $0xbc] sm:$0xf]
        %v2052 = vunpack.c.l.b16 %v1956
        %v2053 = vunpack.c.l.b16 %v1957
        %v2054 = vunpack.c.l.b16 %v1958
        %v2055 = vunpack.c.l.b16 %v1959
        %v2056 = vunpack.c.l.b16 %v1960
        %v2057 = vunpack.c.l.b16 %v1961
        %v2058 = vunpack.c.l.b16 %v1962
        %v2059 = vunpack.c.l.b16 %v1963
        %v2060 = vunpack.c.l.b16 %v1964
        %v2061 = vunpack.c.l.b16 %v1965
        %v2062 = vunpack.c.l.b16 %v1966
        %v2063 = vunpack.c.l.b16 %v1967
        %v2064 = vunpack.c.l.b16 %v1968
        %v2065 = vunpack.c.l.b16 %v1969
        %v2066 = vunpack.c.l.b16 %v1970
        %v2067 = vunpack.c.l.b16 %v1971
        %v2068 = vunpack.c.l.b16 %v1972
        %v2069 = vunpack.c.l.b16 %v1973
        %v2070 = vunpack.c.l.b16 %v1974
        %v2071 = vunpack.c.l.b16 %v1975
        %v2072 = vunpack.c.l.b16 %v1976
        %v2073 = vunpack.c.l.b16 %v1977
        %v2074 = vunpack.c.l.b16 %v1978
        %v2075 = vunpack.c.l.b16 %v1979
        %v2076 = vunpack.c.l.b16 %v1980
        %v2077 = vunpack.c.l.b16 %v1981
        %v2078 = vunpack.c.l.b16 %v1982
        %v2079 = vunpack.c.l.b16 %v1983
        %v2080 = vunpack.c.l.b16 %v1984
        %v2081 = vunpack.c.l.b16 %v1985
        %v2082 = vunpack.c.l.b16 %v1986
        %v2083 = vunpack.c.l.b16 %v1987
        %v2084 = vunpack.c.l.b16 %v1988
        %v2085 = vunpack.c.l.b16 %v1989
        %v2086 = vunpack.c.l.b16 %v1990
        %v2087 = vunpack.c.l.b16 %v1991
        %v2088 = vunpack.c.l.b16 %v1992
        %v2089 = vunpack.c.l.b16 %v1993
        %v2090 = vunpack.c.l.b16 %v1994
        %v2091 = vunpack.c.l.b16 %v1995
        %v2092 = vunpack.c.l.b16 %v1996
        %v2093 = vunpack.c.l.b16 %v1997
        %v2094 = vunpack.c.l.b16 %v1998
        %v2095 = vunpack.c.l.b16 %v1999
        %v2096 = vunpack.c.l.b16 %v2000
        %v2097 = vunpack.c.l.b16 %v2001
        %v2098 = vunpack.c.l.b16 %v2002
        %v2099 = vunpack.c.l.b16 %v2003
        %v2100 = vpack.c.b16 %v2053, %v2052
        %v2101 = vpack.c.b16 %v2055, %v2054
        %v2102 = vpack.c.b16 %v2057, %v2056
        %v2103 = vpack.c.b16 %v2059, %v2058
        %v2104 = vpack.c.b16 %v2061, %v2060
        %v2105 = vpack.c.b16 %v2063, %v2062
        %v2106 = vpack.c.b16 %v2065, %v2064
        %v2107 = vpack.c.b16 %v2067, %v2066
        %v2108 = vpack.c.b16 %v2069, %v2068
        %v2109 = vpack.c.b16 %v2071, %v2070
        %v2110 = vpack.c.b16 %v2073, %v2072
        %v2111 = vpack.c.b16 %v2075, %v2074
        %v2112 = vpack.c.b16 %v2077, %v2076
        %v2113 = vpack.c.b16 %v2079, %v2078
        %v2114 = vpack.c.b16 %v2081, %v2080
        %v2115 = vpack.c.b16 %v2083, %v2082
        %v2116 = vpack.c.b16 %v2085, %v2084
        %v2117 = vpack.c.b16 %v2087, %v2086
        %v2118 = vpack.c.b16 %v2089, %v2088
        %v2119 = vpack.c.b16 %v2091, %v2090
        %v2120 = vpack.c.b16 %v2093, %v2092
        %v2121 = vpack.c.b16 %v2095, %v2094
        %v2122 = vpack.c.b16 %v2097, %v2096
        %v2123 = vpack.c.b16 %v2099, %v2098
        %2148 = vmatprep.subr.bf16.mxu0 0
        %2149 = vmatpush1.bf16.msra.mxu0 %v2100
        %2150 = vmatprep.subr.bf16.mxu0 0
        %2151 = vmatpush1.bf16.msra.mxu0 %v2101
        %2152 = vmatprep.subr.bf16.mxu0 0
        %2153 = vmatpush1.bf16.msra.mxu0 %v2102
        %2154 = vmatprep.subr.bf16.mxu0 0
        %2155 = vmatpush1.bf16.msra.mxu0 %v2103
        %2156 = vmatprep.subr.bf16.mxu0 0
        %2157 = vmatpush1.bf16.msra.mxu0 %v2104
        %2158 = vmatprep.subr.bf16.mxu0 0
        %2159 = vmatpush1.bf16.msra.mxu0 %v2105
        %2160 = vmatprep.subr.bf16.mxu0 0
        %2161 = vmatpush1.bf16.msra.mxu0 %v2106
        %2162 = vmatprep.subr.bf16.mxu0 0
        %2163 = vmatpush1.bf16.msra.mxu0 %v2107
        %2164 = vmatprep.subr.bf16.mxu0 0
        %2165 = vmatpush1.bf16.msra.mxu0 %v2108
        %2166 = vmatprep.subr.bf16.mxu0 0
        %2167 = vmatpush1.bf16.msra.mxu0 %v2109
        %2168 = vmatprep.subr.bf16.mxu0 0
        %2169 = vmatpush1.bf16.msra.mxu0 %v2110
        %2170 = vmatprep.subr.bf16.mxu0 0
        %2171 = vmatpush1.bf16.msra.mxu0 %v2111
        %2172 = vmatprep.subr.bf16.mxu0 0
        %2173 = vmatpush1.bf16.msra.mxu0 %v2112
        %2174 = vmatprep.subr.bf16.mxu0 0
        %2175 = vmatpush1.bf16.msra.mxu0 %v2113
        %2176 = vmatprep.subr.bf16.mxu0 0
        %2177 = vmatpush1.bf16.msra.mxu0 %v2114
        %2178 = vmatprep.subr.bf16.mxu0 0
        %2179 = vmatpush1.bf16.msra.mxu0 %v2115
        %2180 = vmatprep.mubr.bf16.mxu0 %v1932
        %2181 = vmatmul.mubr.bf16.gmra.mrb[0].mxu0 %v1931
        %v2182 = vpop.f32.mrb[0].mxu0
        %v2183 = vadd.f32 0.0, %v2182
        %v2184 = vpop.f32.mrb[0].mxu0
        %v2185 = vpop.f32.mrb[0].mxu0
        %v2186 = vadd.f32 0.0, %v2185
        %v2187 = vpop.f32.mrb[0].mxu0
        %2188 = vmatprep.mubr.bf16.mxu0 %v1935
        %2189 = vmatmul.mubr.bf16.gmra.mrb[0].mxu0 %v1934
        %v2190 = vpop.f32.mrb[0].mxu0
        %v2191 = vadd.f32 0.0, %v2190
        %v2192 = vpop.f32.mrb[0].mxu0
        %v2193 = vpop.f32.mrb[0].mxu0
        %v2194 = vadd.f32 0.0, %v2193
        %v2195 = vpop.f32.mrb[0].mxu0
        %2196 = vmatprep.mubr.bf16.mxu0 %v1938
        %2197 = vmatmul.mubr.bf16.gmra.mrb[0].mxu0 %v1937
        %v2198 = vpop.f32.mrb[0].mxu0
        %v2199 = vadd.f32 0.0, %v2198
        %v2200 = vpop.f32.mrb[0].mxu0
        %v2201 = vpop.f32.mrb[0].mxu0
        %v2202 = vadd.f32 0.0, %v2201
        %v2203 = vpop.f32.mrb[0].mxu0
        %2204 = vmatprep.mubr.bf16.mxu0 %v1941
        %2205 = vmatmul.mubr.bf16.gmra.mrb[0].mxu0 %v1940
        %v2206 = vpop.f32.mrb[0].mxu0
        %v2207 = vadd.f32 0.0, %v2206
        %v2208 = vpop.f32.mrb[0].mxu0
        %v2209 = vpop.f32.mrb[0].mxu0
        %v2210 = vadd.f32 0.0, %v2209
        %v2211 = vpop.f32.mrb[0].mxu0
        %2212 = vmatprep.mubr.bf16.mxu0 %v1944
        %2213 = vmatmul.mubr.bf16.gmra.mrb[0].mxu0 %v1943
        %v2214 = vpop.f32.mrb[0].mxu0
        %v2215 = vadd.f32 0.0, %v2214
        %v2216 = vpop.f32.mrb[0].mxu0
        %v2217 = vpop.f32.mrb[0].mxu0
        %v2218 = vadd.f32 0.0, %v2217
        %v2219 = vpop.f32.mrb[0].mxu0
        %2220 = vmatprep.mubr.bf16.mxu0 %v1947
        %2221 = vmatmul.mubr.bf16.gmra.mrb[0].mxu0 %v1946
        %v2222 = vpop.f32.mrb[0].mxu0
        %v2223 = vadd.f32 0.0, %v2222
        %v2224 = vpop.f32.mrb[0].mxu0
        %v2225 = vpop.f32.mrb[0].mxu0
        %v2226 = vadd.f32 0.0, %v2225
        %v2227 = vpop.f32.mrb[0].mxu0
        %2228 = vmatprep.mubr.bf16.mxu0 %v1950
        %2229 = vmatmul.mubr.bf16.gmra.mrb[0].mxu0 %v1949
        %v2230 = vpop.f32.mrb[0].mxu0
        %v2231 = vadd.f32 0.0, %v2230
        %v2232 = vpop.f32.mrb[0].mxu0
        %v2233 = vpop.f32.mrb[0].mxu0
        %v2234 = vadd.f32 0.0, %v2233
        %v2235 = vpop.f32.mrb[0].mxu0
        %2236 = vmatprep.mubr.bf16.mxu0 %v1953
        %2237 = vmatmul.mubr.bf16.gmra.mrb[0].mxu0 %v1952
        %v2238 = vpop.f32.mrb[0].mxu0
        %v2239 = vadd.f32 0.0, %v2238
        %v2240 = vpop.f32.mrb[0].mxu0
        %v2241 = vpop.f32.mrb[0].mxu0
        %v2242 = vadd.f32 0.0, %v2241
        %v2243 = vpop.f32.mrb[0].mxu0
        %2244 = vdwg.mxu0
        %2245 = vmatprep.subr.bf16.mxu0 0
        %2246 = vmatpush1.bf16.msra.mxu0 %v2116
        %2247 = vmatprep.subr.bf16.mxu0 0
        %2248 = vmatpush1.bf16.msra.mxu0 %v2117
        %2249 = vmatprep.subr.bf16.mxu0 0
        %2250 = vmatpush1.bf16.msra.mxu0 %v2118
        %2251 = vmatprep.subr.bf16.mxu0 0
        %2252 = vmatpush1.bf16.msra.mxu0 %v2119
        %2253 = vmatprep.subr.bf16.mxu0 0
        %2254 = vmatpush1.bf16.msra.mxu0 %v2120
        %2255 = vmatprep.subr.bf16.mxu0 0
        %2256 = vmatpush1.bf16.msra.mxu0 %v2121
        %2257 = vmatprep.subr.bf16.mxu0 0
        %2258 = vmatpush1.bf16.msra.mxu0 %v2122
        %2259 = vmatprep.subr.bf16.mxu0 0
        %2260 = vmatpush1.bf16.msra.mxu0 %v2123
        %2261 = vmatprep.subr.bf16.mxu0 0
        %2262 = vmatpush1.bf16.msra.mxu0 0
        %2263 = vmatprep.subr.bf16.mxu0 0
        %2264 = vmatpush1.bf16.msra.mxu0 0
        %2265 = vmatprep.subr.bf16.mxu0 0
        %2266 = vmatpush1.bf16.msra.mxu0 0
        %2267 = vmatprep.subr.bf16.mxu0 0
        %2268 = vmatpush1.bf16.msra.mxu0 0
        %2269 = vmatprep.subr.bf16.mxu0 0
        %2270 = vmatpush1.bf16.msra.mxu0 0
        %2271 = vmatprep.subr.bf16.mxu0 0
        %2272 = vmatpush1.bf16.msra.mxu0 0
        %2273 = vmatprep.subr.bf16.mxu0 0
        %2274 = vmatpush1.bf16.msra.mxu0 0
        %2275 = vmatprep.subr.bf16.mxu0 0
        %2276 = vmatpush1.bf16.msra.mxu0 0
        %2277 = vmatprep.mubr.bf16.mxu0 0
        %2278 = vmatmul.mubr.bf16.gmra.mrb[0].mxu0 %v1933
        %v2279 = vpop.f32.mrb[0].mxu0
        %v2280 = vadd.f32 %v2183, %v2279
        %v2281 = vpop.f32.mrb[0].mxu0
        %v2282 = vpop.f32.mrb[0].mxu0
        %v2283 = vadd.f32 %v2186, %v2282
        %v2284 = vpop.f32.mrb[0].mxu0
        %2285 = vmatprep.mubr.bf16.mxu0 0
        %2286 = vmatmul.mubr.bf16.gmra.mrb[0].mxu0 %v1936
        %v2287 = vpop.f32.mrb[0].mxu0
        %v2288 = vadd.f32 %v2191, %v2287
        %v2289 = vpop.f32.mrb[0].mxu0
        %v2290 = vpop.f32.mrb[0].mxu0
        %v2291 = vadd.f32 %v2194, %v2290
        %v2292 = vpop.f32.mrb[0].mxu0
        %2293 = vmatprep.mubr.bf16.mxu0 0
        %2294 = vmatmul.mubr.bf16.gmra.mrb[0].mxu0 %v1939
        %v2295 = vpop.f32.mrb[0].mxu0
        %v2296 = vadd.f32 %v2199, %v2295
        %v2297 = vpop.f32.mrb[0].mxu0
        %v2298 = vpop.f32.mrb[0].mxu0
        %v2299 = vadd.f32 %v2202, %v2298
        %v2300 = vpop.f32.mrb[0].mxu0
        %2301 = vmatprep.mubr.bf16.mxu0 0
        %2302 = vmatmul.mubr.bf16.gmra.mrb[0].mxu0 %v1942
        %v2303 = vpop.f32.mrb[0].mxu0
        %v2304 = vadd.f32 %v2207, %v2303
        %v2305 = vpop.f32.mrb[0].mxu0
        %v2306 = vpop.f32.mrb[0].mxu0
        %v2307 = vadd.f32 %v2210, %v2306
        %v2308 = vpop.f32.mrb[0].mxu0
        %2309 = vmatprep.mubr.bf16.mxu0 0
        %2310 = vmatmul.mubr.bf16.gmra.mrb[0].mxu0 %v1945
        %v2311 = vpop.f32.mrb[0].mxu0
        %v2312 = vadd.f32 %v2215, %v2311
        %v2313 = vpop.f32.mrb[0].mxu0
        %v2314 = vpop.f32.mrb[0].mxu0
        %v2315 = vadd.f32 %v2218, %v2314
        %v2316 = vpop.f32.mrb[0].mxu0
        %2317 = vmatprep.mubr.bf16.mxu0 0
        %2318 = vmatmul.mubr.bf16.gmra.mrb[0].mxu0 %v1948
        %v2319 = vpop.f32.mrb[0].mxu0
        %v2320 = vadd.f32 %v2223, %v2319
        %v2321 = vpop.f32.mrb[0].mxu0
        %v2322 = vpop.f32.mrb[0].mxu0
        %v2323 = vadd.f32 %v2226, %v2322
        %v2324 = vpop.f32.mrb[0].mxu0
        %2325 = vmatprep.mubr.bf16.mxu0 0
        %2326 = vmatmul.mubr.bf16.gmra.mrb[0].mxu0 %v1951
        %v2327 = vpop.f32.mrb[0].mxu0
        %v2328 = vadd.f32 %v2231, %v2327
        %v2329 = vpop.f32.mrb[0].mxu0
        %v2330 = vpop.f32.mrb[0].mxu0
        %v2331 = vadd.f32 %v2234, %v2330
        %v2332 = vpop.f32.mrb[0].mxu0
        %2333 = vmatprep.mubr.bf16.mxu0 0
        %2334 = vmatmul.mubr.bf16.gmra.mrb[0].mxu0 %v1954
        %v2335 = vpop.f32.mrb[0].mxu0
        %v2336 = vadd.f32 %v2239, %v2335
        %v2337 = vpop.f32.mrb[0].mxu0
        %v2338 = vpop.f32.mrb[0].mxu0
        %v2339 = vadd.f32 %v2242, %v2338
        %v2340 = vpop.f32.mrb[0].mxu0
        %2341 = vdwg.mxu0
        %v2342 = vadd.f32 %v1868, %v2280
        %v2343 = vadd.f32 %v1871, %v2283
        %v2344 = vadd.f32 %v1876, %v2288
        %v2345 = vadd.f32 %v1879, %v2291
        %v2346 = vadd.f32 %v1884, %v2296
        %v2347 = vadd.f32 %v1887, %v2299
        %v2348 = vadd.f32 %v1892, %v2304
        %v2349 = vadd.f32 %v1895, %v2307
        %v2350 = vadd.f32 %v1900, %v2312
        %v2351 = vadd.f32 %v1903, %v2315
        %v2352 = vadd.f32 %v1908, %v2320
        %v2353 = vadd.f32 %v1911, %v2323
        %v2354 = vadd.f32 %v1916, %v2328
        %v2355 = vadd.f32 %v1919, %v2331
        %v2356 = vadd.f32 %v1924, %v2336
        %v2357 = vadd.f32 %v1927, %v2339
        %v2358 = vld [vmem:[%s5] sm:$0x1]
        %v2360 = vlaneseq
        %v2361 = vshrl.u32 %v2360, 7
        %v2362 = vsub.s32 0, %v2361
        %v2363 = vrot.slane %v2358, %v2362
        %v2365 = vadd.f32 %v2342, %v2363
        %v2366 = vadd.f32 %v2343, %v2363
        %v2367 = vadd.f32 %v2344, %v2363
        %v2368 = vadd.f32 %v2345, %v2363
        %v2369 = vadd.f32 %v2346, %v2363
        %v2370 = vadd.f32 %v2347, %v2363
        %v2371 = vadd.f32 %v2348, %v2363
        %v2372 = vadd.f32 %v2349, %v2363
        %v2373 = vadd.f32 %v2350, %v2363
        %v2374 = vadd.f32 %v2351, %v2363
        %v2375 = vadd.f32 %v2352, %v2363
        %v2376 = vadd.f32 %v2353, %v2363
        %v2377 = vadd.f32 %v2354, %v2363
        %v2378 = vadd.f32 %v2355, %v2363
        %v2379 = vadd.f32 %v2356, %v2363
        %v2380 = vadd.f32 %v2357, %v2363
        %v2381 = vmax.f32 %v2365, 0.0
        %v2382 = vmax.f32 %v2366, 0.0
        %v2383 = vmax.f32 %v2367, 0.0
        %v2384 = vmax.f32 %v2368, 0.0
        %v2385 = vmax.f32 %v2369, 0.0
        %v2386 = vmax.f32 %v2370, 0.0
        %v2387 = vmax.f32 %v2371, 0.0
        %v2388 = vmax.f32 %v2372, 0.0
        %v2389 = vmax.f32 %v2373, 0.0
        %v2390 = vmax.f32 %v2374, 0.0
        %v2391 = vmax.f32 %v2375, 0.0
        %v2392 = vmax.f32 %v2376, 0.0
        %v2393 = vmax.f32 %v2377, 0.0
        %v2394 = vmax.f32 %v2378, 0.0
        %v2395 = vmax.f32 %v2379, 0.0
        %v2396 = vmax.f32 %v2380, 0.0
        %v2397 = vpack.c.bf16 %v2382, %v2381
        %v2398 = vpack.c.bf16 %v2384, %v2383
        %v2399 = vpack.c.bf16 %v2386, %v2385
        %v2400 = vpack.c.bf16 %v2388, %v2387
        %v2401 = vpack.c.bf16 %v2390, %v2389
        %v2402 = vpack.c.bf16 %v2392, %v2391
        %v2403 = vpack.c.bf16 %v2394, %v2393
        %v2404 = vpack.c.bf16 %v2396, %v2395
        %v2405 = vld [vmem:[#allocation11] sm:$0xf]
        %v2406 = vld [vmem:[#allocation11 + $0x4] sm:$0xf]
        %v2407 = vld [vmem:[#allocation11 + $0x8] sm:$0xf]
        %v2408 = vld [vmem:[#allocation11 + $0xc] sm:$0xf]
        %v2409 = vld [vmem:[#allocation11 + $0x10] sm:$0xf]
        %v2410 = vld [vmem:[#allocation11 + $0x14] sm:$0xf]
        %v2411 = vld [vmem:[#allocation11 + $0x18] sm:$0xf]
        %v2412 = vld [vmem:[#allocation11 + $0x1c] sm:$0xf]
        %v2413 = vld [vmem:[#allocation11 + $0x20] sm:$0xf]
        %v2414 = vld [vmem:[#allocation11 + $0x24] sm:$0xf]
        %v2415 = vld [vmem:[#allocation11 + $0x28] sm:$0xf]
        %v2416 = vld [vmem:[#allocation11 + $0x2c] sm:$0xf]
        %v2417 = vld [vmem:[#allocation11 + $0x30] sm:$0xf]
        %v2418 = vld [vmem:[#allocation11 + $0x34] sm:$0xf]
        %v2419 = vld [vmem:[#allocation11 + $0x38] sm:$0xf]
        %v2420 = vld [vmem:[#allocation11 + $0x3c] sm:$0xf]
        %v2421 = vld [vmem:[%s7] sm:$0x1]
        %v2423 = vlaneseq
        %v2424 = vshrl.u32 %v2423, 7
        %v2425 = vsub.s32 0, %v2424
        %v2426 = vrot.slane %v2421, %v2425
        %v2444 = vunpack.c.l.b16 %v2405
        %v2445 = vunpack.c.l.b16 %v2406
        %v2446 = vunpack.c.l.b16 %v2407
        %v2447 = vunpack.c.l.b16 %v2408
        %v2448 = vunpack.c.l.b16 %v2409
        %v2449 = vunpack.c.l.b16 %v2410
        %v2450 = vunpack.c.l.b16 %v2411
        %v2451 = vunpack.c.l.b16 %v2412
        %v2452 = vunpack.c.l.b16 %v2413
        %v2453 = vunpack.c.l.b16 %v2414
        %v2454 = vunpack.c.l.b16 %v2415
        %v2455 = vunpack.c.l.b16 %v2416
        %v2456 = vunpack.c.l.b16 %v2417
        %v2457 = vunpack.c.l.b16 %v2418
        %v2458 = vunpack.c.l.b16 %v2419
        %v2459 = vunpack.c.l.b16 %v2420
        %v2460 = vpack.c.b16 %v2445, %v2444
        %v2461 = vpack.c.b16 %v2447, %v2446
        %v2462 = vpack.c.b16 %v2449, %v2448
        %v2463 = vpack.c.b16 %v2451, %v2450
        %v2464 = vpack.c.b16 %v2453, %v2452
        %v2465 = vpack.c.b16 %v2455, %v2454
        %v2466 = vpack.c.b16 %v2457, %v2456
        %v2467 = vpack.c.b16 %v2459, %v2458
        %2476 = vmatprep.subr.bf16.mxu0 0
        %2477 = vmatpush1.bf16.msra.mxu0 %v2460
        %2478 = vmatprep.subr.bf16.mxu0 0
        %2479 = vmatpush1.bf16.msra.mxu0 %v2461
        %2480 = vmatprep.subr.bf16.mxu0 0
        %2481 = vmatpush1.bf16.msra.mxu0 %v2462
        %2482 = vmatprep.subr.bf16.mxu0 0
        %2483 = vmatpush1.bf16.msra.mxu0 %v2463
        %2484 = vmatprep.subr.bf16.mxu0 0
        %2485 = vmatpush1.bf16.msra.mxu0 %v2464
        %2486 = vmatprep.subr.bf16.mxu0 0
        %2487 = vmatpush1.bf16.msra.mxu0 %v2465
        %2488 = vmatprep.subr.bf16.mxu0 0
        %2489 = vmatpush1.bf16.msra.mxu0 %v2466
        %2490 = vmatprep.subr.bf16.mxu0 0
        %2491 = vmatpush1.bf16.msra.mxu0 %v2467
        %2492 = vmatprep.subr.bf16.mxu0 0
        %2493 = vmatpush1.bf16.msra.mxu0 0
        %2494 = vmatprep.subr.bf16.mxu0 0
        %2495 = vmatpush1.bf16.msra.mxu0 0
        %2496 = vmatprep.subr.bf16.mxu0 0
        %2497 = vmatpush1.bf16.msra.mxu0 0
        %2498 = vmatprep.subr.bf16.mxu0 0
        %2499 = vmatpush1.bf16.msra.mxu0 0
        %2500 = vmatprep.subr.bf16.mxu0 0
        %2501 = vmatpush1.bf16.msra.mxu0 0
        %2502 = vmatprep.subr.bf16.mxu0 0
        %2503 = vmatpush1.bf16.msra.mxu0 0
        %2504 = vmatprep.subr.bf16.mxu0 0
        %2505 = vmatpush1.bf16.msra.mxu0 0
        %2506 = vmatprep.subr.bf16.mxu0 0
        %2507 = vmatpush1.bf16.msra.mxu0 0
        %2508 = vmatprep.mubr.bf16.mxu0 0
        %2509 = vmatmul.mubr.bf16.gmra.mrb[0].mxu0 %v2397
        %v2510 = vpop.f32.mrb[0].mxu0
        %v2511 = vadd.f32 %v2426, %v2510
        %v2512 = vpop.f32.mrb[0].mxu0
        %v2513 = vpop.f32.mrb[0].mxu0
        %v2514 = vadd.f32 %v2426, %v2513
        %v2515 = vpop.f32.mrb[0].mxu0
        %2516 = vmatprep.mubr.bf16.mxu0 0
        %2517 = vmatmul.mubr.bf16.gmra.mrb[0].mxu0 %v2398
        %v2518 = vpop.f32.mrb[0].mxu0
        %v2519 = vadd.f32 %v2426, %v2518
        %v2520 = vpop.f32.mrb[0].mxu0
        %v2521 = vpop.f32.mrb[0].mxu0
        %v2522 = vadd.f32 %v2426, %v2521
        %v2523 = vpop.f32.mrb[0].mxu0
        %2524 = vmatprep.mubr.bf16.mxu0 0
        %2525 = vmatmul.mubr.bf16.gmra.mrb[0].mxu0 %v2399
        %v2526 = vpop.f32.mrb[0].mxu0
        %v2527 = vadd.f32 %v2426, %v2526
        %v2528 = vpop.f32.mrb[0].mxu0
        %v2529 = vpop.f32.mrb[0].mxu0
        %v2530 = vadd.f32 %v2426, %v2529
        %v2531 = vpop.f32.mrb[0].mxu0
        %2532 = vmatprep.mubr.bf16.mxu0 0
        %2533 = vmatmul.mubr.bf16.gmra.mrb[0].mxu0 %v2400
        %v2534 = vpop.f32.mrb[0].mxu0
        %v2535 = vadd.f32 %v2426, %v2534
        %v2536 = vpop.f32.mrb[0].mxu0
        %v2537 = vpop.f32.mrb[0].mxu0
        %v2538 = vadd.f32 %v2426, %v2537
        %v2539 = vpop.f32.mrb[0].mxu0
        %2540 = vmatprep.mubr.bf16.mxu0 0
        %2541 = vmatmul.mubr.bf16.gmra.mrb[0].mxu0 %v2401
        %v2542 = vpop.f32.mrb[0].mxu0
        %v2543 = vadd.f32 %v2426, %v2542
        %v2544 = vpop.f32.mrb[0].mxu0
        %v2545 = vpop.f32.mrb[0].mxu0
        %v2546 = vadd.f32 %v2426, %v2545
        %v2547 = vpop.f32.mrb[0].mxu0
        %2548 = vmatprep.mubr.bf16.mxu0 0
        %2549 = vmatmul.mubr.bf16.gmra.mrb[0].mxu0 %v2402
        %v2550 = vpop.f32.mrb[0].mxu0
        %v2551 = vadd.f32 %v2426, %v2550
        %v2552 = vpop.f32.mrb[0].mxu0
        %v2553 = vpop.f32.mrb[0].mxu0
        %v2554 = vadd.f32 %v2426, %v2553
        %v2555 = vpop.f32.mrb[0].mxu0
        %2556 = vmatprep.mubr.bf16.mxu0 0
        %2557 = vmatmul.mubr.bf16.gmra.mrb[0].mxu0 %v2403
        %v2558 = vpop.f32.mrb[0].mxu0
        %v2559 = vadd.f32 %v2426, %v2558
        %v2560 = vpop.f32.mrb[0].mxu0
        %v2561 = vpop.f32.mrb[0].mxu0
        %v2562 = vadd.f32 %v2426, %v2561
        %v2563 = vpop.f32.mrb[0].mxu0
        %2564 = vmatprep.mubr.bf16.mxu0 0
        %2565 = vmatmul.mubr.bf16.gmra.mrb[0].mxu0 %v2404
        %v2566 = vpop.f32.mrb[0].mxu0
        %v2567 = vadd.f32 %v2426, %v2566
        %v2568 = vpop.f32.mrb[0].mxu0
        %v2569 = vpop.f32.mrb[0].mxu0
        %v2570 = vadd.f32 %v2426, %v2569
        %v2571 = vpop.f32.mrb[0].mxu0
        %2572 = vdwg.mxu0
        %v2573 = vunpack.c.l.bf16 %v409
        %v2574 = vunpack.c.l.bf16 %v410
        %v2575 = vunpack.c.l.bf16 %v411
        %v2576 = vunpack.c.l.bf16 %v412
        %v2577 = vunpack.c.l.bf16 %v413
        %v2578 = vunpack.c.l.bf16 %v414
        %v2579 = vunpack.c.l.bf16 %v415
        %v2580 = vunpack.c.l.bf16 %v416
        %v2581 = vunpack.c.l.bf16 %v417
        %v2582 = vunpack.c.l.bf16 %v418
        %v2583 = vunpack.c.l.bf16 %v419
        %v2584 = vunpack.c.l.bf16 %v420
        %v2585 = vunpack.c.l.bf16 %v421
        %v2586 = vunpack.c.l.bf16 %v422
        %v2587 = vunpack.c.l.bf16 %v423
        %v2588 = vunpack.c.l.bf16 %v424
        %v2589 = vadd.f32 %v2511, %v2573
        %v2590 = vadd.f32 %v2514, %v2574
        %v2591 = vadd.f32 %v2519, %v2575
        %v2592 = vadd.f32 %v2522, %v2576
        %v2593 = vadd.f32 %v2527, %v2577
        %v2594 = vadd.f32 %v2530, %v2578
        %v2595 = vadd.f32 %v2535, %v2579
        %v2596 = vadd.f32 %v2538, %v2580
        %v2597 = vadd.f32 %v2543, %v2581
        %v2598 = vadd.f32 %v2546, %v2582
        %v2599 = vadd.f32 %v2551, %v2583
        %v2600 = vadd.f32 %v2554, %v2584
        %v2601 = vadd.f32 %v2559, %v2585
        %v2602 = vadd.f32 %v2562, %v2586
        %v2603 = vadd.f32 %v2567, %v2587
        %v2604 = vadd.f32 %v2570, %v2588
        %v2605 = vmax.f32 %v2589, 0.0
        %v2606 = vmax.f32 %v2590, 0.0
        %v2607 = vmax.f32 %v2591, 0.0
        %v2608 = vmax.f32 %v2592, 0.0
        %v2609 = vmax.f32 %v2593, 0.0
        %v2610 = vmax.f32 %v2594, 0.0
        %v2611 = vmax.f32 %v2595, 0.0
        %v2612 = vmax.f32 %v2596, 0.0
        %v2613 = vmax.f32 %v2597, 0.0
        %v2614 = vmax.f32 %v2598, 0.0
        %v2615 = vmax.f32 %v2599, 0.0
        %v2616 = vmax.f32 %v2600, 0.0
        %v2617 = vmax.f32 %v2601, 0.0
        %v2618 = vmax.f32 %v2602, 0.0
        %v2619 = vmax.f32 %v2603, 0.0
        %v2620 = vmax.f32 %v2604, 0.0
        %v2621 = vpack.c.bf16 %v2606, %v2605
        %v2622 = vpack.c.bf16 %v2608, %v2607
        %v2623 = vpack.c.bf16 %v2610, %v2609
        %v2624 = vpack.c.bf16 %v2612, %v2611
        %v2625 = vpack.c.bf16 %v2614, %v2613
        %v2626 = vpack.c.bf16 %v2616, %v2615
        %v2627 = vpack.c.bf16 %v2618, %v2617
        %v2628 = vpack.c.bf16 %v2620, %v2619
        %v2637 = vunpack.c.l.b16 %v2621
        %v2638 = vunpack.c.h.b16 %v2621
        %v2639 = vunpack.c.l.b16 %v2622
        %v2640 = vunpack.c.h.b16 %v2622
        %v2641 = vunpack.c.l.b16 %v2623
        %v2642 = vunpack.c.h.b16 %v2623
        %v2643 = vunpack.c.l.b16 %v2624
        %v2644 = vunpack.c.h.b16 %v2624
        %v2645 = vunpack.c.l.b16 %v2625
        %v2646 = vunpack.c.h.b16 %v2625
        %v2647 = vunpack.c.l.b16 %v2626
        %v2648 = vunpack.c.h.b16 %v2626
        %v2649 = vunpack.c.l.b16 %v2627
        %v2650 = vunpack.c.h.b16 %v2627
        %v2651 = vunpack.c.l.b16 %v2628
        %v2652 = vunpack.c.h.b16 %v2628
        %v2653 = vpack.c.b16 %v2637, %v2637
        %v2654 = vpack.c.b16 %v2638, %v2638
        %v2655 = vpack.c.b16 %v2639, %v2639
        %v2656 = vpack.c.b16 %v2640, %v2640
        %v2657 = vpack.c.b16 %v2641, %v2641
        %v2658 = vpack.c.b16 %v2642, %v2642
        %v2659 = vpack.c.b16 %v2643, %v2643
        %v2660 = vpack.c.b16 %v2644, %v2644
        %v2661 = vpack.c.b16 %v2645, %v2645
        %v2662 = vpack.c.b16 %v2646, %v2646
        %v2663 = vpack.c.b16 %v2647, %v2647
        %v2664 = vpack.c.b16 %v2648, %v2648
        %v2665 = vpack.c.b16 %v2649, %v2649
        %v2666 = vpack.c.b16 %v2650, %v2650
        %v2667 = vpack.c.b16 %v2651, %v2651
        %v2668 = vpack.c.b16 %v2652, %v2652
        %2685 = vst [vmem:[%s360] sm:$0xf] %v2653
        %2686 = vst [vmem:[%s360 + $0x4] sm:$0xf] %v2654
        %2687 = vst [vmem:[%s360 + $0x8] sm:$0xf] %v2655
        %2688 = vst [vmem:[%s360 + $0xc] sm:$0xf] %v2656
        %2689 = vst [vmem:[%s360 + $0x10] sm:$0xf] %v2657
        %2690 = vst [vmem:[%s360 + $0x14] sm:$0xf] %v2658
        %2691 = vst [vmem:[%s360 + $0x18] sm:$0xf] %v2659
        %2692 = vst [vmem:[%s360 + $0x1c] sm:$0xf] %v2660
        %2693 = vst [vmem:[%s360 + $0x20] sm:$0xf] %v2661
        %2694 = vst [vmem:[%s360 + $0x24] sm:$0xf] %v2662
        %2695 = vst [vmem:[%s360 + $0x28] sm:$0xf] %v2663
        %2696 = vst [vmem:[%s360 + $0x2c] sm:$0xf] %v2664
        %2697 = vst [vmem:[%s360 + $0x30] sm:$0xf] %v2665
        %2698 = vst [vmem:[%s360 + $0x34] sm:$0xf] %v2666
        %2699 = vst [vmem:[%s360 + $0x38] sm:$0xf] %v2667
        %2700 = vst [vmem:[%s360 + $0x3c] sm:$0xf] %v2668
        %s2701 = sand.u32 %s203, 1
        %s2702 = scalar_lea.sflag [#allocation7], %s2701
        %s2703 = sand.u32 %s203, 1
        %s2704 = smul.addr %s2703, 64
        %s2705 = scalar_lea.vmem [#allocation13], %s2704
        // Predicated region
        $region97: #{tpu_custom_call.1} parent=47 // pred_check
          %p2706 = pneg %p213
        $region98: #{tpu_custom_call.1} parent=47 // pred_check_branch
          %2708 = sbr.rel (%p2706) target = $region100
        $region99: #{tpu_custom_call.1} parent=47 // pred_region
          %s2709 = smul.u32 8, %s32
          %s2711 = ssub.s32 1024, 1024
          %2712 = vsyncadd %s2702, %s2711
          %s2713 = smul.addr %s2709, 2
          %s2714 = smul.addr %s31, 32
          %s2715 = sadd.s32 %s2713, %s2714
          %s2716 = smul.addr %s2715, 64
          %s2717 = scalar_lea.hbm %s8, %s2716
          %s2718 = sshll.u32 %s2705, 4
          %s2719 = int_to_ptr.vmem [resolvable:$true] %s2718
          %2724 = dma.vmem_to_hbm [thread:$0]  %s2719, 1024, %s2717, %s2702, 64, 64, 4
        $region100: #{tpu_custom_call.1} parent=47 // pred_fallthru
          _
      $region48: #{tpu_custom_call.1} parent=5 // pred_fallthru
        _
      %p2725 = scmp.le.s32.totalorder 2, %s22
      // Predicated region
      $region101: #{tpu_custom_call.1} parent=5 // pred_check
        %p2726 = pneg %p2725
      $region102: #{tpu_custom_call.1} parent=5 // pred_check_branch
        %2728 = sbr.rel (%p2726) target = $region104
      $region103: #{tpu_custom_call.1} parent=5 // pred_region
        %s2729 = ssub.s32 %s22, 2
        // Predicated region
        $region105: #{tpu_custom_call.1} parent=103 // pred_check
          %p2730 = pneg %p219
        $region106: #{tpu_custom_call.1} parent=103 // pred_check_branch
          %2732 = sbr.rel (%p2730) target = $region108
        $region107: #{tpu_custom_call.1} parent=103 // pred_region
          %s2733 = sand.u32 %s204, 1
          %s2734 = scalar_lea.sflag [#allocation7], %s2733
          %s2735 = sand.u32 %s204, 1
          %s2736 = smul.addr %s2735, 64
          %s2737 = scalar_lea.vmem [#allocation13], %s2736
          %2738 = dma.done %s2734, 1024
        $region108: #{tpu_custom_call.1} parent=103 // pred_fallthru
          _
      $region104: #{tpu_custom_call.1} parent=5 // pred_fallthru
        _
    $region6: #{tpu_custom_call.1} parent=1 // loop_footer
      %s26 = sadd.s32 1, %s22
    $region7: #{tpu_custom_call.1} parent=1 // loop_footer_branch
      %21 = sbr.rel target = $region3
    $region8: #{tpu_custom_call.1} parent=1 // loop_exit
      _
    %2739 = vsyncpa [#allocation6], 1
    %s2740 = scalar_lea.sflag [#allocation6], 1
    %2741 = vsyncpa %s2740, 1
    %2742 = vsyncpa [#allocation9], 1
    %2743 = vsyncpa [#allocation12], 1
    %2744 = vsyncpa [#allocation7], 1
    %s2745 = scalar_lea.sflag [#allocation7], 1
    %2746 = vsyncpa %s2745, 1
  %2747 = vsyncmov [#allocation3]
  %s2748 = vpop.sfrf %2747
  %p2749 = scmp.eq.s32.totalorder %s2748, 0
  %p2750 = pneg %p2749
  %2752 = shalt.err (%p2750)
  %s2753 = scalar_lea.sflag [#allocation3], 1
  %2754 = vsyncmov %s2753
  %s2755 = vpop.sfrf %2754
  %p2756 = scmp.eq.s32.totalorder %s2755, 0
  %p2757 = pneg %p2756
  %2759 = shalt.err (%p2757)

</llo_original>
